<compile_context>
chip_gen: v7x
topology: tpu7x:2x2x1
jax: 0.10.0
libtpu: 0.0.40
codegen_flags: <defaults>
</compile_context>

<pallas_src>
import jax
import jax.numpy as jnp
from jax.experimental import pallas as pl
from jax.experimental.pallas import tpu as pltpu

EPS = 1e-7
SCALE = 1.0  # HypLinear.scale


# ---------------------------------------------------------------- mask helper
def _col0_mask(shape):
    col = jax.lax.broadcasted_iota(jnp.int32, shape, dimension=len(shape) - 1)
    return col == 0


# -------------------------- kernel-side Lorentz (k=1) math (hoisted col0 mask)
def _k_logmap0(x, is0):
    """Log map at the origin; output is a tangent vector with first coord 0."""
    x0 = jnp.sum(jnp.where(is0, x, 0.0), axis=-1, keepdims=True)
    alpha = jnp.maximum(x0, 1.0 + EPS)
    sp = jnp.where(is0, 0.0, x)
    spn = jnp.sqrt(jnp.sum(sp * sp, axis=-1, keepdims=True))
    d = jnp.log(alpha + jnp.sqrt(alpha * alpha - 1.0))  # arccosh(alpha)
    return d * sp / jnp.maximum(spn, EPS)


def _k_cosh_sinh(n):
    """cosh/sinh from a single exp push + approx reciprocal (EUP-slot saving)."""
    e = jnp.exp(n)
    einv = pl.reciprocal(e, approx=True)
    return 0.5 * (e + einv), 0.5 * (e - einv)


def _k_expmap0(u, is0):
    """Exp map at the origin; u is a tangent vector with first coord 0."""
    un = jnp.sqrt(jnp.sum(jnp.where(is0, 0.0, u * u), axis=-1, keepdims=True))
    c, s = _k_cosh_sinh(un)
    sp = s * jnp.where(is0, 0.0, u) / jnp.maximum(un, EPS)
    return jnp.where(is0, c, sp)


def _k_transp0(y, v, is0):
    """Parallel transport of tangent-at-origin v (first coord 0) to point y."""
    y0 = jnp.sum(jnp.where(is0, y, 0.0), axis=-1, keepdims=True)
    ip = jnp.sum(jnp.where(is0, 0.0, y * v), axis=-1, keepdims=True)  # <y,v>_L, v0=0
    o_plus_y = jnp.where(is0, 1.0 + y0, y)
    return v + (ip / (1.0 + y0)) * o_plus_y


def _k_expmap(x, u, is0):
    """Exp map of tangent u at point x (k = 1)."""
    u0 = jnp.sum(jnp.where(is0, u, 0.0), axis=-1, keepdims=True)
    sumsq = jnp.sum(u * u, axis=-1, keepdims=True)
    nrm2 = jnp.maximum(sumsq - 2.0 * u0 * u0, 0.0)  # Minkowski norm^2
    nrm = jnp.sqrt(nrm2)
    c, s = _k_cosh_sinh(nrm)
    return c * x + s * u / jnp.maximum(nrm, EPS)


# --------------------------------------------------------------- Pallas kernel
def hyp_linear_kernel(x_ref, w_ref, b_ref, o_ref):
    """HypLinear: logmap0 -> linear*scale -> proj_tan0 -> expmap0 -> +bias (transp0/expmap)."""
    x = x_ref[...]
    w = w_ref[...]
    b = b_ref[...]

    # Build the Lorentz time-coordinate masks ONCE (JAX does not CSE iota/broadcast).
    in_is0 = _col0_mask(x.shape)                        # (tile_n, Din)
    out_is0 = _col0_mask((x.shape[0], w.shape[1]))      # (tile_n, Dout)
    b_is0 = _col0_mask(b.shape)                         # (1, Dout)

    u = _k_logmap0(x, in_is0)                                           # logmap0
    v = jnp.dot(u, w, preferred_element_type=jnp.float32) * SCALE       # linear * scale
    v = jnp.where(out_is0, 0.0, v)                                      # proj_tan0
    h = _k_expmap0(v, out_is0)                                          # expmap0
    bias = jnp.where(b_is0, 0.0, b)                                     # proj_tan0(bias)
    bt = _k_transp0(h, bias, out_is0)                                   # transp0
    o_ref[...] = _k_expmap(h, bt, out_is0)                              # expmap


# -------------------------------------------------------------------- wrapper
def hyp_linear(x, w, b, *, tile_n=256):
    """x: (N, Din) points on the Lorentz manifold; w: (Din, Dout) (pre-transposed
    nn.Linear weight); b: (1, Dout) bias.  Returns (N, Dout) on the manifold."""
    N, Din = x.shape
    Dout = w.shape[1]

    tile_n = min(tile_n, N)
    # Pad the node dim to a multiple of tile_n with copies of row 0 (valid
    # on-manifold points, so the padded rows stay finite); sliced off at the end.
    n_pad = (-N) % tile_n
    if n_pad:
        x = jnp.concatenate([x, jnp.broadcast_to(x[:1], (n_pad, Din))], axis=0)
    Np = x.shape[0]
    assert tile_n == Np or tile_n % 8 == 0, "node tile must be a multiple of 8"

    grid = (Np // tile_n,)
    out = pl.pallas_call(
        hyp_linear_kernel,
        out_shape=jax.ShapeDtypeStruct((Np, Dout), jnp.float32),
        grid=grid,
        in_specs=[
            pl.BlockSpec((tile_n, Din), lambda i: (i, 0)),   # node tile
            pl.BlockSpec((Din, Dout), lambda i: (0, 0)),     # weight (resident)
            pl.BlockSpec((1, Dout), lambda i: (0, 0)),       # bias   (resident)
        ],
        out_specs=pl.BlockSpec((tile_n, Dout), lambda i: (i, 0)),
        compiler_params=pltpu.CompilerParams(
            dimension_semantics=("parallel",),
        ),
    )(x, w, b)
    return out[:N]


# ------------------------------------------------------- pure-JAX reference
def _logmap0_ref(x):
    is0 = _col0_mask(x.shape)
    x0 = jnp.sum(jnp.where(is0, x, 0.0), axis=-1, keepdims=True)
    alpha = jnp.maximum(x0, 1.0 + EPS)
    sp = jnp.where(is0, 0.0, x)
    spn = jnp.sqrt(jnp.sum(sp * sp, axis=-1, keepdims=True))
    d = jnp.log(alpha + jnp.sqrt(alpha * alpha - 1.0))
    return d * sp / jnp.maximum(spn, EPS)


def _expmap0_ref(u):
    is0 = _col0_mask(u.shape)
    un = jnp.sqrt(jnp.sum(jnp.where(is0, 0.0, u * u), axis=-1, keepdims=True))
    sp = jnp.sinh(un) * jnp.where(is0, 0.0, u) / jnp.maximum(un, EPS)
    return jnp.where(is0, jnp.cosh(un), sp)


def _transp0_ref(y, v):
    is0 = _col0_mask(y.shape)
    y0 = jnp.sum(jnp.where(is0, y, 0.0), axis=-1, keepdims=True)
    ip = jnp.sum(jnp.where(is0, 0.0, y * v), axis=-1, keepdims=True)
    o_plus_y = jnp.where(is0, 1.0 + y0, y)
    return v + (ip / (1.0 + y0)) * o_plus_y


def _expmap_ref(x, u):
    is0 = _col0_mask(x.shape)
    u0 = jnp.sum(jnp.where(is0, u, 0.0), axis=-1, keepdims=True)
    nrm = jnp.sqrt(jnp.maximum(jnp.sum(u * u, axis=-1, keepdims=True) - 2.0 * u0 * u0, 0.0))
    return jnp.cosh(nrm) * x + jnp.sinh(nrm) * u / jnp.maximum(nrm, EPS)


def hyp_linear_reference(x, w, b):
    u = _logmap0_ref(x)
    v = (u @ w) * SCALE
    v = jnp.where(_col0_mask(v.shape), 0.0, v)
    h = _expmap0_ref(v)
    bias = jnp.where(_col0_mask(b.shape), 0.0, b)
    return _expmap_ref(h, _transp0_ref(h, bias))


if __name__ == "__main__":
    # Small but lane-dense shapes: feature dims are one full lane width (128)
    # and the node tile (256) fills the MXU M dimension.
    N, Din, Dout = 512, 128, 128
    key = jax.random.PRNGKey(0)
    k_x, k_w, k_b = jax.random.split(key, 3)

    # Input: points on the Lorentz manifold (expmap0 of tangent vectors with time coord 0).
    u0 = 0.2 * jax.random.normal(k_x, (N, Din), jnp.float32)
    u0 = u0.at[:, 0].set(0.0)
    x = _expmap0_ref(u0)

    # nn.Linear(in, out, bias=False) weight, stored pre-transposed as (Din, Dout).
    w = jax.random.normal(k_w, (Din, Dout), jnp.float32) / jnp.sqrt(Din)
    # HypLinear.bias is zero-initialized; use a small nonzero bias here so the
    # transp0/expmap path is actually exercised.
    b = 0.05 * jax.random.normal(k_b, (1, Dout), jnp.float32)

    out = jax.block_until_ready(hyp_linear(x, w, b, tile_n=256))
    ref = jax.block_until_ready(hyp_linear_reference(x, w, b))

    assert out.shape == (N, Dout)
    assert bool(jnp.all(jnp.isfinite(out)))
    # Tolerance loosened vs. exact f32 because cosh/sinh use exp + approx reciprocal.
    assert bool(jnp.allclose(out, ref, atol=1e-3, rtol=1e-3)), float(jnp.max(jnp.abs(out - ref)))
    # TODO(synk): the original module's `manifold_in`/`manifold_out` are external deps;
    # they are instantiated here as the Lorentz (k=1) hyperboloid. Dropout=0 path only.
    print("KERNEL_OK")
</pallas_src>

<mosaic_0001>
module attributes {stable_mosaic.version = 11 : i64} {
  func.func @hyp_linear_kernel(%arg0: i32, %arg1: memref<256x128xf32, #tpu.memory_space<vmem>>, %arg2: memref<128x128xf32, #tpu.memory_space<vmem>>, %arg3: memref<1x128xf32, #tpu.memory_space<vmem>>, %arg4: memref<256x128xf32, #tpu.memory_space<vmem>>) attributes {dimension_semantics = [#tpu.dimension_semantics<parallel>], iteration_bounds = array<i64: 2>, scalar_prefetch = 0 : i64, scratch_operands = 0 : i64, tpu.core_type = #tpu.core_type<tc>, window_params = [{transform_indices = @transform_0, window_bounds = array<i64: 256, 128>}, {pipeline_mode = #tpu.pipeline_mode<synchronous>, transform_indices = @transform_1, window_bounds = array<i64: 128, 128>}, {pipeline_mode = #tpu.pipeline_mode<synchronous>, transform_indices = @transform_2, window_bounds = array<i64: 1, 128>}, {transform_indices = @transform_3, window_bounds = array<i64: 256, 128>}]} {
    %c0 = arith.constant 0 : index
    %c0_0 = arith.constant 0 : index
    %0 = vector.load %arg1[%c0, %c0_0] : memref<256x128xf32, #tpu.memory_space<vmem>>, vector<256x128xf32>
    %c0_1 = arith.constant 0 : index
    %c0_2 = arith.constant 0 : index
    %1 = vector.load %arg2[%c0_1, %c0_2] : memref<128x128xf32, #tpu.memory_space<vmem>>, vector<128x128xf32>
    %c0_3 = arith.constant 0 : index
    %c0_4 = arith.constant 0 : index
    %2 = vector.load %arg3[%c0_3, %c0_4] : memref<1x128xf32, #tpu.memory_space<vmem>>, vector<1x128xf32>
    %3 = tpu.iota {dimensions = array<i32: 1>} : vector<256x128xi32>
    %c0_i32 = arith.constant 0 : i32
    %4 = vector.broadcast %c0_i32 : i32 to vector<256x128xi32>
    %5 = arith.cmpi eq, %3, %4 : vector<256x128xi32>
    %6 = tpu.iota {dimensions = array<i32: 1>} : vector<256x128xi32>
    %c0_i32_5 = arith.constant 0 : i32
    %7 = vector.broadcast %c0_i32_5 : i32 to vector<256x128xi32>
    %8 = arith.cmpi eq, %6, %7 : vector<256x128xi32>
    %9 = tpu.iota {dimensions = array<i32: 1>} : vector<1x128xi32>
    %c0_i32_6 = arith.constant 0 : i32
    %10 = vector.broadcast %c0_i32_6 : i32 to vector<1x128xi32>
    %11 = arith.cmpi eq, %9, %10 : vector<1x128xi32>
    %cst = arith.constant 0.000000e+00 : f32
    %12 = vector.broadcast %cst : f32 to vector<256x128xf32>
    %13 = arith.select %5, %0, %12 : vector<256x128xi1>, vector<256x128xf32>
    %cst_7 = arith.constant dense<0.000000e+00> : vector<256xf32>
    %14 = vector.multi_reduction <add>, %13, %cst_7 [1] : vector<256x128xf32> to vector<256xf32>
    %15 = vector.shape_cast %14 : vector<256xf32> to vector<256x1xf32>
    %cst_8 = arith.constant 1.00000012 : f32
    %16 = vector.broadcast %cst_8 : f32 to vector<256x1xf32>
    %17 = arith.maximumf %15, %16 : vector<256x1xf32>
    %cst_9 = arith.constant 0.000000e+00 : f32
    %18 = vector.broadcast %cst_9 : f32 to vector<256x128xf32>
    %19 = arith.select %5, %18, %0 : vector<256x128xi1>, vector<256x128xf32>
    %20 = arith.mulf %19, %19 : vector<256x128xf32>
    %cst_10 = arith.constant dense<0.000000e+00> : vector<256xf32>
    %21 = vector.multi_reduction <add>, %20, %cst_10 [1] : vector<256x128xf32> to vector<256xf32>
    %22 = vector.shape_cast %21 : vector<256xf32> to vector<256x1xf32>
    %23 = math.sqrt %22 : vector<256x1xf32>
    %24 = arith.mulf %17, %17 : vector<256x1xf32>
    %cst_11 = arith.constant 1.000000e+00 : f32
    %25 = vector.broadcast %cst_11 : f32 to vector<256x1xf32>
    %26 = arith.subf %24, %25 : vector<256x1xf32>
    %27 = math.sqrt %26 : vector<256x1xf32>
    %28 = arith.addf %17, %27 : vector<256x1xf32>
    %29 = math.log %28 : vector<256x1xf32>
    %30 = vector.broadcast %29 : vector<256x1xf32> to vector<256x128xf32>
    %31 = arith.mulf %30, %19 : vector<256x128xf32>
    %cst_12 = arith.constant 1.000000e-07 : f32
    %32 = vector.broadcast %cst_12 : f32 to vector<256x1xf32>
    %33 = arith.maximumf %23, %32 : vector<256x1xf32>
    %34 = vector.broadcast %33 : vector<256x1xf32> to vector<256x128xf32>
    %35 = arith.divf %31, %34 : vector<256x128xf32>
    %cst_13 = arith.constant dense<0.000000e+00> : vector<256x128xf32>
    %36 = tpu.matmul %35, %1, %cst_13 {dimension_numbers = #tpu.dot_dimension_numbers<[1], [0], [0], [1], [0, 0, 1, 1], [], []>} : vector<256x128xf32>, vector<128x128xf32>, vector<256x128xf32> -> vector<256x128xf32>
    %cst_14 = arith.constant 1.000000e+00 : f32
    %37 = vector.broadcast %cst_14 : f32 to vector<256x128xf32>
    %38 = arith.mulf %36, %37 : vector<256x128xf32>
    %cst_15 = arith.constant 0.000000e+00 : f32
    %39 = vector.broadcast %cst_15 : f32 to vector<256x128xf32>
    %40 = arith.select %8, %39, %38 : vector<256x128xi1>, vector<256x128xf32>
    %41 = arith.mulf %40, %40 : vector<256x128xf32>
    %cst_16 = arith.constant 0.000000e+00 : f32
    %42 = vector.broadcast %cst_16 : f32 to vector<256x128xf32>
    %43 = arith.select %8, %42, %41 : vector<256x128xi1>, vector<256x128xf32>
    %cst_17 = arith.constant dense<0.000000e+00> : vector<256xf32>
    %44 = vector.multi_reduction <add>, %43, %cst_17 [1] : vector<256x128xf32> to vector<256xf32>
    %45 = vector.shape_cast %44 : vector<256xf32> to vector<256x1xf32>
    %46 = math.sqrt %45 : vector<256x1xf32>
    %47 = math.exp %46 : vector<256x1xf32>
    %48 = tpu.reciprocal %47 {approx = true} : vector<256x1xf32> -> vector<256x1xf32>
    %49 = arith.addf %47, %48 : vector<256x1xf32>
    %cst_18 = arith.constant 5.000000e-01 : f32
    %50 = vector.broadcast %cst_18 : f32 to vector<256x1xf32>
    %51 = arith.mulf %50, %49 : vector<256x1xf32>
    %52 = arith.subf %47, %48 : vector<256x1xf32>
    %cst_19 = arith.constant 5.000000e-01 : f32
    %53 = vector.broadcast %cst_19 : f32 to vector<256x1xf32>
    %54 = arith.mulf %53, %52 : vector<256x1xf32>
    %cst_20 = arith.constant 0.000000e+00 : f32
    %55 = vector.broadcast %cst_20 : f32 to vector<256x128xf32>
    %56 = arith.select %8, %55, %40 : vector<256x128xi1>, vector<256x128xf32>
    %57 = vector.broadcast %54 : vector<256x1xf32> to vector<256x128xf32>
    %58 = arith.mulf %57, %56 : vector<256x128xf32>
    %cst_21 = arith.constant 1.000000e-07 : f32
    %59 = vector.broadcast %cst_21 : f32 to vector<256x1xf32>
    %60 = arith.maximumf %46, %59 : vector<256x1xf32>
    %61 = vector.broadcast %60 : vector<256x1xf32> to vector<256x128xf32>
    %62 = arith.divf %58, %61 : vector<256x128xf32>
    %63 = vector.shape_cast %51 : vector<256x1xf32> to vector<256x1xf32>
    %64 = vector.broadcast %63 : vector<256x1xf32> to vector<256x128xf32>
    %65 = arith.select %8, %64, %62 : vector<256x128xi1>, vector<256x128xf32>
    %cst_22 = arith.constant 0.000000e+00 : f32
    %66 = vector.broadcast %cst_22 : f32 to vector<1x128xf32>
    %67 = arith.select %11, %66, %2 : vector<1x128xi1>, vector<1x128xf32>
    %cst_23 = arith.constant 0.000000e+00 : f32
    %68 = vector.broadcast %cst_23 : f32 to vector<256x128xf32>
    %69 = arith.select %8, %65, %68 : vector<256x128xi1>, vector<256x128xf32>
    %cst_24 = arith.constant dense<0.000000e+00> : vector<256xf32>
    %70 = vector.multi_reduction <add>, %69, %cst_24 [1] : vector<256x128xf32> to vector<256xf32>
    %71 = vector.shape_cast %70 : vector<256xf32> to vector<256x1xf32>
    %72 = vector.broadcast %67 : vector<1x128xf32> to vector<256x128xf32>
    %73 = arith.mulf %65, %72 : vector<256x128xf32>
    %cst_25 = arith.constant 0.000000e+00 : f32
    %74 = vector.broadcast %cst_25 : f32 to vector<256x128xf32>
    %75 = arith.select %8, %74, %73 : vector<256x128xi1>, vector<256x128xf32>
    %cst_26 = arith.constant dense<0.000000e+00> : vector<256xf32>
    %76 = vector.multi_reduction <add>, %75, %cst_26 [1] : vector<256x128xf32> to vector<256xf32>
    %77 = vector.shape_cast %76 : vector<256xf32> to vector<256x1xf32>
    %cst_27 = arith.constant 1.000000e+00 : f32
    %78 = vector.broadcast %cst_27 : f32 to vector<256x1xf32>
    %79 = arith.addf %78, %71 : vector<256x1xf32>
    %80 = vector.shape_cast %79 : vector<256x1xf32> to vector<256x1xf32>
    %81 = vector.broadcast %80 : vector<256x1xf32> to vector<256x128xf32>
    %82 = arith.select %8, %81, %65 : vector<256x128xi1>, vector<256x128xf32>
    %cst_28 = arith.constant 1.000000e+00 : f32
    %83 = vector.broadcast %cst_28 : f32 to vector<256x1xf32>
    %84 = arith.addf %83, %71 : vector<256x1xf32>
    %85 = arith.divf %77, %84 : vector<256x1xf32>
    %86 = vector.broadcast %85 : vector<256x1xf32> to vector<256x128xf32>
    %87 = arith.mulf %86, %82 : vector<256x128xf32>
    %88 = vector.broadcast %67 : vector<1x128xf32> to vector<256x128xf32>
    %89 = arith.addf %88, %87 : vector<256x128xf32>
    %cst_29 = arith.constant 0.000000e+00 : f32
    %90 = vector.broadcast %cst_29 : f32 to vector<256x128xf32>
    %91 = arith.select %8, %89, %90 : vector<256x128xi1>, vector<256x128xf32>
    %cst_30 = arith.constant dense<0.000000e+00> : vector<256xf32>
    %92 = vector.multi_reduction <add>, %91, %cst_30 [1] : vector<256x128xf32> to vector<256xf32>
    %93 = vector.shape_cast %92 : vector<256xf32> to vector<256x1xf32>
    %94 = arith.mulf %89, %89 : vector<256x128xf32>
    %cst_31 = arith.constant dense<0.000000e+00> : vector<256xf32>
    %95 = vector.multi_reduction <add>, %94, %cst_31 [1] : vector<256x128xf32> to vector<256xf32>
    %96 = vector.shape_cast %95 : vector<256xf32> to vector<256x1xf32>
    %cst_32 = arith.constant 2.000000e+00 : f32
    %97 = vector.broadcast %cst_32 : f32 to vector<256x1xf32>
    %98 = arith.mulf %97, %93 : vector<256x1xf32>
    %99 = arith.mulf %98, %93 : vector<256x1xf32>
    %100 = arith.subf %96, %99 : vector<256x1xf32>
    %cst_33 = arith.constant 0.000000e+00 : f32
    %101 = vector.broadcast %cst_33 : f32 to vector<256x1xf32>
    %102 = arith.maximumf %100, %101 : vector<256x1xf32>
    %103 = math.sqrt %102 : vector<256x1xf32>
    %104 = math.exp %103 : vector<256x1xf32>
    %105 = tpu.reciprocal %104 {approx = true} : vector<256x1xf32> -> vector<256x1xf32>
    %106 = arith.addf %104, %105 : vector<256x1xf32>
    %cst_34 = arith.constant 5.000000e-01 : f32
    %107 = vector.broadcast %cst_34 : f32 to vector<256x1xf32>
    %108 = arith.mulf %107, %106 : vector<256x1xf32>
    %109 = arith.subf %104, %105 : vector<256x1xf32>
    %cst_35 = arith.constant 5.000000e-01 : f32
    %110 = vector.broadcast %cst_35 : f32 to vector<256x1xf32>
    %111 = arith.mulf %110, %109 : vector<256x1xf32>
    %112 = vector.broadcast %108 : vector<256x1xf32> to vector<256x128xf32>
    %113 = arith.mulf %112, %65 : vector<256x128xf32>
    %114 = vector.broadcast %111 : vector<256x1xf32> to vector<256x128xf32>
    %115 = arith.mulf %114, %89 : vector<256x128xf32>
    %cst_36 = arith.constant 1.000000e-07 : f32
    %116 = vector.broadcast %cst_36 : f32 to vector<256x1xf32>
    %117 = arith.maximumf %103, %116 : vector<256x1xf32>
    %118 = vector.broadcast %117 : vector<256x1xf32> to vector<256x128xf32>
    %119 = arith.divf %115, %118 : vector<256x128xf32>
    %120 = arith.addf %113, %119 : vector<256x128xf32>
    %c0_37 = arith.constant 0 : index
    %c0_38 = arith.constant 0 : index
    %121 = vector.load %arg4[%c0_37, %c0_38] : memref<256x128xf32, #tpu.memory_space<vmem>>, vector<256x128xf32>
    tpu.vector_store %arg4[%c0_37, %c0_38], %120 {strides = array<i32>} : memref<256x128xf32, #tpu.memory_space<vmem>>, vector<256x128xf32>,
    return
  }
  func.func @transform_0(%arg0: i32) -> (i32, i32) {
    %c0_i32 = arith.constant 0 : i32
    %c0_i32_0 = arith.constant 0 : i32
    return %arg0, %c0_i32 : i32, i32
  }
  func.func @transform_1(%arg0: i32) -> (i32, i32) {
    %c0_i32 = arith.constant 0 : i32
    %c0_i32_0 = arith.constant 0 : i32
    %c0_i32_1 = arith.constant 0 : i32
    return %c0_i32, %c0_i32_0 : i32, i32
  }
  func.func @transform_2(%arg0: i32) -> (i32, i32) {
    %c0_i32 = arith.constant 0 : i32
    %c0_i32_0 = arith.constant 0 : i32
    %c0_i32_1 = arith.constant 0 : i32
    return %c0_i32, %c0_i32_0 : i32, i32
  }
  func.func @transform_3(%arg0: i32) -> (i32, i32) {
    %c0_i32 = arith.constant 0 : i32
    %c0_i32_0 = arith.constant 0 : i32
    return %arg0, %c0_i32 : i32, i32
  }
}

</mosaic_0001>

<llo_original>
// kernel: tpu_custom_call.1
$region0: #{tpu_custom_call.1}
  #allocation0 [shape = 'u32[]', space=smem, size = 0x4, offset = 0x4, fixed_abs, tag = 'smem constant byte address 0x4 - core index']
  #allocation1 [shape = 'u32[144,128]{1,0:T(1,128)}', space=vmem, size = 0x12000, scoped, tag = 'internal scratch']
  %s0 = inlined_call_operand.hbm [shape: f32[512,128], index: 0, kind: input, shape index: {}]
  %s1 = inlined_call_operand.hbm [shape: f32[128,128], index: 1, kind: input, shape index: {}]
  %s2 = inlined_call_operand.vmem [shape: f32[1,128], index: 2, kind: input, shape index: {}]
  %s3 = inlined_call_operand.hbm [shape: f32[512,128], index: 3, kind: output, shape index: {}]
  %s4 = sld [smem:[#allocation0]]
  $region53: #{tpu_custom_call.1} parent=0
    _
  %s6 = ssub.s32 1, %s4
  %s7 = scalar_select 0, %s6, %s4
  $region1: #{tpu_custom_call.1} parent=0
    #allocation2 [shape = 'u8[262144]{0}', space=vmem, size = 0x40000, scoped, tag = 'input window, operand 0']
    #allocation3 [shape = 's32[2]{0}', space=sflag, size = 0x8, scoped, tag = 'scoped memory for tpu_custom_call.1']
    #allocation4 [shape = 's32[2]{0}', space=sflag, size = 0x8, scoped, tag = 'scoped memory for tpu_custom_call.1']
    #allocation5 [shape = 'u8[65536]{0}', space=vmem, size = 0x10000, scoped, tag = 'input window, operand 1, single buffered']
    #allocation6 [shape = 's32[1]{0}', space=sflag, size = 0x4, scoped, tag = 'scoped memory for tpu_custom_call.1']
    #allocation7 [shape = 'u8[262144]{0}', space=vmem, size = 0x40000, scoped, tag = 'output window, operand 0']
    %8 = vsyncpa [#allocation3], 0
    %s9 = scalar_lea.sflag [#allocation3], 1
    %10 = vsyncpa %s9, 0
    %11 = vsyncpa [#allocation6], 0
    %12 = vsyncpa [#allocation4], 0
    %s13 = scalar_lea.sflag [#allocation4], 1
    %14 = vsyncpa %s13, 0
    loop: start=0, step=1, limit=4
    $region2: #{tpu_custom_call.1} parent=1 // loop_pre_header
      _
    $region3: #{tpu_custom_call.1} parent=1 // loop_header
      %s16 = sphi 0, %s20
      %p17 = scmp.ge.s32.totalorder %s16, 4
      %s26 = sphi 0, %s28
      %s29 = sphi 0, %s26
      %s30 = sphi 0, %s29
      %s46 = sphi 0, %s30
      %s50 = sphi 0, %s50
      %s52 = sphi 0, %s50
      %s53 = sphi 0, %s52
      %s67 = sphi 0, %s53
      %s71 = sphi 0, %s71
      %s73 = sphi 0, %s71
      %s74 = sphi 0, %s73
      %s88 = sphi 0, %s74
      %s94 = sphi 0, %s96
      %s97 = sphi 0, %s94
      %s98 = sphi 0, %s97
      %s114 = sphi 0, %s98
    $region4: #{tpu_custom_call.1} parent=1 // loop_header_branch
      %19 = sbr.rel (%p17) target = $region8
    $region5: #{tpu_custom_call.1} parent=1 // loop_body
      %s21 = ssub.s32 %s16, 1
      %s22 = ssub.s32 %s16, 2
      %s23 = sadd.s32 %s16, 1
      %s24 = ssub.s32 %s16, %s23
      %p25 = scmp.eq.s32.totalorder %s24, 0
      %s27 = sadd.s32 %s26, 1
      %s28 = scalar_select %p25, %s26, %s27
      %p31 = pneg %p25
      %p32 = scmp.eq.s32.totalorder %s16, 1
      %p33 = por %p31, %p32
      %p34 = scmp.ne.s32.totalorder %s26, %s29
      %p35 = scmp.eq.s32.totalorder %s16, 0
      %p36 = por %p34, %p35
      %p37 = scmp.ne.s32.totalorder %s26, %s29
      %p38 = scmp.eq.s32.totalorder %s21, 1
      %p39 = por %p37, %p38
      %p40 = scmp.ne.s32.totalorder %s29, %s30
      %p41 = scmp.eq.s32.totalorder %s21, 0
      %p42 = por %p40, %p41
      %p43 = scmp.ne.s32.totalorder %s29, %s30
      %p44 = scmp.eq.s32.totalorder %s22, 1
      %p45 = por %p43, %p44
      %p47 = scmp.ne.s32.totalorder %s30, %s46
      %p48 = scmp.eq.s32.totalorder %s22, 0
      %p49 = por %p47, %p48
      %s51 = sadd.s32 %s50, 1
      %p54 = scmp.eq.s32.totalorder %s16, 1
      %p55 = scmp.ne.s32.totalorder %s50, %s52
      %p56 = scmp.eq.s32.totalorder %s16, 0
      %p57 = por %p55, %p56
      %p58 = scmp.ne.s32.totalorder %s50, %s52
      %p59 = scmp.eq.s32.totalorder %s21, 1
      %p60 = por %p58, %p59
      %p61 = scmp.ne.s32.totalorder %s52, %s53
      %p62 = scmp.eq.s32.totalorder %s21, 0
      %p63 = por %p61, %p62
      %p64 = scmp.ne.s32.totalorder %s52, %s53
      %p65 = scmp.eq.s32.totalorder %s22, 1
      %p66 = por %p64, %p65
      %p68 = scmp.ne.s32.totalorder %s53, %s67
      %p69 = scmp.eq.s32.totalorder %s22, 0
      %p70 = por %p68, %p69
      %s72 = sadd.s32 %s71, 1
      %p75 = scmp.eq.s32.totalorder %s16, 1
      %p76 = scmp.ne.s32.totalorder %s71, %s73
      %p77 = scmp.eq.s32.totalorder %s16, 0
      %p78 = por %p76, %p77
      %p79 = scmp.ne.s32.totalorder %s71, %s73
      %p80 = scmp.eq.s32.totalorder %s21, 1
      %p81 = por %p79, %p80
      %p82 = scmp.ne.s32.totalorder %s73, %s74
      %p83 = scmp.eq.s32.totalorder %s21, 0
      %p84 = por %p82, %p83
      %p85 = scmp.ne.s32.totalorder %s73, %s74
      %p86 = scmp.eq.s32.totalorder %s22, 1
      %p87 = por %p85, %p86
      %p89 = scmp.ne.s32.totalorder %s74, %s88
      %p90 = scmp.eq.s32.totalorder %s22, 0
      %p91 = por %p89, %p90
      %s92 = ssub.s32 %s16, %s23
      %p93 = scmp.eq.s32.totalorder %s92, 0
      %s95 = sadd.s32 %s94, 1
      %s96 = scalar_select %p93, %s94, %s95
      %p99 = pneg %p93
      %p100 = scmp.eq.s32.totalorder %s16, 1
      %p101 = por %p99, %p100
      %p102 = scmp.ne.s32.totalorder %s94, %s97
      %p103 = scmp.eq.s32.totalorder %s16, 0
      %p104 = por %p102, %p103
      %p105 = scmp.ne.s32.totalorder %s94, %s97
      %p106 = scmp.eq.s32.totalorder %s21, 1
      %p107 = por %p105, %p106
      %p108 = scmp.ne.s32.totalorder %s97, %s98
      %p109 = scmp.eq.s32.totalorder %s21, 0
      %p110 = por %p108, %p109
      %p111 = scmp.ne.s32.totalorder %s97, %s98
      %p112 = scmp.eq.s32.totalorder %s22, 1
      %p113 = por %p111, %p112
      %p115 = scmp.ne.s32.totalorder %s98, %s114
      %p116 = scmp.eq.s32.totalorder %s22, 0
      %p117 = por %p115, %p116
      %p118 = scmp.le.s32.totalorder 1, %s16
      %p119 = scmp.lt.s32.totalorder %s16, 3
      %p120 = pnand %p118, %p119
      %p121 = pneg %p120
      // Predicated region
      $region9: #{tpu_custom_call.1} parent=5 // pred_check
        _
      $region10: #{tpu_custom_call.1} parent=5 // pred_check_branch
        %123 = sbr.rel (%p120) target = $region12
      $region11: #{tpu_custom_call.1} parent=5 // pred_region
        %s124 = ssub.s32 %s16, 1
        // Predicated region
        $region13: #{tpu_custom_call.1} parent=11 // pred_check
          %p125 = pneg %p63
        $region14: #{tpu_custom_call.1} parent=11 // pred_check_branch
          %127 = sbr.rel (%p125) target = $region16
        $region15: #{tpu_custom_call.1} parent=11 // pred_region
          %s129 = ssub.s32 2048, 2048
          %130 = vsyncadd [#allocation6], %s129
          %s131 = sshll.u32 [#allocation5], 4
          %s132 = int_to_ptr.vmem [resolvable:$true] %s131
          %137 = dma.hbm_to_vmem [thread:$0]  %s1, 2048, %s132, [#allocation6], 128, 128, 8
        $region16: #{tpu_custom_call.1} parent=11 // pred_fallthru
          _
        // Predicated region
        $region17: #{tpu_custom_call.1} parent=11 // pred_check
          %p138 = pneg %p84
        $region18: #{tpu_custom_call.1} parent=11 // pred_check_branch
          %140 = sbr.rel (%p138) target = $region20
        $region19: #{tpu_custom_call.1} parent=11 // pred_region
          _
        $region20: #{tpu_custom_call.1} parent=11 // pred_fallthru
          _
      $region12: #{tpu_custom_call.1} parent=5 // pred_fallthru
        _
      %p141 = scmp.lt.s32.totalorder %s16, 2
      // Predicated region
      $region21: #{tpu_custom_call.1} parent=5 // pred_check
        %p142 = pneg %p141
      $region22: #{tpu_custom_call.1} parent=5 // pred_check_branch
        %144 = sbr.rel (%p142) target = $region24
      $region23: #{tpu_custom_call.1} parent=5 // pred_region
        // Predicated region
        $region25: #{tpu_custom_call.1} parent=23 // pred_check
          %p145 = pneg %p36
        $region26: #{tpu_custom_call.1} parent=23 // pred_check_branch
          %147 = sbr.rel (%p145) target = $region28
        $region27: #{tpu_custom_call.1} parent=23 // pred_region
          %s148 = sand.u32 %s26, 1
          %s149 = scalar_lea.sflag [#allocation3], %s148
          %s150 = sand.u32 %s26, 1
          %s151 = smul.addr %s150, 256
          %s152 = scalar_lea.vmem [#allocation2], %s151
          %s153 = smul.u32 32, %s16
          %s155 = ssub.s32 4096, 4096
          %156 = vsyncadd %s149, %s155
          %s157 = smul.addr %s153, 128
          %s158 = scalar_lea.hbm %s0, %s157
          %s159 = sshll.u32 %s152, 4
          %s160 = int_to_ptr.vmem [resolvable:$true] %s159
          %165 = dma.hbm_to_vmem [thread:$0]  %s158, 4096, %s160, %s149, 128, 128, 8
        $region28: #{tpu_custom_call.1} parent=23 // pred_fallthru
          _
      $region24: #{tpu_custom_call.1} parent=5 // pred_fallthru
        _
      %p166 = scmp.le.s32.totalorder 1, %s16
      %p167 = scmp.lt.s32.totalorder %s16, 3
      %p168 = pnand %p166, %p167
      %p169 = pneg %p168
      // Predicated region
      $region29: #{tpu_custom_call.1} parent=5 // pred_check
        _
      $region30: #{tpu_custom_call.1} parent=5 // pred_check_branch
        %171 = sbr.rel (%p168) target = $region32
      $region31: #{tpu_custom_call.1} parent=5 // pred_region
        %s172 = ssub.s32 %s16, 1
        %s173 = sand.u32 %s29, 1
        %s174 = scalar_lea.sflag [#allocation3], %s173
        %s175 = sand.u32 %s29, 1
        %s176 = smul.addr %s175, 256
        %s177 = scalar_lea.vmem [#allocation2], %s176
        // Predicated region
        $region33: #{tpu_custom_call.1} parent=31 // pred_check
          %p178 = pneg %p42
        $region34: #{tpu_custom_call.1} parent=31 // pred_check_branch
          %180 = sbr.rel (%p178) target = $region36
        $region35: #{tpu_custom_call.1} parent=31 // pred_region
          %181 = dma.done %s174, 4096
        $region36: #{tpu_custom_call.1} parent=31 // pred_fallthru
          _
        // Predicated region
        $region37: #{tpu_custom_call.1} parent=31 // pred_check
          %p182 = pneg %p63
        $region38: #{tpu_custom_call.1} parent=31 // pred_check_branch
          %184 = sbr.rel (%p182) target = $region40
        $region39: #{tpu_custom_call.1} parent=31 // pred_region
          %185 = dma.done [#allocation6], 2048
        $region40: #{tpu_custom_call.1} parent=31 // pred_fallthru
          _
        %s186 = sand.u32 %s29, 1
        %s187 = scalar_lea.sflag [#allocation3], %s186
        %s188 = sand.u32 %s29, 1
        %s189 = smul.addr %s188, 256
        %s190 = scalar_lea.vmem [#allocation2], %s189
        %p191 = pneg %p42
        %p192 = pneg %p39
        %p193 = pneg %p63
        %p194 = pneg %p60
        %p195 = pneg %p84
        %p196 = pneg %p81
        %p197 = pneg %p110
        %p198 = pneg %p107
        %s199 = sand.u32 %s97, 1
        %s200 = scalar_lea.sflag [#allocation4], %s199
        %s201 = sand.u32 %s97, 1
        %s202 = smul.addr %s201, 256
        %s203 = scalar_lea.vmem [#allocation7], %s202
        %s204 = smul.u32 32, %s21
        %s205 = smul.u32 32, %s21
        %v206 = vld [vmem:[%s177] sm:$0xff]
        %v207 = vld [vmem:[%s177 + $0x8] sm:$0xff]
        %v208 = vld [vmem:[%s177 + $0x10] sm:$0xff]
        %v209 = vld [vmem:[%s177 + $0x18] sm:$0xff]
        %v210 = vld [vmem:[%s177 + $0x20] sm:$0xff]
        %v211 = vld [vmem:[%s177 + $0x28] sm:$0xff]
        %v212 = vld [vmem:[%s177 + $0x30] sm:$0xff]
        %v213 = vld [vmem:[%s177 + $0x38] sm:$0xff]
        %v214 = vld [vmem:[%s177 + $0x40] sm:$0xff]
        %v215 = vld [vmem:[%s177 + $0x48] sm:$0xff]
        %v216 = vld [vmem:[%s177 + $0x50] sm:$0xff]
        %v217 = vld [vmem:[%s177 + $0x58] sm:$0xff]
        %v218 = vld [vmem:[%s177 + $0x60] sm:$0xff]
        %v219 = vld [vmem:[%s177 + $0x68] sm:$0xff]
        %v220 = vld [vmem:[%s177 + $0x70] sm:$0xff]
        %v221 = vld [vmem:[%s177 + $0x78] sm:$0xff]
        %v222 = vld [vmem:[%s177 + $0x80] sm:$0xff]
        %v223 = vld [vmem:[%s177 + $0x88] sm:$0xff]
        %v224 = vld [vmem:[%s177 + $0x90] sm:$0xff]
        %v225 = vld [vmem:[%s177 + $0x98] sm:$0xff]
        %v226 = vld [vmem:[%s177 + $0xa0] sm:$0xff]
        %v227 = vld [vmem:[%s177 + $0xa8] sm:$0xff]
        %v228 = vld [vmem:[%s177 + $0xb0] sm:$0xff]
        %v229 = vld [vmem:[%s177 + $0xb8] sm:$0xff]
        %v230 = vld [vmem:[%s177 + $0xc0] sm:$0xff]
        %v231 = vld [vmem:[%s177 + $0xc8] sm:$0xff]
        %v232 = vld [vmem:[%s177 + $0xd0] sm:$0xff]
        %v233 = vld [vmem:[%s177 + $0xd8] sm:$0xff]
        %v234 = vld [vmem:[%s177 + $0xe0] sm:$0xff]
        %v235 = vld [vmem:[%s177 + $0xe8] sm:$0xff]
        %v236 = vld [vmem:[%s177 + $0xf0] sm:$0xff]
        %v237 = vld [vmem:[%s177 + $0xf8] sm:$0xff]
        %v238 = vld [vmem:[#allocation5] sm:$0xff]
        %v239 = vld [vmem:[#allocation5 + $0x8] sm:$0xff]
        %v240 = vld [vmem:[#allocation5 + $0x10] sm:$0xff]
        %v241 = vld [vmem:[#allocation5 + $0x18] sm:$0xff]
        %v242 = vld [vmem:[#allocation5 + $0x20] sm:$0xff]
        %v243 = vld [vmem:[#allocation5 + $0x28] sm:$0xff]
        %v244 = vld [vmem:[#allocation5 + $0x30] sm:$0xff]
        %v245 = vld [vmem:[#allocation5 + $0x38] sm:$0xff]
        %v246 = vld [vmem:[#allocation5 + $0x40] sm:$0xff]
        %v247 = vld [vmem:[#allocation5 + $0x48] sm:$0xff]
        %v248 = vld [vmem:[#allocation5 + $0x50] sm:$0xff]
        %v249 = vld [vmem:[#allocation5 + $0x58] sm:$0xff]
        %v250 = vld [vmem:[#allocation5 + $0x60] sm:$0xff]
        %v251 = vld [vmem:[#allocation5 + $0x68] sm:$0xff]
        %v252 = vld [vmem:[#allocation5 + $0x70] sm:$0xff]
        %v253 = vld [vmem:[#allocation5 + $0x78] sm:$0xff]
        %v254 = vld [vmem:[%s2] sm:$0x1]
        %v255 = vlaneseq
        %v256 = vand.u32 %v255, 127
        %vm257 = vcmp.eq.s32.totalorder %v256, 0
        %v258 = vsel %vm257, %v206, 0.0
        %v259 = vsel %vm257, %v207, 0.0
        %v260 = vsel %vm257, %v208, 0.0
        %v261 = vsel %vm257, %v209, 0.0
        %v262 = vsel %vm257, %v210, 0.0
        %v263 = vsel %vm257, %v211, 0.0
        %v264 = vsel %vm257, %v212, 0.0
        %v265 = vsel %vm257, %v213, 0.0
        %v266 = vsel %vm257, %v214, 0.0
        %v267 = vsel %vm257, %v215, 0.0
        %v268 = vsel %vm257, %v216, 0.0
        %v269 = vsel %vm257, %v217, 0.0
        %v270 = vsel %vm257, %v218, 0.0
        %v271 = vsel %vm257, %v219, 0.0
        %v272 = vsel %vm257, %v220, 0.0
        %v273 = vsel %vm257, %v221, 0.0
        %v274 = vsel %vm257, %v222, 0.0
        %v275 = vsel %vm257, %v223, 0.0
        %v276 = vsel %vm257, %v224, 0.0
        %v277 = vsel %vm257, %v225, 0.0
        %v278 = vsel %vm257, %v226, 0.0
        %v279 = vsel %vm257, %v227, 0.0
        %v280 = vsel %vm257, %v228, 0.0
        %v281 = vsel %vm257, %v229, 0.0
        %v282 = vsel %vm257, %v230, 0.0
        %v283 = vsel %vm257, %v231, 0.0
        %v284 = vsel %vm257, %v232, 0.0
        %v285 = vsel %vm257, %v233, 0.0
        %v286 = vsel %vm257, %v234, 0.0
        %v287 = vsel %vm257, %v235, 0.0
        %v288 = vsel %vm257, %v236, 0.0
        %v289 = vsel %vm257, %v237, 0.0
        %290 = vadd.xlane.f32.xlu0 %v258
        %v291 = vpop.xlane.xlu0 %290
        %292 = vadd.xlane.f32.xlu0 %v259
        %v293 = vpop.xlane.xlu0 %292
        %294 = vadd.xlane.f32.xlu0 %v260
        %v295 = vpop.xlane.xlu0 %294
        %296 = vadd.xlane.f32.xlu0 %v261
        %v297 = vpop.xlane.xlu0 %296
        %298 = vadd.xlane.f32.xlu0 %v262
        %v299 = vpop.xlane.xlu0 %298
        %300 = vadd.xlane.f32.xlu0 %v263
        %v301 = vpop.xlane.xlu0 %300
        %302 = vadd.xlane.f32.xlu0 %v264
        %v303 = vpop.xlane.xlu0 %302
        %304 = vadd.xlane.f32.xlu0 %v265
        %v305 = vpop.xlane.xlu0 %304
        %306 = vadd.xlane.f32.xlu0 %v266
        %v307 = vpop.xlane.xlu0 %306
        %308 = vadd.xlane.f32.xlu0 %v267
        %v309 = vpop.xlane.xlu0 %308
        %310 = vadd.xlane.f32.xlu0 %v268
        %v311 = vpop.xlane.xlu0 %310
        %312 = vadd.xlane.f32.xlu0 %v269
        %v313 = vpop.xlane.xlu0 %312
        %314 = vadd.xlane.f32.xlu0 %v270
        %v315 = vpop.xlane.xlu0 %314
        %316 = vadd.xlane.f32.xlu0 %v271
        %v317 = vpop.xlane.xlu0 %316
        %318 = vadd.xlane.f32.xlu0 %v272
        %v319 = vpop.xlane.xlu0 %318
        %320 = vadd.xlane.f32.xlu0 %v273
        %v321 = vpop.xlane.xlu0 %320
        %322 = vadd.xlane.f32.xlu0 %v274
        %v323 = vpop.xlane.xlu0 %322
        %324 = vadd.xlane.f32.xlu0 %v275
        %v325 = vpop.xlane.xlu0 %324
        %326 = vadd.xlane.f32.xlu0 %v276
        %v327 = vpop.xlane.xlu0 %326
        %328 = vadd.xlane.f32.xlu0 %v277
        %v329 = vpop.xlane.xlu0 %328
        %330 = vadd.xlane.f32.xlu0 %v278
        %v331 = vpop.xlane.xlu0 %330
        %332 = vadd.xlane.f32.xlu0 %v279
        %v333 = vpop.xlane.xlu0 %332
        %334 = vadd.xlane.f32.xlu0 %v280
        %v335 = vpop.xlane.xlu0 %334
        %336 = vadd.xlane.f32.xlu0 %v281
        %v337 = vpop.xlane.xlu0 %336
        %338 = vadd.xlane.f32.xlu0 %v282
        %v339 = vpop.xlane.xlu0 %338
        %340 = vadd.xlane.f32.xlu0 %v283
        %v341 = vpop.xlane.xlu0 %340
        %342 = vadd.xlane.f32.xlu0 %v284
        %v343 = vpop.xlane.xlu0 %342
        %344 = vadd.xlane.f32.xlu0 %v285
        %v345 = vpop.xlane.xlu0 %344
        %346 = vadd.xlane.f32.xlu0 %v286
        %v347 = vpop.xlane.xlu0 %346
        %348 = vadd.xlane.f32.xlu0 %v287
        %v349 = vpop.xlane.xlu0 %348
        %350 = vadd.xlane.f32.xlu0 %v288
        %v351 = vpop.xlane.xlu0 %350
        %352 = vadd.xlane.f32.xlu0 %v289
        %v353 = vpop.xlane.xlu0 %352
        %v354 = vmax.f32 %v291, 1.0000001
        %v355 = vmax.f32 %v293, 1.0000001
        %v356 = vmax.f32 %v295, 1.0000001
        %v357 = vmax.f32 %v297, 1.0000001
        %v358 = vmax.f32 %v299, 1.0000001
        %v359 = vmax.f32 %v301, 1.0000001
        %v360 = vmax.f32 %v303, 1.0000001
        %v361 = vmax.f32 %v305, 1.0000001
        %v362 = vmax.f32 %v307, 1.0000001
        %v363 = vmax.f32 %v309, 1.0000001
        %v364 = vmax.f32 %v311, 1.0000001
        %v365 = vmax.f32 %v313, 1.0000001
        %v366 = vmax.f32 %v315, 1.0000001
        %v367 = vmax.f32 %v317, 1.0000001
        %v368 = vmax.f32 %v319, 1.0000001
        %v369 = vmax.f32 %v321, 1.0000001
        %v370 = vmax.f32 %v323, 1.0000001
        %v371 = vmax.f32 %v325, 1.0000001
        %v372 = vmax.f32 %v327, 1.0000001
        %v373 = vmax.f32 %v329, 1.0000001
        %v374 = vmax.f32 %v331, 1.0000001
        %v375 = vmax.f32 %v333, 1.0000001
        %v376 = vmax.f32 %v335, 1.0000001
        %v377 = vmax.f32 %v337, 1.0000001
        %v378 = vmax.f32 %v339, 1.0000001
        %v379 = vmax.f32 %v341, 1.0000001
        %v380 = vmax.f32 %v343, 1.0000001
        %v381 = vmax.f32 %v345, 1.0000001
        %v382 = vmax.f32 %v347, 1.0000001
        %v383 = vmax.f32 %v349, 1.0000001
        %v384 = vmax.f32 %v351, 1.0000001
        %v385 = vmax.f32 %v353, 1.0000001
        %v386 = vsel %vm257, 0.0, %v206
        %v387 = vsel %vm257, 0.0, %v207
        %v388 = vsel %vm257, 0.0, %v208
        %v389 = vsel %vm257, 0.0, %v209
        %v390 = vsel %vm257, 0.0, %v210
        %v391 = vsel %vm257, 0.0, %v211
        %v392 = vsel %vm257, 0.0, %v212
        %v393 = vsel %vm257, 0.0, %v213
        %v394 = vsel %vm257, 0.0, %v214
        %v395 = vsel %vm257, 0.0, %v215
        %v396 = vsel %vm257, 0.0, %v216
        %v397 = vsel %vm257, 0.0, %v217
        %v398 = vsel %vm257, 0.0, %v218
        %v399 = vsel %vm257, 0.0, %v219
        %v400 = vsel %vm257, 0.0, %v220
        %v401 = vsel %vm257, 0.0, %v221
        %v402 = vsel %vm257, 0.0, %v222
        %v403 = vsel %vm257, 0.0, %v223
        %v404 = vsel %vm257, 0.0, %v224
        %v405 = vsel %vm257, 0.0, %v225
        %v406 = vsel %vm257, 0.0, %v226
        %v407 = vsel %vm257, 0.0, %v227
        %v408 = vsel %vm257, 0.0, %v228
        %v409 = vsel %vm257, 0.0, %v229
        %v410 = vsel %vm257, 0.0, %v230
        %v411 = vsel %vm257, 0.0, %v231
        %v412 = vsel %vm257, 0.0, %v232
        %v413 = vsel %vm257, 0.0, %v233
        %v414 = vsel %vm257, 0.0, %v234
        %v415 = vsel %vm257, 0.0, %v235
        %v416 = vsel %vm257, 0.0, %v236
        %v417 = vsel %vm257, 0.0, %v237
        %v418 = vmul.f32 %v386, %v386
        %v419 = vmul.f32 %v387, %v387
        %v420 = vmul.f32 %v388, %v388
        %v421 = vmul.f32 %v389, %v389
        %v422 = vmul.f32 %v390, %v390
        %v423 = vmul.f32 %v391, %v391
        %v424 = vmul.f32 %v392, %v392
        %v425 = vmul.f32 %v393, %v393
        %v426 = vmul.f32 %v394, %v394
        %v427 = vmul.f32 %v395, %v395
        %v428 = vmul.f32 %v396, %v396
        %v429 = vmul.f32 %v397, %v397
        %v430 = vmul.f32 %v398, %v398
        %v431 = vmul.f32 %v399, %v399
        %v432 = vmul.f32 %v400, %v400
        %v433 = vmul.f32 %v401, %v401
        %v434 = vmul.f32 %v402, %v402
        %v435 = vmul.f32 %v403, %v403
        %v436 = vmul.f32 %v404, %v404
        %v437 = vmul.f32 %v405, %v405
        %v438 = vmul.f32 %v406, %v406
        %v439 = vmul.f32 %v407, %v407
        %v440 = vmul.f32 %v408, %v408
        %v441 = vmul.f32 %v409, %v409
        %v442 = vmul.f32 %v410, %v410
        %v443 = vmul.f32 %v411, %v411
        %v444 = vmul.f32 %v412, %v412
        %v445 = vmul.f32 %v413, %v413
        %v446 = vmul.f32 %v414, %v414
        %v447 = vmul.f32 %v415, %v415
        %v448 = vmul.f32 %v416, %v416
        %v449 = vmul.f32 %v417, %v417
        %450 = vadd.xlane.f32.xlu0 %v418
        %v451 = vpop.xlane.xlu0 %450
        %452 = vadd.xlane.f32.xlu0 %v419
        %v453 = vpop.xlane.xlu0 %452
        %454 = vadd.xlane.f32.xlu0 %v420
        %v455 = vpop.xlane.xlu0 %454
        %456 = vadd.xlane.f32.xlu0 %v421
        %v457 = vpop.xlane.xlu0 %456
        %458 = vadd.xlane.f32.xlu0 %v422
        %v459 = vpop.xlane.xlu0 %458
        %460 = vadd.xlane.f32.xlu0 %v423
        %v461 = vpop.xlane.xlu0 %460
        %462 = vadd.xlane.f32.xlu0 %v424
        %v463 = vpop.xlane.xlu0 %462
        %464 = vadd.xlane.f32.xlu0 %v425
        %v465 = vpop.xlane.xlu0 %464
        %466 = vadd.xlane.f32.xlu0 %v426
        %v467 = vpop.xlane.xlu0 %466
        %468 = vadd.xlane.f32.xlu0 %v427
        %v469 = vpop.xlane.xlu0 %468
        %470 = vadd.xlane.f32.xlu0 %v428
        %v471 = vpop.xlane.xlu0 %470
        %472 = vadd.xlane.f32.xlu0 %v429
        %v473 = vpop.xlane.xlu0 %472
        %474 = vadd.xlane.f32.xlu0 %v430
        %v475 = vpop.xlane.xlu0 %474
        %476 = vadd.xlane.f32.xlu0 %v431
        %v477 = vpop.xlane.xlu0 %476
        %478 = vadd.xlane.f32.xlu0 %v432
        %v479 = vpop.xlane.xlu0 %478
        %480 = vadd.xlane.f32.xlu0 %v433
        %v481 = vpop.xlane.xlu0 %480
        %482 = vadd.xlane.f32.xlu0 %v434
        %v483 = vpop.xlane.xlu0 %482
        %484 = vadd.xlane.f32.xlu0 %v435
        %v485 = vpop.xlane.xlu0 %484
        %486 = vadd.xlane.f32.xlu0 %v436
        %v487 = vpop.xlane.xlu0 %486
        %488 = vadd.xlane.f32.xlu0 %v437
        %v489 = vpop.xlane.xlu0 %488
        %490 = vadd.xlane.f32.xlu0 %v438
        %v491 = vpop.xlane.xlu0 %490
        %492 = vadd.xlane.f32.xlu0 %v439
        %v493 = vpop.xlane.xlu0 %492
        %494 = vadd.xlane.f32.xlu0 %v440
        %v495 = vpop.xlane.xlu0 %494
        %496 = vadd.xlane.f32.xlu0 %v441
        %v497 = vpop.xlane.xlu0 %496
        %498 = vadd.xlane.f32.xlu0 %v442
        %v499 = vpop.xlane.xlu0 %498
        %500 = vadd.xlane.f32.xlu0 %v443
        %v501 = vpop.xlane.xlu0 %500
        %502 = vadd.xlane.f32.xlu0 %v444
        %v503 = vpop.xlane.xlu0 %502
        %504 = vadd.xlane.f32.xlu0 %v445
        %v505 = vpop.xlane.xlu0 %504
        %506 = vadd.xlane.f32.xlu0 %v446
        %v507 = vpop.xlane.xlu0 %506
        %508 = vadd.xlane.f32.xlu0 %v447
        %v509 = vpop.xlane.xlu0 %508
        %510 = vadd.xlane.f32.xlu0 %v448
        %v511 = vpop.xlane.xlu0 %510
        %512 = vadd.xlane.f32.xlu0 %v449
        %v513 = vpop.xlane.xlu0 %512
        %v514 = vrsqrt.pop %v451
        %v515 = vmul.f32 %v451, %v514
        %vm516 = vcmp.eq.f32.partialorder %v451, inf
        %v517 = vsel %vm516, %v451, %v515
        %vm518 = vcmp.eq.f32.partialorder %v451, 0.0
        %v519 = vand.u32 %v451, 2147483648
        %v520 = vsel %vm518, %v519, %v517
        %v521 = vrsqrt.pop %v453
        %v522 = vmul.f32 %v453, %v521
        %vm523 = vcmp.eq.f32.partialorder %v453, inf
        %v524 = vsel %vm523, %v453, %v522
        %vm525 = vcmp.eq.f32.partialorder %v453, 0.0
        %v526 = vand.u32 %v453, 2147483648
        %v527 = vsel %vm525, %v526, %v524
        %v528 = vrsqrt.pop %v455
        %v529 = vmul.f32 %v455, %v528
        %vm530 = vcmp.eq.f32.partialorder %v455, inf
        %v531 = vsel %vm530, %v455, %v529
        %vm532 = vcmp.eq.f32.partialorder %v455, 0.0
        %v533 = vand.u32 %v455, 2147483648
        %v534 = vsel %vm532, %v533, %v531
        %v535 = vrsqrt.pop %v457
        %v536 = vmul.f32 %v457, %v535
        %vm537 = vcmp.eq.f32.partialorder %v457, inf
        %v538 = vsel %vm537, %v457, %v536
        %vm539 = vcmp.eq.f32.partialorder %v457, 0.0
        %v540 = vand.u32 %v457, 2147483648
        %v541 = vsel %vm539, %v540, %v538
        %v542 = vrsqrt.pop %v459
        %v543 = vmul.f32 %v459, %v542
        %vm544 = vcmp.eq.f32.partialorder %v459, inf
        %v545 = vsel %vm544, %v459, %v543
        %vm546 = vcmp.eq.f32.partialorder %v459, 0.0
        %v547 = vand.u32 %v459, 2147483648
        %v548 = vsel %vm546, %v547, %v545
        %v549 = vrsqrt.pop %v461
        %v550 = vmul.f32 %v461, %v549
        %vm551 = vcmp.eq.f32.partialorder %v461, inf
        %v552 = vsel %vm551, %v461, %v550
        %vm553 = vcmp.eq.f32.partialorder %v461, 0.0
        %v554 = vand.u32 %v461, 2147483648
        %v555 = vsel %vm553, %v554, %v552
        %v556 = vrsqrt.pop %v463
        %v557 = vmul.f32 %v463, %v556
        %vm558 = vcmp.eq.f32.partialorder %v463, inf
        %v559 = vsel %vm558, %v463, %v557
        %vm560 = vcmp.eq.f32.partialorder %v463, 0.0
        %v561 = vand.u32 %v463, 2147483648
        %v562 = vsel %vm560, %v561, %v559
        %v563 = vrsqrt.pop %v465
        %v564 = vmul.f32 %v465, %v563
        %vm565 = vcmp.eq.f32.partialorder %v465, inf
        %v566 = vsel %vm565, %v465, %v564
        %vm567 = vcmp.eq.f32.partialorder %v465, 0.0
        %v568 = vand.u32 %v465, 2147483648
        %v569 = vsel %vm567, %v568, %v566
        %v570 = vrsqrt.pop %v467
        %v571 = vmul.f32 %v467, %v570
        %vm572 = vcmp.eq.f32.partialorder %v467, inf
        %v573 = vsel %vm572, %v467, %v571
        %vm574 = vcmp.eq.f32.partialorder %v467, 0.0
        %v575 = vand.u32 %v467, 2147483648
        %v576 = vsel %vm574, %v575, %v573
        %v577 = vrsqrt.pop %v469
        %v578 = vmul.f32 %v469, %v577
        %vm579 = vcmp.eq.f32.partialorder %v469, inf
        %v580 = vsel %vm579, %v469, %v578
        %vm581 = vcmp.eq.f32.partialorder %v469, 0.0
        %v582 = vand.u32 %v469, 2147483648
        %v583 = vsel %vm581, %v582, %v580
        %v584 = vrsqrt.pop %v471
        %v585 = vmul.f32 %v471, %v584
        %vm586 = vcmp.eq.f32.partialorder %v471, inf
        %v587 = vsel %vm586, %v471, %v585
        %vm588 = vcmp.eq.f32.partialorder %v471, 0.0
        %v589 = vand.u32 %v471, 2147483648
        %v590 = vsel %vm588, %v589, %v587
        %v591 = vrsqrt.pop %v473
        %v592 = vmul.f32 %v473, %v591
        %vm593 = vcmp.eq.f32.partialorder %v473, inf
        %v594 = vsel %vm593, %v473, %v592
        %vm595 = vcmp.eq.f32.partialorder %v473, 0.0
        %v596 = vand.u32 %v473, 2147483648
        %v597 = vsel %vm595, %v596, %v594
        %v598 = vrsqrt.pop %v475
        %v599 = vmul.f32 %v475, %v598
        %vm600 = vcmp.eq.f32.partialorder %v475, inf
        %v601 = vsel %vm600, %v475, %v599
        %vm602 = vcmp.eq.f32.partialorder %v475, 0.0
        %v603 = vand.u32 %v475, 2147483648
        %v604 = vsel %vm602, %v603, %v601
        %v605 = vrsqrt.pop %v477
        %v606 = vmul.f32 %v477, %v605
        %vm607 = vcmp.eq.f32.partialorder %v477, inf
        %v608 = vsel %vm607, %v477, %v606
        %vm609 = vcmp.eq.f32.partialorder %v477, 0.0
        %v610 = vand.u32 %v477, 2147483648
        %v611 = vsel %vm609, %v610, %v608
        %v612 = vrsqrt.pop %v479
        %v613 = vmul.f32 %v479, %v612
        %vm614 = vcmp.eq.f32.partialorder %v479, inf
        %v615 = vsel %vm614, %v479, %v613
        %vm616 = vcmp.eq.f32.partialorder %v479, 0.0
        %v617 = vand.u32 %v479, 2147483648
        %v618 = vsel %vm616, %v617, %v615
        %v619 = vrsqrt.pop %v481
        %v620 = vmul.f32 %v481, %v619
        %vm621 = vcmp.eq.f32.partialorder %v481, inf
        %v622 = vsel %vm621, %v481, %v620
        %vm623 = vcmp.eq.f32.partialorder %v481, 0.0
        %v624 = vand.u32 %v481, 2147483648
        %v625 = vsel %vm623, %v624, %v622
        %v626 = vrsqrt.pop %v483
        %v627 = vmul.f32 %v483, %v626
        %vm628 = vcmp.eq.f32.partialorder %v483, inf
        %v629 = vsel %vm628, %v483, %v627
        %vm630 = vcmp.eq.f32.partialorder %v483, 0.0
        %v631 = vand.u32 %v483, 2147483648
        %v632 = vsel %vm630, %v631, %v629
        %v633 = vrsqrt.pop %v485
        %v634 = vmul.f32 %v485, %v633
        %vm635 = vcmp.eq.f32.partialorder %v485, inf
        %v636 = vsel %vm635, %v485, %v634
        %vm637 = vcmp.eq.f32.partialorder %v485, 0.0
        %v638 = vand.u32 %v485, 2147483648
        %v639 = vsel %vm637, %v638, %v636
        %v640 = vrsqrt.pop %v487
        %v641 = vmul.f32 %v487, %v640
        %vm642 = vcmp.eq.f32.partialorder %v487, inf
        %v643 = vsel %vm642, %v487, %v641
        %vm644 = vcmp.eq.f32.partialorder %v487, 0.0
        %v645 = vand.u32 %v487, 2147483648
        %v646 = vsel %vm644, %v645, %v643
        %v647 = vrsqrt.pop %v489
        %v648 = vmul.f32 %v489, %v647
        %vm649 = vcmp.eq.f32.partialorder %v489, inf
        %v650 = vsel %vm649, %v489, %v648
        %vm651 = vcmp.eq.f32.partialorder %v489, 0.0
        %v652 = vand.u32 %v489, 2147483648
        %v653 = vsel %vm651, %v652, %v650
        %v654 = vrsqrt.pop %v491
        %v655 = vmul.f32 %v491, %v654
        %vm656 = vcmp.eq.f32.partialorder %v491, inf
        %v657 = vsel %vm656, %v491, %v655
        %vm658 = vcmp.eq.f32.partialorder %v491, 0.0
        %v659 = vand.u32 %v491, 2147483648
        %v660 = vsel %vm658, %v659, %v657
        %v661 = vrsqrt.pop %v493
        %v662 = vmul.f32 %v493, %v661
        %vm663 = vcmp.eq.f32.partialorder %v493, inf
        %v664 = vsel %vm663, %v493, %v662
        %vm665 = vcmp.eq.f32.partialorder %v493, 0.0
        %v666 = vand.u32 %v493, 2147483648
        %v667 = vsel %vm665, %v666, %v664
        %v668 = vrsqrt.pop %v495
        %v669 = vmul.f32 %v495, %v668
        %vm670 = vcmp.eq.f32.partialorder %v495, inf
        %v671 = vsel %vm670, %v495, %v669
        %vm672 = vcmp.eq.f32.partialorder %v495, 0.0
        %v673 = vand.u32 %v495, 2147483648
        %v674 = vsel %vm672, %v673, %v671
        %v675 = vrsqrt.pop %v497
        %v676 = vmul.f32 %v497, %v675
        %vm677 = vcmp.eq.f32.partialorder %v497, inf
        %v678 = vsel %vm677, %v497, %v676
        %vm679 = vcmp.eq.f32.partialorder %v497, 0.0
        %v680 = vand.u32 %v497, 2147483648
        %v681 = vsel %vm679, %v680, %v678
        %v682 = vrsqrt.pop %v499
        %v683 = vmul.f32 %v499, %v682
        %vm684 = vcmp.eq.f32.partialorder %v499, inf
        %v685 = vsel %vm684, %v499, %v683
        %vm686 = vcmp.eq.f32.partialorder %v499, 0.0
        %v687 = vand.u32 %v499, 2147483648
        %v688 = vsel %vm686, %v687, %v685
        %v689 = vrsqrt.pop %v501
        %v690 = vmul.f32 %v501, %v689
        %vm691 = vcmp.eq.f32.partialorder %v501, inf
        %v692 = vsel %vm691, %v501, %v690
        %vm693 = vcmp.eq.f32.partialorder %v501, 0.0
        %v694 = vand.u32 %v501, 2147483648
        %v695 = vsel %vm693, %v694, %v692
        %v696 = vrsqrt.pop %v503
        %v697 = vmul.f32 %v503, %v696
        %vm698 = vcmp.eq.f32.partialorder %v503, inf
        %v699 = vsel %vm698, %v503, %v697
        %vm700 = vcmp.eq.f32.partialorder %v503, 0.0
        %v701 = vand.u32 %v503, 2147483648
        %v702 = vsel %vm700, %v701, %v699
        %v703 = vrsqrt.pop %v505
        %v704 = vmul.f32 %v505, %v703
        %vm705 = vcmp.eq.f32.partialorder %v505, inf
        %v706 = vsel %vm705, %v505, %v704
        %vm707 = vcmp.eq.f32.partialorder %v505, 0.0
        %v708 = vand.u32 %v505, 2147483648
        %v709 = vsel %vm707, %v708, %v706
        %v710 = vrsqrt.pop %v507
        %v711 = vmul.f32 %v507, %v710
        %vm712 = vcmp.eq.f32.partialorder %v507, inf
        %v713 = vsel %vm712, %v507, %v711
        %vm714 = vcmp.eq.f32.partialorder %v507, 0.0
        %v715 = vand.u32 %v507, 2147483648
        %v716 = vsel %vm714, %v715, %v713
        %v717 = vrsqrt.pop %v509
        %v718 = vmul.f32 %v509, %v717
        %vm719 = vcmp.eq.f32.partialorder %v509, inf
        %v720 = vsel %vm719, %v509, %v718
        %vm721 = vcmp.eq.f32.partialorder %v509, 0.0
        %v722 = vand.u32 %v509, 2147483648
        %v723 = vsel %vm721, %v722, %v720
        %v724 = vrsqrt.pop %v511
        %v725 = vmul.f32 %v511, %v724
        %vm726 = vcmp.eq.f32.partialorder %v511, inf
        %v727 = vsel %vm726, %v511, %v725
        %vm728 = vcmp.eq.f32.partialorder %v511, 0.0
        %v729 = vand.u32 %v511, 2147483648
        %v730 = vsel %vm728, %v729, %v727
        %v731 = vrsqrt.pop %v513
        %v732 = vmul.f32 %v513, %v731
        %vm733 = vcmp.eq.f32.partialorder %v513, inf
        %v734 = vsel %vm733, %v513, %v732
        %vm735 = vcmp.eq.f32.partialorder %v513, 0.0
        %v736 = vand.u32 %v513, 2147483648
        %v737 = vsel %vm735, %v736, %v734
        %v738 = vmul.f32 %v354, %v354
        %v739 = vmul.f32 %v355, %v355
        %v740 = vmul.f32 %v356, %v356
        %v741 = vmul.f32 %v357, %v357
        %v742 = vmul.f32 %v358, %v358
        %v743 = vmul.f32 %v359, %v359
        %v744 = vmul.f32 %v360, %v360
        %v745 = vmul.f32 %v361, %v361
        %v746 = vmul.f32 %v362, %v362
        %v747 = vmul.f32 %v363, %v363
        %v748 = vmul.f32 %v364, %v364
        %v749 = vmul.f32 %v365, %v365
        %v750 = vmul.f32 %v366, %v366
        %v751 = vmul.f32 %v367, %v367
        %v752 = vmul.f32 %v368, %v368
        %v753 = vmul.f32 %v369, %v369
        %v754 = vmul.f32 %v370, %v370
        %v755 = vmul.f32 %v371, %v371
        %v756 = vmul.f32 %v372, %v372
        %v757 = vmul.f32 %v373, %v373
        %v758 = vmul.f32 %v374, %v374
        %v759 = vmul.f32 %v375, %v375
        %v760 = vmul.f32 %v376, %v376
        %v761 = vmul.f32 %v377, %v377
        %v762 = vmul.f32 %v378, %v378
        %v763 = vmul.f32 %v379, %v379
        %v764 = vmul.f32 %v380, %v380
        %v765 = vmul.f32 %v381, %v381
        %v766 = vmul.f32 %v382, %v382
        %v767 = vmul.f32 %v383, %v383
        %v768 = vmul.f32 %v384, %v384
        %v769 = vmul.f32 %v385, %v385
        %v770 = vsub.f32 %v738, 1.0
        %v771 = vsub.f32 %v739, 1.0
        %v772 = vsub.f32 %v740, 1.0
        %v773 = vsub.f32 %v741, 1.0
        %v774 = vsub.f32 %v742, 1.0
        %v775 = vsub.f32 %v743, 1.0
        %v776 = vsub.f32 %v744, 1.0
        %v777 = vsub.f32 %v745, 1.0
        %v778 = vsub.f32 %v746, 1.0
        %v779 = vsub.f32 %v747, 1.0
        %v780 = vsub.f32 %v748, 1.0
        %v781 = vsub.f32 %v749, 1.0
        %v782 = vsub.f32 %v750, 1.0
        %v783 = vsub.f32 %v751, 1.0
        %v784 = vsub.f32 %v752, 1.0
        %v785 = vsub.f32 %v753, 1.0
        %v786 = vsub.f32 %v754, 1.0
        %v787 = vsub.f32 %v755, 1.0
        %v788 = vsub.f32 %v756, 1.0
        %v789 = vsub.f32 %v757, 1.0
        %v790 = vsub.f32 %v758, 1.0
        %v791 = vsub.f32 %v759, 1.0
        %v792 = vsub.f32 %v760, 1.0
        %v793 = vsub.f32 %v761, 1.0
        %v794 = vsub.f32 %v762, 1.0
        %v795 = vsub.f32 %v763, 1.0
        %v796 = vsub.f32 %v764, 1.0
        %v797 = vsub.f32 %v765, 1.0
        %v798 = vsub.f32 %v766, 1.0
        %v799 = vsub.f32 %v767, 1.0
        %v800 = vsub.f32 %v768, 1.0
        %v801 = vsub.f32 %v769, 1.0
        %v802 = vrsqrt.pop %v770
        %v803 = vmul.f32 %v770, %v802
        %vm804 = vcmp.eq.f32.partialorder %v770, inf
        %v805 = vsel %vm804, %v770, %v803
        %vm806 = vcmp.eq.f32.partialorder %v770, 0.0
        %v807 = vand.u32 %v770, 2147483648
        %v808 = vsel %vm806, %v807, %v805
        %v809 = vrsqrt.pop %v771
        %v810 = vmul.f32 %v771, %v809
        %vm811 = vcmp.eq.f32.partialorder %v771, inf
        %v812 = vsel %vm811, %v771, %v810
        %vm813 = vcmp.eq.f32.partialorder %v771, 0.0
        %v814 = vand.u32 %v771, 2147483648
        %v815 = vsel %vm813, %v814, %v812
        %v816 = vrsqrt.pop %v772
        %v817 = vmul.f32 %v772, %v816
        %vm818 = vcmp.eq.f32.partialorder %v772, inf
        %v819 = vsel %vm818, %v772, %v817
        %vm820 = vcmp.eq.f32.partialorder %v772, 0.0
        %v821 = vand.u32 %v772, 2147483648
        %v822 = vsel %vm820, %v821, %v819
        %v823 = vrsqrt.pop %v773
        %v824 = vmul.f32 %v773, %v823
        %vm825 = vcmp.eq.f32.partialorder %v773, inf
        %v826 = vsel %vm825, %v773, %v824
        %vm827 = vcmp.eq.f32.partialorder %v773, 0.0
        %v828 = vand.u32 %v773, 2147483648
        %v829 = vsel %vm827, %v828, %v826
        %v830 = vrsqrt.pop %v774
        %v831 = vmul.f32 %v774, %v830
        %vm832 = vcmp.eq.f32.partialorder %v774, inf
        %v833 = vsel %vm832, %v774, %v831
        %vm834 = vcmp.eq.f32.partialorder %v774, 0.0
        %v835 = vand.u32 %v774, 2147483648
        %v836 = vsel %vm834, %v835, %v833
        %v837 = vrsqrt.pop %v775
        %v838 = vmul.f32 %v775, %v837
        %vm839 = vcmp.eq.f32.partialorder %v775, inf
        %v840 = vsel %vm839, %v775, %v838
        %vm841 = vcmp.eq.f32.partialorder %v775, 0.0
        %v842 = vand.u32 %v775, 2147483648
        %v843 = vsel %vm841, %v842, %v840
        %v844 = vrsqrt.pop %v776
        %v845 = vmul.f32 %v776, %v844
        %vm846 = vcmp.eq.f32.partialorder %v776, inf
        %v847 = vsel %vm846, %v776, %v845
        %vm848 = vcmp.eq.f32.partialorder %v776, 0.0
        %v849 = vand.u32 %v776, 2147483648
        %v850 = vsel %vm848, %v849, %v847
        %v851 = vrsqrt.pop %v777
        %v852 = vmul.f32 %v777, %v851
        %vm853 = vcmp.eq.f32.partialorder %v777, inf
        %v854 = vsel %vm853, %v777, %v852
        %vm855 = vcmp.eq.f32.partialorder %v777, 0.0
        %v856 = vand.u32 %v777, 2147483648
        %v857 = vsel %vm855, %v856, %v854
        %v858 = vrsqrt.pop %v778
        %v859 = vmul.f32 %v778, %v858
        %vm860 = vcmp.eq.f32.partialorder %v778, inf
        %v861 = vsel %vm860, %v778, %v859
        %vm862 = vcmp.eq.f32.partialorder %v778, 0.0
        %v863 = vand.u32 %v778, 2147483648
        %v864 = vsel %vm862, %v863, %v861
        %v865 = vrsqrt.pop %v779
        %v866 = vmul.f32 %v779, %v865
        %vm867 = vcmp.eq.f32.partialorder %v779, inf
        %v868 = vsel %vm867, %v779, %v866
        %vm869 = vcmp.eq.f32.partialorder %v779, 0.0
        %v870 = vand.u32 %v779, 2147483648
        %v871 = vsel %vm869, %v870, %v868
        %v872 = vrsqrt.pop %v780
        %v873 = vmul.f32 %v780, %v872
        %vm874 = vcmp.eq.f32.partialorder %v780, inf
        %v875 = vsel %vm874, %v780, %v873
        %vm876 = vcmp.eq.f32.partialorder %v780, 0.0
        %v877 = vand.u32 %v780, 2147483648
        %v878 = vsel %vm876, %v877, %v875
        %v879 = vrsqrt.pop %v781
        %v880 = vmul.f32 %v781, %v879
        %vm881 = vcmp.eq.f32.partialorder %v781, inf
        %v882 = vsel %vm881, %v781, %v880
        %vm883 = vcmp.eq.f32.partialorder %v781, 0.0
        %v884 = vand.u32 %v781, 2147483648
        %v885 = vsel %vm883, %v884, %v882
        %v886 = vrsqrt.pop %v782
        %v887 = vmul.f32 %v782, %v886
        %vm888 = vcmp.eq.f32.partialorder %v782, inf
        %v889 = vsel %vm888, %v782, %v887
        %vm890 = vcmp.eq.f32.partialorder %v782, 0.0
        %v891 = vand.u32 %v782, 2147483648
        %v892 = vsel %vm890, %v891, %v889
        %v893 = vrsqrt.pop %v783
        %v894 = vmul.f32 %v783, %v893
        %vm895 = vcmp.eq.f32.partialorder %v783, inf
        %v896 = vsel %vm895, %v783, %v894
        %vm897 = vcmp.eq.f32.partialorder %v783, 0.0
        %v898 = vand.u32 %v783, 2147483648
        %v899 = vsel %vm897, %v898, %v896
        %v900 = vrsqrt.pop %v784
        %v901 = vmul.f32 %v784, %v900
        %vm902 = vcmp.eq.f32.partialorder %v784, inf
        %v903 = vsel %vm902, %v784, %v901
        %vm904 = vcmp.eq.f32.partialorder %v784, 0.0
        %v905 = vand.u32 %v784, 2147483648
        %v906 = vsel %vm904, %v905, %v903
        %v907 = vrsqrt.pop %v785
        %v908 = vmul.f32 %v785, %v907
        %vm909 = vcmp.eq.f32.partialorder %v785, inf
        %v910 = vsel %vm909, %v785, %v908
        %vm911 = vcmp.eq.f32.partialorder %v785, 0.0
        %v912 = vand.u32 %v785, 2147483648
        %v913 = vsel %vm911, %v912, %v910
        %v914 = vrsqrt.pop %v786
        %v915 = vmul.f32 %v786, %v914
        %vm916 = vcmp.eq.f32.partialorder %v786, inf
        %v917 = vsel %vm916, %v786, %v915
        %vm918 = vcmp.eq.f32.partialorder %v786, 0.0
        %v919 = vand.u32 %v786, 2147483648
        %v920 = vsel %vm918, %v919, %v917
        %v921 = vrsqrt.pop %v787
        %v922 = vmul.f32 %v787, %v921
        %vm923 = vcmp.eq.f32.partialorder %v787, inf
        %v924 = vsel %vm923, %v787, %v922
        %vm925 = vcmp.eq.f32.partialorder %v787, 0.0
        %v926 = vand.u32 %v787, 2147483648
        %v927 = vsel %vm925, %v926, %v924
        %v928 = vrsqrt.pop %v788
        %v929 = vmul.f32 %v788, %v928
        %vm930 = vcmp.eq.f32.partialorder %v788, inf
        %v931 = vsel %vm930, %v788, %v929
        %vm932 = vcmp.eq.f32.partialorder %v788, 0.0
        %v933 = vand.u32 %v788, 2147483648
        %v934 = vsel %vm932, %v933, %v931
        %v935 = vrsqrt.pop %v789
        %v936 = vmul.f32 %v789, %v935
        %vm937 = vcmp.eq.f32.partialorder %v789, inf
        %v938 = vsel %vm937, %v789, %v936
        %vm939 = vcmp.eq.f32.partialorder %v789, 0.0
        %v940 = vand.u32 %v789, 2147483648
        %v941 = vsel %vm939, %v940, %v938
        %v942 = vrsqrt.pop %v790
        %v943 = vmul.f32 %v790, %v942
        %vm944 = vcmp.eq.f32.partialorder %v790, inf
        %v945 = vsel %vm944, %v790, %v943
        %vm946 = vcmp.eq.f32.partialorder %v790, 0.0
        %v947 = vand.u32 %v790, 2147483648
        %v948 = vsel %vm946, %v947, %v945
        %v949 = vrsqrt.pop %v791
        %v950 = vmul.f32 %v791, %v949
        %vm951 = vcmp.eq.f32.partialorder %v791, inf
        %v952 = vsel %vm951, %v791, %v950
        %vm953 = vcmp.eq.f32.partialorder %v791, 0.0
        %v954 = vand.u32 %v791, 2147483648
        %v955 = vsel %vm953, %v954, %v952
        %v956 = vrsqrt.pop %v792
        %v957 = vmul.f32 %v792, %v956
        %vm958 = vcmp.eq.f32.partialorder %v792, inf
        %v959 = vsel %vm958, %v792, %v957
        %vm960 = vcmp.eq.f32.partialorder %v792, 0.0
        %v961 = vand.u32 %v792, 2147483648
        %v962 = vsel %vm960, %v961, %v959
        %v963 = vrsqrt.pop %v793
        %v964 = vmul.f32 %v793, %v963
        %vm965 = vcmp.eq.f32.partialorder %v793, inf
        %v966 = vsel %vm965, %v793, %v964
        %vm967 = vcmp.eq.f32.partialorder %v793, 0.0
        %v968 = vand.u32 %v793, 2147483648
        %v969 = vsel %vm967, %v968, %v966
        %v970 = vrsqrt.pop %v794
        %v971 = vmul.f32 %v794, %v970
        %vm972 = vcmp.eq.f32.partialorder %v794, inf
        %v973 = vsel %vm972, %v794, %v971
        %vm974 = vcmp.eq.f32.partialorder %v794, 0.0
        %v975 = vand.u32 %v794, 2147483648
        %v976 = vsel %vm974, %v975, %v973
        %v977 = vrsqrt.pop %v795
        %v978 = vmul.f32 %v795, %v977
        %vm979 = vcmp.eq.f32.partialorder %v795, inf
        %v980 = vsel %vm979, %v795, %v978
        %vm981 = vcmp.eq.f32.partialorder %v795, 0.0
        %v982 = vand.u32 %v795, 2147483648
        %v983 = vsel %vm981, %v982, %v980
        %v984 = vrsqrt.pop %v796
        %v985 = vmul.f32 %v796, %v984
        %vm986 = vcmp.eq.f32.partialorder %v796, inf
        %v987 = vsel %vm986, %v796, %v985
        %vm988 = vcmp.eq.f32.partialorder %v796, 0.0
        %v989 = vand.u32 %v796, 2147483648
        %v990 = vsel %vm988, %v989, %v987
        %v991 = vrsqrt.pop %v797
        %v992 = vmul.f32 %v797, %v991
        %vm993 = vcmp.eq.f32.partialorder %v797, inf
        %v994 = vsel %vm993, %v797, %v992
        %vm995 = vcmp.eq.f32.partialorder %v797, 0.0
        %v996 = vand.u32 %v797, 2147483648
        %v997 = vsel %vm995, %v996, %v994
        %v998 = vrsqrt.pop %v798
        %v999 = vmul.f32 %v798, %v998
        %vm1000 = vcmp.eq.f32.partialorder %v798, inf
        %v1001 = vsel %vm1000, %v798, %v999
        %vm1002 = vcmp.eq.f32.partialorder %v798, 0.0
        %v1003 = vand.u32 %v798, 2147483648
        %v1004 = vsel %vm1002, %v1003, %v1001
        %v1005 = vrsqrt.pop %v799
        %v1006 = vmul.f32 %v799, %v1005
        %vm1007 = vcmp.eq.f32.partialorder %v799, inf
        %v1008 = vsel %vm1007, %v799, %v1006
        %vm1009 = vcmp.eq.f32.partialorder %v799, 0.0
        %v1010 = vand.u32 %v799, 2147483648
        %v1011 = vsel %vm1009, %v1010, %v1008
        %v1012 = vrsqrt.pop %v800
        %v1013 = vmul.f32 %v800, %v1012
        %vm1014 = vcmp.eq.f32.partialorder %v800, inf
        %v1015 = vsel %vm1014, %v800, %v1013
        %vm1016 = vcmp.eq.f32.partialorder %v800, 0.0
        %v1017 = vand.u32 %v800, 2147483648
        %v1018 = vsel %vm1016, %v1017, %v1015
        %v1019 = vrsqrt.pop %v801
        %v1020 = vmul.f32 %v801, %v1019
        %vm1021 = vcmp.eq.f32.partialorder %v801, inf
        %v1022 = vsel %vm1021, %v801, %v1020
        %vm1023 = vcmp.eq.f32.partialorder %v801, 0.0
        %v1024 = vand.u32 %v801, 2147483648
        %v1025 = vsel %vm1023, %v1024, %v1022
        %v1026 = vadd.f32 %v354, %v808
        %v1027 = vadd.f32 %v355, %v815
        %v1028 = vadd.f32 %v356, %v822
        %v1029 = vadd.f32 %v357, %v829
        %v1030 = vadd.f32 %v358, %v836
        %v1031 = vadd.f32 %v359, %v843
        %v1032 = vadd.f32 %v360, %v850
        %v1033 = vadd.f32 %v361, %v857
        %v1034 = vadd.f32 %v362, %v864
        %v1035 = vadd.f32 %v363, %v871
        %v1036 = vadd.f32 %v364, %v878
        %v1037 = vadd.f32 %v365, %v885
        %v1038 = vadd.f32 %v366, %v892
        %v1039 = vadd.f32 %v367, %v899
        %v1040 = vadd.f32 %v368, %v906
        %v1041 = vadd.f32 %v369, %v913
        %v1042 = vadd.f32 %v370, %v920
        %v1043 = vadd.f32 %v371, %v927
        %v1044 = vadd.f32 %v372, %v934
        %v1045 = vadd.f32 %v373, %v941
        %v1046 = vadd.f32 %v374, %v948
        %v1047 = vadd.f32 %v375, %v955
        %v1048 = vadd.f32 %v376, %v962
        %v1049 = vadd.f32 %v377, %v969
        %v1050 = vadd.f32 %v378, %v976
        %v1051 = vadd.f32 %v379, %v983
        %v1052 = vadd.f32 %v380, %v990
        %v1053 = vadd.f32 %v381, %v997
        %v1054 = vadd.f32 %v382, %v1004
        %v1055 = vadd.f32 %v383, %v1011
        %v1056 = vadd.f32 %v384, %v1018
        %v1057 = vadd.f32 %v385, %v1025
        %v1058 = vlog2.pop %v1026
        %v1059 = vmul.f32 %v1058, 0.6931472
        %v1060 = vlog2.pop %v1027
        %v1061 = vmul.f32 %v1060, 0.6931472
        %v1062 = vlog2.pop %v1028
        %v1063 = vmul.f32 %v1062, 0.6931472
        %v1064 = vlog2.pop %v1029
        %v1065 = vmul.f32 %v1064, 0.6931472
        %v1066 = vlog2.pop %v1030
        %v1067 = vmul.f32 %v1066, 0.6931472
        %v1068 = vlog2.pop %v1031
        %v1069 = vmul.f32 %v1068, 0.6931472
        %v1070 = vlog2.pop %v1032
        %v1071 = vmul.f32 %v1070, 0.6931472
        %v1072 = vlog2.pop %v1033
        %v1073 = vmul.f32 %v1072, 0.6931472
        %v1074 = vlog2.pop %v1034
        %v1075 = vmul.f32 %v1074, 0.6931472
        %v1076 = vlog2.pop %v1035
        %v1077 = vmul.f32 %v1076, 0.6931472
        %v1078 = vlog2.pop %v1036
        %v1079 = vmul.f32 %v1078, 0.6931472
        %v1080 = vlog2.pop %v1037
        %v1081 = vmul.f32 %v1080, 0.6931472
        %v1082 = vlog2.pop %v1038
        %v1083 = vmul.f32 %v1082, 0.6931472
        %v1084 = vlog2.pop %v1039
        %v1085 = vmul.f32 %v1084, 0.6931472
        %v1086 = vlog2.pop %v1040
        %v1087 = vmul.f32 %v1086, 0.6931472
        %v1088 = vlog2.pop %v1041
        %v1089 = vmul.f32 %v1088, 0.6931472
        %v1090 = vlog2.pop %v1042
        %v1091 = vmul.f32 %v1090, 0.6931472
        %v1092 = vlog2.pop %v1043
        %v1093 = vmul.f32 %v1092, 0.6931472
        %v1094 = vlog2.pop %v1044
        %v1095 = vmul.f32 %v1094, 0.6931472
        %v1096 = vlog2.pop %v1045
        %v1097 = vmul.f32 %v1096, 0.6931472
        %v1098 = vlog2.pop %v1046
        %v1099 = vmul.f32 %v1098, 0.6931472
        %v1100 = vlog2.pop %v1047
        %v1101 = vmul.f32 %v1100, 0.6931472
        %v1102 = vlog2.pop %v1048
        %v1103 = vmul.f32 %v1102, 0.6931472
        %v1104 = vlog2.pop %v1049
        %v1105 = vmul.f32 %v1104, 0.6931472
        %v1106 = vlog2.pop %v1050
        %v1107 = vmul.f32 %v1106, 0.6931472
        %v1108 = vlog2.pop %v1051
        %v1109 = vmul.f32 %v1108, 0.6931472
        %v1110 = vlog2.pop %v1052
        %v1111 = vmul.f32 %v1110, 0.6931472
        %v1112 = vlog2.pop %v1053
        %v1113 = vmul.f32 %v1112, 0.6931472
        %v1114 = vlog2.pop %v1054
        %v1115 = vmul.f32 %v1114, 0.6931472
        %v1116 = vlog2.pop %v1055
        %v1117 = vmul.f32 %v1116, 0.6931472
        %v1118 = vlog2.pop %v1056
        %v1119 = vmul.f32 %v1118, 0.6931472
        %v1120 = vlog2.pop %v1057
        %v1121 = vmul.f32 %v1120, 0.6931472
        %v1122 = vmul.f32 %v1059, %v386
        %v1123 = vmul.f32 %v1061, %v387
        %v1124 = vmul.f32 %v1063, %v388
        %v1125 = vmul.f32 %v1065, %v389
        %v1126 = vmul.f32 %v1067, %v390
        %v1127 = vmul.f32 %v1069, %v391
        %v1128 = vmul.f32 %v1071, %v392
        %v1129 = vmul.f32 %v1073, %v393
        %v1130 = vmul.f32 %v1075, %v394
        %v1131 = vmul.f32 %v1077, %v395
        %v1132 = vmul.f32 %v1079, %v396
        %v1133 = vmul.f32 %v1081, %v397
        %v1134 = vmul.f32 %v1083, %v398
        %v1135 = vmul.f32 %v1085, %v399
        %v1136 = vmul.f32 %v1087, %v400
        %v1137 = vmul.f32 %v1089, %v401
        %v1138 = vmul.f32 %v1091, %v402
        %v1139 = vmul.f32 %v1093, %v403
        %v1140 = vmul.f32 %v1095, %v404
        %v1141 = vmul.f32 %v1097, %v405
        %v1142 = vmul.f32 %v1099, %v406
        %v1143 = vmul.f32 %v1101, %v407
        %v1144 = vmul.f32 %v1103, %v408
        %v1145 = vmul.f32 %v1105, %v409
        %v1146 = vmul.f32 %v1107, %v410
        %v1147 = vmul.f32 %v1109, %v411
        %v1148 = vmul.f32 %v1111, %v412
        %v1149 = vmul.f32 %v1113, %v413
        %v1150 = vmul.f32 %v1115, %v414
        %v1151 = vmul.f32 %v1117, %v415
        %v1152 = vmul.f32 %v1119, %v416
        %v1153 = vmul.f32 %v1121, %v417
        %v1154 = vmax.f32 %v520, 1e-07
        %v1155 = vmax.f32 %v527, 1e-07
        %v1156 = vmax.f32 %v534, 1e-07
        %v1157 = vmax.f32 %v541, 1e-07
        %v1158 = vmax.f32 %v548, 1e-07
        %v1159 = vmax.f32 %v555, 1e-07
        %v1160 = vmax.f32 %v562, 1e-07
        %v1161 = vmax.f32 %v569, 1e-07
        %v1162 = vmax.f32 %v576, 1e-07
        %v1163 = vmax.f32 %v583, 1e-07
        %v1164 = vmax.f32 %v590, 1e-07
        %v1165 = vmax.f32 %v597, 1e-07
        %v1166 = vmax.f32 %v604, 1e-07
        %v1167 = vmax.f32 %v611, 1e-07
        %v1168 = vmax.f32 %v618, 1e-07
        %v1169 = vmax.f32 %v625, 1e-07
        %v1170 = vmax.f32 %v632, 1e-07
        %v1171 = vmax.f32 %v639, 1e-07
        %v1172 = vmax.f32 %v646, 1e-07
        %v1173 = vmax.f32 %v653, 1e-07
        %v1174 = vmax.f32 %v660, 1e-07
        %v1175 = vmax.f32 %v667, 1e-07
        %v1176 = vmax.f32 %v674, 1e-07
        %v1177 = vmax.f32 %v681, 1e-07
        %v1178 = vmax.f32 %v688, 1e-07
        %v1179 = vmax.f32 %v695, 1e-07
        %v1180 = vmax.f32 %v702, 1e-07
        %v1181 = vmax.f32 %v709, 1e-07
        %v1182 = vmax.f32 %v716, 1e-07
        %v1183 = vmax.f32 %v723, 1e-07
        %v1184 = vmax.f32 %v730, 1e-07
        %v1185 = vmax.f32 %v737, 1e-07
        %v1186 = vrcp.pop %v1154
        %v1187 = vmul.f32 %v1122, %v1186
        %v1188 = vrcp.pop %v1155
        %v1189 = vmul.f32 %v1123, %v1188
        %v1190 = vrcp.pop %v1156
        %v1191 = vmul.f32 %v1124, %v1190
        %v1192 = vrcp.pop %v1157
        %v1193 = vmul.f32 %v1125, %v1192
        %v1194 = vrcp.pop %v1158
        %v1195 = vmul.f32 %v1126, %v1194
        %v1196 = vrcp.pop %v1159
        %v1197 = vmul.f32 %v1127, %v1196
        %v1198 = vrcp.pop %v1160
        %v1199 = vmul.f32 %v1128, %v1198
        %v1200 = vrcp.pop %v1161
        %v1201 = vmul.f32 %v1129, %v1200
        %v1202 = vrcp.pop %v1162
        %v1203 = vmul.f32 %v1130, %v1202
        %v1204 = vrcp.pop %v1163
        %v1205 = vmul.f32 %v1131, %v1204
        %v1206 = vrcp.pop %v1164
        %v1207 = vmul.f32 %v1132, %v1206
        %v1208 = vrcp.pop %v1165
        %v1209 = vmul.f32 %v1133, %v1208
        %v1210 = vrcp.pop %v1166
        %v1211 = vmul.f32 %v1134, %v1210
        %v1212 = vrcp.pop %v1167
        %v1213 = vmul.f32 %v1135, %v1212
        %v1214 = vrcp.pop %v1168
        %v1215 = vmul.f32 %v1136, %v1214
        %v1216 = vrcp.pop %v1169
        %v1217 = vmul.f32 %v1137, %v1216
        %v1218 = vrcp.pop %v1170
        %v1219 = vmul.f32 %v1138, %v1218
        %v1220 = vrcp.pop %v1171
        %v1221 = vmul.f32 %v1139, %v1220
        %v1222 = vrcp.pop %v1172
        %v1223 = vmul.f32 %v1140, %v1222
        %v1224 = vrcp.pop %v1173
        %v1225 = vmul.f32 %v1141, %v1224
        %v1226 = vrcp.pop %v1174
        %v1227 = vmul.f32 %v1142, %v1226
        %v1228 = vrcp.pop %v1175
        %v1229 = vmul.f32 %v1143, %v1228
        %v1230 = vrcp.pop %v1176
        %v1231 = vmul.f32 %v1144, %v1230
        %v1232 = vrcp.pop %v1177
        %v1233 = vmul.f32 %v1145, %v1232
        %v1234 = vrcp.pop %v1178
        %v1235 = vmul.f32 %v1146, %v1234
        %v1236 = vrcp.pop %v1179
        %v1237 = vmul.f32 %v1147, %v1236
        %v1238 = vrcp.pop %v1180
        %v1239 = vmul.f32 %v1148, %v1238
        %v1240 = vrcp.pop %v1181
        %v1241 = vmul.f32 %v1149, %v1240
        %v1242 = vrcp.pop %v1182
        %v1243 = vmul.f32 %v1150, %v1242
        %v1244 = vrcp.pop %v1183
        %v1245 = vmul.f32 %v1151, %v1244
        %v1246 = vrcp.pop %v1184
        %v1247 = vmul.f32 %v1152, %v1246
        %v1248 = vrcp.pop %v1185
        %v1249 = vmul.f32 %v1153, %v1248
        %1250 = vmatprep.subr.mxu0 0.0
        %1251 = vmatpush1.msra.mxu0 %v238
        %1252 = vmatprep.subr.mxu0 0.0
        %1253 = vmatpush1.msra.mxu0 %v239
        %1254 = vmatprep.subr.mxu0 0.0
        %1255 = vmatpush1.msra.mxu0 %v240
        %1256 = vmatprep.subr.mxu0 0.0
        %1257 = vmatpush1.msra.mxu0 %v241
        %1258 = vmatprep.subr.mxu0 0.0
        %1259 = vmatpush1.msra.mxu0 %v242
        %1260 = vmatprep.subr.mxu0 0.0
        %1261 = vmatpush1.msra.mxu0 %v243
        %1262 = vmatprep.subr.mxu0 0.0
        %1263 = vmatpush1.msra.mxu0 %v244
        %1264 = vmatprep.subr.mxu0 0.0
        %1265 = vmatpush1.msra.mxu0 %v245
        %1266 = vmatprep.subr.mxu0 0.0
        %1267 = vmatpush1.msra.mxu0 %v246
        %1268 = vmatprep.subr.mxu0 0.0
        %1269 = vmatpush1.msra.mxu0 %v247
        %1270 = vmatprep.subr.mxu0 0.0
        %1271 = vmatpush1.msra.mxu0 %v248
        %1272 = vmatprep.subr.mxu0 0.0
        %1273 = vmatpush1.msra.mxu0 %v249
        %1274 = vmatprep.subr.mxu0 0.0
        %1275 = vmatpush1.msra.mxu0 %v250
        %1276 = vmatprep.subr.mxu0 0.0
        %1277 = vmatpush1.msra.mxu0 %v251
        %1278 = vmatprep.subr.mxu0 0.0
        %1279 = vmatpush1.msra.mxu0 %v252
        %1280 = vmatprep.subr.mxu0 0.0
        %1281 = vmatpush1.msra.mxu0 %v253
        %1282 = vmatprep.subr.mxu0 0.0
        %1283 = vmatpush1.msra.mxu0 0.0
        %1284 = vmatprep.subr.mxu0 0.0
        %1285 = vmatpush1.msra.mxu0 0.0
        %1286 = vmatprep.subr.mxu0 0.0
        %1287 = vmatpush1.msra.mxu0 0.0
        %1288 = vmatprep.subr.mxu0 0.0
        %1289 = vmatpush1.msra.mxu0 0.0
        %1290 = vmatprep.subr.mxu0 0.0
        %1291 = vmatpush1.msra.mxu0 0.0
        %1292 = vmatprep.subr.mxu0 0.0
        %1293 = vmatpush1.msra.mxu0 0.0
        %1294 = vmatprep.subr.mxu0 0.0
        %1295 = vmatpush1.msra.mxu0 0.0
        %1296 = vmatprep.subr.mxu0 0.0
        %1297 = vmatpush1.msra.mxu0 0.0
        %1298 = vmatprep.subr.mxu0 0.0
        %1299 = vmatpush1.msra.mxu0 0.0
        %1300 = vmatprep.subr.mxu0 0.0
        %1301 = vmatpush1.msra.mxu0 0.0
        %1302 = vmatprep.subr.mxu0 0.0
        %1303 = vmatpush1.msra.mxu0 0.0
        %1304 = vmatprep.subr.mxu0 0.0
        %1305 = vmatpush1.msra.mxu0 0.0
        %1306 = vmatprep.subr.mxu0 0.0
        %1307 = vmatpush1.msra.mxu0 0.0
        %1308 = vmatprep.subr.mxu0 0.0
        %1309 = vmatpush1.msra.mxu0 0.0
        %1310 = vmatprep.subr.mxu0 0.0
        %1311 = vmatpush1.msra.mxu0 0.0
        %1312 = vmatprep.subr.mxu0 0.0
        %1313 = vmatpush1.msra.mxu0 0.0
        %1314 = vmatprep.mubr.f32.mxu0 0.0
        %1315 = vmatmul.mubr.f32.gmra.mrb[0].mxu0 %v1187
        %v1316 = vpop.f32.mrb[0].mxu0
        %v1317 = vadd.f32 0.0, %v1316
        %v1318 = vpop.f32.mrb[0].mxu0
        %1319 = vmatprep.mubr.f32.mxu0 0.0
        %1320 = vmatmul.mubr.f32.gmra.mrb[0].mxu0 %v1189
        %v1321 = vpop.f32.mrb[0].mxu0
        %v1322 = vadd.f32 0.0, %v1321
        %v1323 = vpop.f32.mrb[0].mxu0
        %1324 = vmatprep.mubr.f32.mxu0 0.0
        %1325 = vmatmul.mubr.f32.gmra.mrb[0].mxu0 %v1191
        %v1326 = vpop.f32.mrb[0].mxu0
        %v1327 = vadd.f32 0.0, %v1326
        %v1328 = vpop.f32.mrb[0].mxu0
        %1329 = vmatprep.mubr.f32.mxu0 0.0
        %1330 = vmatmul.mubr.f32.gmra.mrb[0].mxu0 %v1193
        %v1331 = vpop.f32.mrb[0].mxu0
        %v1332 = vadd.f32 0.0, %v1331
        %v1333 = vpop.f32.mrb[0].mxu0
        %1334 = vmatprep.mubr.f32.mxu0 0.0
        %1335 = vmatmul.mubr.f32.gmra.mrb[0].mxu0 %v1195
        %v1336 = vpop.f32.mrb[0].mxu0
        %v1337 = vadd.f32 0.0, %v1336
        %v1338 = vpop.f32.mrb[0].mxu0
        %1339 = vmatprep.mubr.f32.mxu0 0.0
        %1340 = vmatmul.mubr.f32.gmra.mrb[0].mxu0 %v1197
        %v1341 = vpop.f32.mrb[0].mxu0
        %v1342 = vadd.f32 0.0, %v1341
        %v1343 = vpop.f32.mrb[0].mxu0
        %1344 = vmatprep.mubr.f32.mxu0 0.0
        %1345 = vmatmul.mubr.f32.gmra.mrb[0].mxu0 %v1199
        %v1346 = vpop.f32.mrb[0].mxu0
        %v1347 = vadd.f32 0.0, %v1346
        %v1348 = vpop.f32.mrb[0].mxu0
        %1349 = vmatprep.mubr.f32.mxu0 0.0
        %1350 = vmatmul.mubr.f32.gmra.mrb[0].mxu0 %v1201
        %v1351 = vpop.f32.mrb[0].mxu0
        %v1352 = vadd.f32 0.0, %v1351
        %v1353 = vpop.f32.mrb[0].mxu0
        %1354 = vmatprep.mubr.f32.mxu0 0.0
        %1355 = vmatmul.mubr.f32.gmra.mrb[0].mxu0 %v1203
        %v1356 = vpop.f32.mrb[0].mxu0
        %v1357 = vadd.f32 0.0, %v1356
        %v1358 = vpop.f32.mrb[0].mxu0
        %1359 = vmatprep.mubr.f32.mxu0 0.0
        %1360 = vmatmul.mubr.f32.gmra.mrb[0].mxu0 %v1205
        %v1361 = vpop.f32.mrb[0].mxu0
        %v1362 = vadd.f32 0.0, %v1361
        %v1363 = vpop.f32.mrb[0].mxu0
        %1364 = vmatprep.mubr.f32.mxu0 0.0
        %1365 = vmatmul.mubr.f32.gmra.mrb[0].mxu0 %v1207
        %v1366 = vpop.f32.mrb[0].mxu0
        %v1367 = vadd.f32 0.0, %v1366
        %v1368 = vpop.f32.mrb[0].mxu0
        %1369 = vmatprep.mubr.f32.mxu0 0.0
        %1370 = vmatmul.mubr.f32.gmra.mrb[0].mxu0 %v1209
        %v1371 = vpop.f32.mrb[0].mxu0
        %v1372 = vadd.f32 0.0, %v1371
        %v1373 = vpop.f32.mrb[0].mxu0
        %1374 = vmatprep.mubr.f32.mxu0 0.0
        %1375 = vmatmul.mubr.f32.gmra.mrb[0].mxu0 %v1211
        %v1376 = vpop.f32.mrb[0].mxu0
        %v1377 = vadd.f32 0.0, %v1376
        %v1378 = vpop.f32.mrb[0].mxu0
        %1379 = vmatprep.mubr.f32.mxu0 0.0
        %1380 = vmatmul.mubr.f32.gmra.mrb[0].mxu0 %v1213
        %v1381 = vpop.f32.mrb[0].mxu0
        %v1382 = vadd.f32 0.0, %v1381
        %v1383 = vpop.f32.mrb[0].mxu0
        %1384 = vmatprep.mubr.f32.mxu0 0.0
        %1385 = vmatmul.mubr.f32.gmra.mrb[0].mxu0 %v1215
        %v1386 = vpop.f32.mrb[0].mxu0
        %v1387 = vadd.f32 0.0, %v1386
        %v1388 = vpop.f32.mrb[0].mxu0
        %1389 = vmatprep.mubr.f32.mxu0 0.0
        %1390 = vmatmul.mubr.f32.gmra.mrb[0].mxu0 %v1217
        %v1391 = vpop.f32.mrb[0].mxu0
        %v1392 = vadd.f32 0.0, %v1391
        %v1393 = vpop.f32.mrb[0].mxu0
        %1394 = vmatprep.mubr.f32.mxu0 0.0
        %1395 = vmatmul.mubr.f32.gmra.mrb[0].mxu0 %v1219
        %v1396 = vpop.f32.mrb[0].mxu0
        %v1397 = vadd.f32 0.0, %v1396
        %v1398 = vpop.f32.mrb[0].mxu0
        %1399 = vmatprep.mubr.f32.mxu0 0.0
        %1400 = vmatmul.mubr.f32.gmra.mrb[0].mxu0 %v1221
        %v1401 = vpop.f32.mrb[0].mxu0
        %v1402 = vadd.f32 0.0, %v1401
        %v1403 = vpop.f32.mrb[0].mxu0
        %1404 = vmatprep.mubr.f32.mxu0 0.0
        %1405 = vmatmul.mubr.f32.gmra.mrb[0].mxu0 %v1223
        %v1406 = vpop.f32.mrb[0].mxu0
        %v1407 = vadd.f32 0.0, %v1406
        %v1408 = vpop.f32.mrb[0].mxu0
        %1409 = vmatprep.mubr.f32.mxu0 0.0
        %1410 = vmatmul.mubr.f32.gmra.mrb[0].mxu0 %v1225
        %v1411 = vpop.f32.mrb[0].mxu0
        %v1412 = vadd.f32 0.0, %v1411
        %v1413 = vpop.f32.mrb[0].mxu0
        %1414 = vmatprep.mubr.f32.mxu0 0.0
        %1415 = vmatmul.mubr.f32.gmra.mrb[0].mxu0 %v1227
        %v1416 = vpop.f32.mrb[0].mxu0
        %v1417 = vadd.f32 0.0, %v1416
        %v1418 = vpop.f32.mrb[0].mxu0
        %1419 = vmatprep.mubr.f32.mxu0 0.0
        %1420 = vmatmul.mubr.f32.gmra.mrb[0].mxu0 %v1229
        %v1421 = vpop.f32.mrb[0].mxu0
        %v1422 = vadd.f32 0.0, %v1421
        %v1423 = vpop.f32.mrb[0].mxu0
        %1424 = vmatprep.mubr.f32.mxu0 0.0
        %1425 = vmatmul.mubr.f32.gmra.mrb[0].mxu0 %v1231
        %v1426 = vpop.f32.mrb[0].mxu0
        %v1427 = vadd.f32 0.0, %v1426
        %v1428 = vpop.f32.mrb[0].mxu0
        %1429 = vmatprep.mubr.f32.mxu0 0.0
        %1430 = vmatmul.mubr.f32.gmra.mrb[0].mxu0 %v1233
        %v1431 = vpop.f32.mrb[0].mxu0
        %v1432 = vadd.f32 0.0, %v1431
        %v1433 = vpop.f32.mrb[0].mxu0
        %1434 = vmatprep.mubr.f32.mxu0 0.0
        %1435 = vmatmul.mubr.f32.gmra.mrb[0].mxu0 %v1235
        %v1436 = vpop.f32.mrb[0].mxu0
        %v1437 = vadd.f32 0.0, %v1436
        %v1438 = vpop.f32.mrb[0].mxu0
        %1439 = vmatprep.mubr.f32.mxu0 0.0
        %1440 = vmatmul.mubr.f32.gmra.mrb[0].mxu0 %v1237
        %v1441 = vpop.f32.mrb[0].mxu0
        %v1442 = vadd.f32 0.0, %v1441
        %v1443 = vpop.f32.mrb[0].mxu0
        %1444 = vmatprep.mubr.f32.mxu0 0.0
        %1445 = vmatmul.mubr.f32.gmra.mrb[0].mxu0 %v1239
        %v1446 = vpop.f32.mrb[0].mxu0
        %v1447 = vadd.f32 0.0, %v1446
        %v1448 = vpop.f32.mrb[0].mxu0
        %1449 = vmatprep.mubr.f32.mxu0 0.0
        %1450 = vmatmul.mubr.f32.gmra.mrb[0].mxu0 %v1241
        %v1451 = vpop.f32.mrb[0].mxu0
        %v1452 = vadd.f32 0.0, %v1451
        %v1453 = vpop.f32.mrb[0].mxu0
        %1454 = vmatprep.mubr.f32.mxu0 0.0
        %1455 = vmatmul.mubr.f32.gmra.mrb[0].mxu0 %v1243
        %v1456 = vpop.f32.mrb[0].mxu0
        %v1457 = vadd.f32 0.0, %v1456
        %v1458 = vpop.f32.mrb[0].mxu0
        %1459 = vmatprep.mubr.f32.mxu0 0.0
        %1460 = vmatmul.mubr.f32.gmra.mrb[0].mxu0 %v1245
        %v1461 = vpop.f32.mrb[0].mxu0
        %v1462 = vadd.f32 0.0, %v1461
        %v1463 = vpop.f32.mrb[0].mxu0
        %1464 = vmatprep.mubr.f32.mxu0 0.0
        %1465 = vmatmul.mubr.f32.gmra.mrb[0].mxu0 %v1247
        %v1466 = vpop.f32.mrb[0].mxu0
        %v1467 = vadd.f32 0.0, %v1466
        %v1468 = vpop.f32.mrb[0].mxu0
        %1469 = vmatprep.mubr.f32.mxu0 0.0
        %1470 = vmatmul.mubr.f32.gmra.mrb[0].mxu0 %v1249
        %v1471 = vpop.f32.mrb[0].mxu0
        %v1472 = vadd.f32 0.0, %v1471
        %v1473 = vpop.f32.mrb[0].mxu0
        %1474 = vdwg.mxu0
        %v1475 = vsel %vm257, 0.0, %v1317
        %v1476 = vsel %vm257, 0.0, %v1322
        %v1477 = vsel %vm257, 0.0, %v1327
        %v1478 = vsel %vm257, 0.0, %v1332
        %v1479 = vsel %vm257, 0.0, %v1337
        %v1480 = vsel %vm257, 0.0, %v1342
        %v1481 = vsel %vm257, 0.0, %v1347
        %v1482 = vsel %vm257, 0.0, %v1352
        %v1483 = vsel %vm257, 0.0, %v1357
        %v1484 = vsel %vm257, 0.0, %v1362
        %v1485 = vsel %vm257, 0.0, %v1367
        %v1486 = vsel %vm257, 0.0, %v1372
        %v1487 = vsel %vm257, 0.0, %v1377
        %v1488 = vsel %vm257, 0.0, %v1382
        %v1489 = vsel %vm257, 0.0, %v1387
        %v1490 = vsel %vm257, 0.0, %v1392
        %v1491 = vsel %vm257, 0.0, %v1397
        %v1492 = vsel %vm257, 0.0, %v1402
        %v1493 = vsel %vm257, 0.0, %v1407
        %v1494 = vsel %vm257, 0.0, %v1412
        %v1495 = vsel %vm257, 0.0, %v1417
        %v1496 = vsel %vm257, 0.0, %v1422
        %v1497 = vsel %vm257, 0.0, %v1427
        %v1498 = vsel %vm257, 0.0, %v1432
        %v1499 = vsel %vm257, 0.0, %v1437
        %v1500 = vsel %vm257, 0.0, %v1442
        %v1501 = vsel %vm257, 0.0, %v1447
        %v1502 = vsel %vm257, 0.0, %v1452
        %v1503 = vsel %vm257, 0.0, %v1457
        %v1504 = vsel %vm257, 0.0, %v1462
        %v1505 = vsel %vm257, 0.0, %v1467
        %v1506 = vsel %vm257, 0.0, %v1472
        %v1507 = vmul.f32 %v1475, %v1475
        %v1508 = vmul.f32 %v1476, %v1476
        %v1509 = vmul.f32 %v1477, %v1477
        %v1510 = vmul.f32 %v1478, %v1478
        %v1511 = vmul.f32 %v1479, %v1479
        %v1512 = vmul.f32 %v1480, %v1480
        %v1513 = vmul.f32 %v1481, %v1481
        %v1514 = vmul.f32 %v1482, %v1482
        %v1515 = vmul.f32 %v1483, %v1483
        %v1516 = vmul.f32 %v1484, %v1484
        %v1517 = vmul.f32 %v1485, %v1485
        %v1518 = vmul.f32 %v1486, %v1486
        %v1519 = vmul.f32 %v1487, %v1487
        %v1520 = vmul.f32 %v1488, %v1488
        %v1521 = vmul.f32 %v1489, %v1489
        %v1522 = vmul.f32 %v1490, %v1490
        %v1523 = vmul.f32 %v1491, %v1491
        %v1524 = vmul.f32 %v1492, %v1492
        %v1525 = vmul.f32 %v1493, %v1493
        %v1526 = vmul.f32 %v1494, %v1494
        %v1527 = vmul.f32 %v1495, %v1495
        %v1528 = vmul.f32 %v1496, %v1496
        %v1529 = vmul.f32 %v1497, %v1497
        %v1530 = vmul.f32 %v1498, %v1498
        %v1531 = vmul.f32 %v1499, %v1499
        %v1532 = vmul.f32 %v1500, %v1500
        %v1533 = vmul.f32 %v1501, %v1501
        %v1534 = vmul.f32 %v1502, %v1502
        %v1535 = vmul.f32 %v1503, %v1503
        %v1536 = vmul.f32 %v1504, %v1504
        %v1537 = vmul.f32 %v1505, %v1505
        %v1538 = vmul.f32 %v1506, %v1506
        %v1539 = vsel %vm257, 0.0, %v1507
        %v1540 = vsel %vm257, 0.0, %v1508
        %v1541 = vsel %vm257, 0.0, %v1509
        %v1542 = vsel %vm257, 0.0, %v1510
        %v1543 = vsel %vm257, 0.0, %v1511
        %v1544 = vsel %vm257, 0.0, %v1512
        %v1545 = vsel %vm257, 0.0, %v1513
        %v1546 = vsel %vm257, 0.0, %v1514
        %v1547 = vsel %vm257, 0.0, %v1515
        %v1548 = vsel %vm257, 0.0, %v1516
        %v1549 = vsel %vm257, 0.0, %v1517
        %v1550 = vsel %vm257, 0.0, %v1518
        %v1551 = vsel %vm257, 0.0, %v1519
        %v1552 = vsel %vm257, 0.0, %v1520
        %v1553 = vsel %vm257, 0.0, %v1521
        %v1554 = vsel %vm257, 0.0, %v1522
        %v1555 = vsel %vm257, 0.0, %v1523
        %v1556 = vsel %vm257, 0.0, %v1524
        %v1557 = vsel %vm257, 0.0, %v1525
        %v1558 = vsel %vm257, 0.0, %v1526
        %v1559 = vsel %vm257, 0.0, %v1527
        %v1560 = vsel %vm257, 0.0, %v1528
        %v1561 = vsel %vm257, 0.0, %v1529
        %v1562 = vsel %vm257, 0.0, %v1530
        %v1563 = vsel %vm257, 0.0, %v1531
        %v1564 = vsel %vm257, 0.0, %v1532
        %v1565 = vsel %vm257, 0.0, %v1533
        %v1566 = vsel %vm257, 0.0, %v1534
        %v1567 = vsel %vm257, 0.0, %v1535
        %v1568 = vsel %vm257, 0.0, %v1536
        %v1569 = vsel %vm257, 0.0, %v1537
        %v1570 = vsel %vm257, 0.0, %v1538
        %1571 = vadd.xlane.f32.xlu0 %v1539
        %v1572 = vpop.xlane.xlu0 %1571
        %1573 = vadd.xlane.f32.xlu0 %v1540
        %v1574 = vpop.xlane.xlu0 %1573
        %1575 = vadd.xlane.f32.xlu0 %v1541
        %v1576 = vpop.xlane.xlu0 %1575
        %1577 = vadd.xlane.f32.xlu0 %v1542
        %v1578 = vpop.xlane.xlu0 %1577
        %1579 = vadd.xlane.f32.xlu0 %v1543
        %v1580 = vpop.xlane.xlu0 %1579
        %1581 = vadd.xlane.f32.xlu0 %v1544
        %v1582 = vpop.xlane.xlu0 %1581
        %1583 = vadd.xlane.f32.xlu0 %v1545
        %v1584 = vpop.xlane.xlu0 %1583
        %1585 = vadd.xlane.f32.xlu0 %v1546
        %v1586 = vpop.xlane.xlu0 %1585
        %1587 = vadd.xlane.f32.xlu0 %v1547
        %v1588 = vpop.xlane.xlu0 %1587
        %1589 = vadd.xlane.f32.xlu0 %v1548
        %v1590 = vpop.xlane.xlu0 %1589
        %1591 = vadd.xlane.f32.xlu0 %v1549
        %v1592 = vpop.xlane.xlu0 %1591
        %1593 = vadd.xlane.f32.xlu0 %v1550
        %v1594 = vpop.xlane.xlu0 %1593
        %1595 = vadd.xlane.f32.xlu0 %v1551
        %v1596 = vpop.xlane.xlu0 %1595
        %1597 = vadd.xlane.f32.xlu0 %v1552
        %v1598 = vpop.xlane.xlu0 %1597
        %1599 = vadd.xlane.f32.xlu0 %v1553
        %v1600 = vpop.xlane.xlu0 %1599
        %1601 = vadd.xlane.f32.xlu0 %v1554
        %v1602 = vpop.xlane.xlu0 %1601
        %1603 = vadd.xlane.f32.xlu0 %v1555
        %v1604 = vpop.xlane.xlu0 %1603
        %1605 = vadd.xlane.f32.xlu0 %v1556
        %v1606 = vpop.xlane.xlu0 %1605
        %1607 = vadd.xlane.f32.xlu0 %v1557
        %v1608 = vpop.xlane.xlu0 %1607
        %1609 = vadd.xlane.f32.xlu0 %v1558
        %v1610 = vpop.xlane.xlu0 %1609
        %1611 = vadd.xlane.f32.xlu0 %v1559
        %v1612 = vpop.xlane.xlu0 %1611
        %1613 = vadd.xlane.f32.xlu0 %v1560
        %v1614 = vpop.xlane.xlu0 %1613
        %1615 = vadd.xlane.f32.xlu0 %v1561
        %v1616 = vpop.xlane.xlu0 %1615
        %1617 = vadd.xlane.f32.xlu0 %v1562
        %v1618 = vpop.xlane.xlu0 %1617
        %1619 = vadd.xlane.f32.xlu0 %v1563
        %v1620 = vpop.xlane.xlu0 %1619
        %1621 = vadd.xlane.f32.xlu0 %v1564
        %v1622 = vpop.xlane.xlu0 %1621
        %1623 = vadd.xlane.f32.xlu0 %v1565
        %v1624 = vpop.xlane.xlu0 %1623
        %1625 = vadd.xlane.f32.xlu0 %v1566
        %v1626 = vpop.xlane.xlu0 %1625
        %1627 = vadd.xlane.f32.xlu0 %v1567
        %v1628 = vpop.xlane.xlu0 %1627
        %1629 = vadd.xlane.f32.xlu0 %v1568
        %v1630 = vpop.xlane.xlu0 %1629
        %1631 = vadd.xlane.f32.xlu0 %v1569
        %v1632 = vpop.xlane.xlu0 %1631
        %1633 = vadd.xlane.f32.xlu0 %v1570
        %v1634 = vpop.xlane.xlu0 %1633
        %v1635 = vrsqrt.pop %v1572
        %v1636 = vmul.f32 %v1572, %v1635
        %vm1637 = vcmp.eq.f32.partialorder %v1572, inf
        %v1638 = vsel %vm1637, %v1572, %v1636
        %vm1639 = vcmp.eq.f32.partialorder %v1572, 0.0
        %v1640 = vand.u32 %v1572, 2147483648
        %v1641 = vsel %vm1639, %v1640, %v1638
        %v1642 = vrsqrt.pop %v1574
        %v1643 = vmul.f32 %v1574, %v1642
        %vm1644 = vcmp.eq.f32.partialorder %v1574, inf
        %v1645 = vsel %vm1644, %v1574, %v1643
        %vm1646 = vcmp.eq.f32.partialorder %v1574, 0.0
        %v1647 = vand.u32 %v1574, 2147483648
        %v1648 = vsel %vm1646, %v1647, %v1645
        %v1649 = vrsqrt.pop %v1576
        %v1650 = vmul.f32 %v1576, %v1649
        %vm1651 = vcmp.eq.f32.partialorder %v1576, inf
        %v1652 = vsel %vm1651, %v1576, %v1650
        %vm1653 = vcmp.eq.f32.partialorder %v1576, 0.0
        %v1654 = vand.u32 %v1576, 2147483648
        %v1655 = vsel %vm1653, %v1654, %v1652
        %v1656 = vrsqrt.pop %v1578
        %v1657 = vmul.f32 %v1578, %v1656
        %vm1658 = vcmp.eq.f32.partialorder %v1578, inf
        %v1659 = vsel %vm1658, %v1578, %v1657
        %vm1660 = vcmp.eq.f32.partialorder %v1578, 0.0
        %v1661 = vand.u32 %v1578, 2147483648
        %v1662 = vsel %vm1660, %v1661, %v1659
        %v1663 = vrsqrt.pop %v1580
        %v1664 = vmul.f32 %v1580, %v1663
        %vm1665 = vcmp.eq.f32.partialorder %v1580, inf
        %v1666 = vsel %vm1665, %v1580, %v1664
        %vm1667 = vcmp.eq.f32.partialorder %v1580, 0.0
        %v1668 = vand.u32 %v1580, 2147483648
        %v1669 = vsel %vm1667, %v1668, %v1666
        %v1670 = vrsqrt.pop %v1582
        %v1671 = vmul.f32 %v1582, %v1670
        %vm1672 = vcmp.eq.f32.partialorder %v1582, inf
        %v1673 = vsel %vm1672, %v1582, %v1671
        %vm1674 = vcmp.eq.f32.partialorder %v1582, 0.0
        %v1675 = vand.u32 %v1582, 2147483648
        %v1676 = vsel %vm1674, %v1675, %v1673
        %v1677 = vrsqrt.pop %v1584
        %v1678 = vmul.f32 %v1584, %v1677
        %vm1679 = vcmp.eq.f32.partialorder %v1584, inf
        %v1680 = vsel %vm1679, %v1584, %v1678
        %vm1681 = vcmp.eq.f32.partialorder %v1584, 0.0
        %v1682 = vand.u32 %v1584, 2147483648
        %v1683 = vsel %vm1681, %v1682, %v1680
        %v1684 = vrsqrt.pop %v1586
        %v1685 = vmul.f32 %v1586, %v1684
        %vm1686 = vcmp.eq.f32.partialorder %v1586, inf
        %v1687 = vsel %vm1686, %v1586, %v1685
        %vm1688 = vcmp.eq.f32.partialorder %v1586, 0.0
        %v1689 = vand.u32 %v1586, 2147483648
        %v1690 = vsel %vm1688, %v1689, %v1687
        %v1691 = vrsqrt.pop %v1588
        %v1692 = vmul.f32 %v1588, %v1691
        %vm1693 = vcmp.eq.f32.partialorder %v1588, inf
        %v1694 = vsel %vm1693, %v1588, %v1692
        %vm1695 = vcmp.eq.f32.partialorder %v1588, 0.0
        %v1696 = vand.u32 %v1588, 2147483648
        %v1697 = vsel %vm1695, %v1696, %v1694
        %v1698 = vrsqrt.pop %v1590
        %v1699 = vmul.f32 %v1590, %v1698
        %vm1700 = vcmp.eq.f32.partialorder %v1590, inf
        %v1701 = vsel %vm1700, %v1590, %v1699
        %vm1702 = vcmp.eq.f32.partialorder %v1590, 0.0
        %v1703 = vand.u32 %v1590, 2147483648
        %v1704 = vsel %vm1702, %v1703, %v1701
        %v1705 = vrsqrt.pop %v1592
        %v1706 = vmul.f32 %v1592, %v1705
        %vm1707 = vcmp.eq.f32.partialorder %v1592, inf
        %v1708 = vsel %vm1707, %v1592, %v1706
        %vm1709 = vcmp.eq.f32.partialorder %v1592, 0.0
        %v1710 = vand.u32 %v1592, 2147483648
        %v1711 = vsel %vm1709, %v1710, %v1708
        %v1712 = vrsqrt.pop %v1594
        %v1713 = vmul.f32 %v1594, %v1712
        %vm1714 = vcmp.eq.f32.partialorder %v1594, inf
        %v1715 = vsel %vm1714, %v1594, %v1713
        %vm1716 = vcmp.eq.f32.partialorder %v1594, 0.0
        %v1717 = vand.u32 %v1594, 2147483648
        %v1718 = vsel %vm1716, %v1717, %v1715
        %v1719 = vrsqrt.pop %v1596
        %v1720 = vmul.f32 %v1596, %v1719
        %vm1721 = vcmp.eq.f32.partialorder %v1596, inf
        %v1722 = vsel %vm1721, %v1596, %v1720
        %vm1723 = vcmp.eq.f32.partialorder %v1596, 0.0
        %v1724 = vand.u32 %v1596, 2147483648
        %v1725 = vsel %vm1723, %v1724, %v1722
        %v1726 = vrsqrt.pop %v1598
        %v1727 = vmul.f32 %v1598, %v1726
        %vm1728 = vcmp.eq.f32.partialorder %v1598, inf
        %v1729 = vsel %vm1728, %v1598, %v1727
        %vm1730 = vcmp.eq.f32.partialorder %v1598, 0.0
        %v1731 = vand.u32 %v1598, 2147483648
        %v1732 = vsel %vm1730, %v1731, %v1729
        %v1733 = vrsqrt.pop %v1600
        %v1734 = vmul.f32 %v1600, %v1733
        %vm1735 = vcmp.eq.f32.partialorder %v1600, inf
        %v1736 = vsel %vm1735, %v1600, %v1734
        %vm1737 = vcmp.eq.f32.partialorder %v1600, 0.0
        %v1738 = vand.u32 %v1600, 2147483648
        %v1739 = vsel %vm1737, %v1738, %v1736
        %v1740 = vrsqrt.pop %v1602
        %v1741 = vmul.f32 %v1602, %v1740
        %vm1742 = vcmp.eq.f32.partialorder %v1602, inf
        %v1743 = vsel %vm1742, %v1602, %v1741
        %vm1744 = vcmp.eq.f32.partialorder %v1602, 0.0
        %v1745 = vand.u32 %v1602, 2147483648
        %v1746 = vsel %vm1744, %v1745, %v1743
        %v1747 = vrsqrt.pop %v1604
        %v1748 = vmul.f32 %v1604, %v1747
        %vm1749 = vcmp.eq.f32.partialorder %v1604, inf
        %v1750 = vsel %vm1749, %v1604, %v1748
        %vm1751 = vcmp.eq.f32.partialorder %v1604, 0.0
        %v1752 = vand.u32 %v1604, 2147483648
        %v1753 = vsel %vm1751, %v1752, %v1750
        %v1754 = vrsqrt.pop %v1606
        %v1755 = vmul.f32 %v1606, %v1754
        %vm1756 = vcmp.eq.f32.partialorder %v1606, inf
        %v1757 = vsel %vm1756, %v1606, %v1755
        %vm1758 = vcmp.eq.f32.partialorder %v1606, 0.0
        %v1759 = vand.u32 %v1606, 2147483648
        %v1760 = vsel %vm1758, %v1759, %v1757
        %v1761 = vrsqrt.pop %v1608
        %v1762 = vmul.f32 %v1608, %v1761
        %vm1763 = vcmp.eq.f32.partialorder %v1608, inf
        %v1764 = vsel %vm1763, %v1608, %v1762
        %vm1765 = vcmp.eq.f32.partialorder %v1608, 0.0
        %v1766 = vand.u32 %v1608, 2147483648
        %v1767 = vsel %vm1765, %v1766, %v1764
        %v1768 = vrsqrt.pop %v1610
        %v1769 = vmul.f32 %v1610, %v1768
        %vm1770 = vcmp.eq.f32.partialorder %v1610, inf
        %v1771 = vsel %vm1770, %v1610, %v1769
        %vm1772 = vcmp.eq.f32.partialorder %v1610, 0.0
        %v1773 = vand.u32 %v1610, 2147483648
        %v1774 = vsel %vm1772, %v1773, %v1771
        %v1775 = vrsqrt.pop %v1612
        %v1776 = vmul.f32 %v1612, %v1775
        %vm1777 = vcmp.eq.f32.partialorder %v1612, inf
        %v1778 = vsel %vm1777, %v1612, %v1776
        %vm1779 = vcmp.eq.f32.partialorder %v1612, 0.0
        %v1780 = vand.u32 %v1612, 2147483648
        %v1781 = vsel %vm1779, %v1780, %v1778
        %v1782 = vrsqrt.pop %v1614
        %v1783 = vmul.f32 %v1614, %v1782
        %vm1784 = vcmp.eq.f32.partialorder %v1614, inf
        %v1785 = vsel %vm1784, %v1614, %v1783
        %vm1786 = vcmp.eq.f32.partialorder %v1614, 0.0
        %v1787 = vand.u32 %v1614, 2147483648
        %v1788 = vsel %vm1786, %v1787, %v1785
        %v1789 = vrsqrt.pop %v1616
        %v1790 = vmul.f32 %v1616, %v1789
        %vm1791 = vcmp.eq.f32.partialorder %v1616, inf
        %v1792 = vsel %vm1791, %v1616, %v1790
        %vm1793 = vcmp.eq.f32.partialorder %v1616, 0.0
        %v1794 = vand.u32 %v1616, 2147483648
        %v1795 = vsel %vm1793, %v1794, %v1792
        %v1796 = vrsqrt.pop %v1618
        %v1797 = vmul.f32 %v1618, %v1796
        %vm1798 = vcmp.eq.f32.partialorder %v1618, inf
        %v1799 = vsel %vm1798, %v1618, %v1797
        %vm1800 = vcmp.eq.f32.partialorder %v1618, 0.0
        %v1801 = vand.u32 %v1618, 2147483648
        %v1802 = vsel %vm1800, %v1801, %v1799
        %v1803 = vrsqrt.pop %v1620
        %v1804 = vmul.f32 %v1620, %v1803
        %vm1805 = vcmp.eq.f32.partialorder %v1620, inf
        %v1806 = vsel %vm1805, %v1620, %v1804
        %vm1807 = vcmp.eq.f32.partialorder %v1620, 0.0
        %v1808 = vand.u32 %v1620, 2147483648
        %v1809 = vsel %vm1807, %v1808, %v1806
        %v1810 = vrsqrt.pop %v1622
        %v1811 = vmul.f32 %v1622, %v1810
        %vm1812 = vcmp.eq.f32.partialorder %v1622, inf
        %v1813 = vsel %vm1812, %v1622, %v1811
        %vm1814 = vcmp.eq.f32.partialorder %v1622, 0.0
        %v1815 = vand.u32 %v1622, 2147483648
        %v1816 = vsel %vm1814, %v1815, %v1813
        %v1817 = vrsqrt.pop %v1624
        %v1818 = vmul.f32 %v1624, %v1817
        %vm1819 = vcmp.eq.f32.partialorder %v1624, inf
        %v1820 = vsel %vm1819, %v1624, %v1818
        %vm1821 = vcmp.eq.f32.partialorder %v1624, 0.0
        %v1822 = vand.u32 %v1624, 2147483648
        %v1823 = vsel %vm1821, %v1822, %v1820
        %v1824 = vrsqrt.pop %v1626
        %v1825 = vmul.f32 %v1626, %v1824
        %vm1826 = vcmp.eq.f32.partialorder %v1626, inf
        %v1827 = vsel %vm1826, %v1626, %v1825
        %vm1828 = vcmp.eq.f32.partialorder %v1626, 0.0
        %v1829 = vand.u32 %v1626, 2147483648
        %v1830 = vsel %vm1828, %v1829, %v1827
        %v1831 = vrsqrt.pop %v1628
        %v1832 = vmul.f32 %v1628, %v1831
        %vm1833 = vcmp.eq.f32.partialorder %v1628, inf
        %v1834 = vsel %vm1833, %v1628, %v1832
        %vm1835 = vcmp.eq.f32.partialorder %v1628, 0.0
        %v1836 = vand.u32 %v1628, 2147483648
        %v1837 = vsel %vm1835, %v1836, %v1834
        %v1838 = vrsqrt.pop %v1630
        %v1839 = vmul.f32 %v1630, %v1838
        %vm1840 = vcmp.eq.f32.partialorder %v1630, inf
        %v1841 = vsel %vm1840, %v1630, %v1839
        %vm1842 = vcmp.eq.f32.partialorder %v1630, 0.0
        %v1843 = vand.u32 %v1630, 2147483648
        %v1844 = vsel %vm1842, %v1843, %v1841
        %v1845 = vrsqrt.pop %v1632
        %v1846 = vmul.f32 %v1632, %v1845
        %vm1847 = vcmp.eq.f32.partialorder %v1632, inf
        %v1848 = vsel %vm1847, %v1632, %v1846
        %vm1849 = vcmp.eq.f32.partialorder %v1632, 0.0
        %v1850 = vand.u32 %v1632, 2147483648
        %v1851 = vsel %vm1849, %v1850, %v1848
        %v1852 = vrsqrt.pop %v1634
        %v1853 = vmul.f32 %v1634, %v1852
        %vm1854 = vcmp.eq.f32.partialorder %v1634, inf
        %v1855 = vsel %vm1854, %v1634, %v1853
        %vm1856 = vcmp.eq.f32.partialorder %v1634, 0.0
        %v1857 = vand.u32 %v1634, 2147483648
        %v1858 = vsel %vm1856, %v1857, %v1855
        %v1859 = vmul.f32 %v1641, 1.442695
        %v1860 = vpow.pop %v1859
        %v1861 = vmul.f32 %v1648, 1.442695
        %v1862 = vpow.pop %v1861
        %v1863 = vmul.f32 %v1655, 1.442695
        %v1864 = vpow.pop %v1863
        %v1865 = vmul.f32 %v1662, 1.442695
        %v1866 = vpow.pop %v1865
        %v1867 = vmul.f32 %v1669, 1.442695
        %v1868 = vpow.pop %v1867
        %v1869 = vmul.f32 %v1676, 1.442695
        %v1870 = vpow.pop %v1869
        %v1871 = vmul.f32 %v1683, 1.442695
        %v1872 = vpow.pop %v1871
        %v1873 = vmul.f32 %v1690, 1.442695
        %v1874 = vpow.pop %v1873
        %v1875 = vmul.f32 %v1697, 1.442695
        %v1876 = vpow.pop %v1875
        %v1877 = vmul.f32 %v1704, 1.442695
        %v1878 = vpow.pop %v1877
        %v1879 = vmul.f32 %v1711, 1.442695
        %v1880 = vpow.pop %v1879
        %v1881 = vmul.f32 %v1718, 1.442695
        %v1882 = vpow.pop %v1881
        %v1883 = vmul.f32 %v1725, 1.442695
        %v1884 = vpow.pop %v1883
        %v1885 = vmul.f32 %v1732, 1.442695
        %v1886 = vpow.pop %v1885
        %v1887 = vmul.f32 %v1739, 1.442695
        %v1888 = vpow.pop %v1887
        %v1889 = vmul.f32 %v1746, 1.442695
        %v1890 = vpow.pop %v1889
        %v1891 = vmul.f32 %v1753, 1.442695
        %v1892 = vpow.pop %v1891
        %v1893 = vmul.f32 %v1760, 1.442695
        %v1894 = vpow.pop %v1893
        %v1895 = vmul.f32 %v1767, 1.442695
        %v1896 = vpow.pop %v1895
        %v1897 = vmul.f32 %v1774, 1.442695
        %v1898 = vpow.pop %v1897
        %v1899 = vmul.f32 %v1781, 1.442695
        %v1900 = vpow.pop %v1899
        %v1901 = vmul.f32 %v1788, 1.442695
        %v1902 = vpow.pop %v1901
        %v1903 = vmul.f32 %v1795, 1.442695
        %v1904 = vpow.pop %v1903
        %v1905 = vmul.f32 %v1802, 1.442695
        %v1906 = vpow.pop %v1905
        %v1907 = vmul.f32 %v1809, 1.442695
        %v1908 = vpow.pop %v1907
        %v1909 = vmul.f32 %v1816, 1.442695
        %v1910 = vpow.pop %v1909
        %v1911 = vmul.f32 %v1823, 1.442695
        %v1912 = vpow.pop %v1911
        %v1913 = vmul.f32 %v1830, 1.442695
        %v1914 = vpow.pop %v1913
        %v1915 = vmul.f32 %v1837, 1.442695
        %v1916 = vpow.pop %v1915
        %v1917 = vmul.f32 %v1844, 1.442695
        %v1918 = vpow.pop %v1917
        %v1919 = vmul.f32 %v1851, 1.442695
        %v1920 = vpow.pop %v1919
        %v1921 = vmul.f32 %v1858, 1.442695
        %v1922 = vpow.pop %v1921
        %v1923 = vrcp.pop %v1860
        %v1924 = vrcp.pop %v1862
        %v1925 = vrcp.pop %v1864
        %v1926 = vrcp.pop %v1866
        %v1927 = vrcp.pop %v1868
        %v1928 = vrcp.pop %v1870
        %v1929 = vrcp.pop %v1872
        %v1930 = vrcp.pop %v1874
        %v1931 = vrcp.pop %v1876
        %v1932 = vrcp.pop %v1878
        %v1933 = vrcp.pop %v1880
        %v1934 = vrcp.pop %v1882
        %v1935 = vrcp.pop %v1884
        %v1936 = vrcp.pop %v1886
        %v1937 = vrcp.pop %v1888
        %v1938 = vrcp.pop %v1890
        %v1939 = vrcp.pop %v1892
        %v1940 = vrcp.pop %v1894
        %v1941 = vrcp.pop %v1896
        %v1942 = vrcp.pop %v1898
        %v1943 = vrcp.pop %v1900
        %v1944 = vrcp.pop %v1902
        %v1945 = vrcp.pop %v1904
        %v1946 = vrcp.pop %v1906
        %v1947 = vrcp.pop %v1908
        %v1948 = vrcp.pop %v1910
        %v1949 = vrcp.pop %v1912
        %v1950 = vrcp.pop %v1914
        %v1951 = vrcp.pop %v1916
        %v1952 = vrcp.pop %v1918
        %v1953 = vrcp.pop %v1920
        %v1954 = vrcp.pop %v1922
        %v1955 = vadd.f32 %v1860, %v1923
        %v1956 = vadd.f32 %v1862, %v1924
        %v1957 = vadd.f32 %v1864, %v1925
        %v1958 = vadd.f32 %v1866, %v1926
        %v1959 = vadd.f32 %v1868, %v1927
        %v1960 = vadd.f32 %v1870, %v1928
        %v1961 = vadd.f32 %v1872, %v1929
        %v1962 = vadd.f32 %v1874, %v1930
        %v1963 = vadd.f32 %v1876, %v1931
        %v1964 = vadd.f32 %v1878, %v1932
        %v1965 = vadd.f32 %v1880, %v1933
        %v1966 = vadd.f32 %v1882, %v1934
        %v1967 = vadd.f32 %v1884, %v1935
        %v1968 = vadd.f32 %v1886, %v1936
        %v1969 = vadd.f32 %v1888, %v1937
        %v1970 = vadd.f32 %v1890, %v1938
        %v1971 = vadd.f32 %v1892, %v1939
        %v1972 = vadd.f32 %v1894, %v1940
        %v1973 = vadd.f32 %v1896, %v1941
        %v1974 = vadd.f32 %v1898, %v1942
        %v1975 = vadd.f32 %v1900, %v1943
        %v1976 = vadd.f32 %v1902, %v1944
        %v1977 = vadd.f32 %v1904, %v1945
        %v1978 = vadd.f32 %v1906, %v1946
        %v1979 = vadd.f32 %v1908, %v1947
        %v1980 = vadd.f32 %v1910, %v1948
        %v1981 = vadd.f32 %v1912, %v1949
        %v1982 = vadd.f32 %v1914, %v1950
        %v1983 = vadd.f32 %v1916, %v1951
        %v1984 = vadd.f32 %v1918, %v1952
        %v1985 = vadd.f32 %v1920, %v1953
        %v1986 = vadd.f32 %v1922, %v1954
        %v1987 = vmul.f32 %v1955, 0.5
        %v1988 = vmul.f32 %v1956, 0.5
        %v1989 = vmul.f32 %v1957, 0.5
        %v1990 = vmul.f32 %v1958, 0.5
        %v1991 = vmul.f32 %v1959, 0.5
        %v1992 = vmul.f32 %v1960, 0.5
        %v1993 = vmul.f32 %v1961, 0.5
        %v1994 = vmul.f32 %v1962, 0.5
        %v1995 = vmul.f32 %v1963, 0.5
        %v1996 = vmul.f32 %v1964, 0.5
        %v1997 = vmul.f32 %v1965, 0.5
        %v1998 = vmul.f32 %v1966, 0.5
        %v1999 = vmul.f32 %v1967, 0.5
        %v2000 = vmul.f32 %v1968, 0.5
        %v2001 = vmul.f32 %v1969, 0.5
        %v2002 = vmul.f32 %v1970, 0.5
        %v2003 = vmul.f32 %v1971, 0.5
        %v2004 = vmul.f32 %v1972, 0.5
        %v2005 = vmul.f32 %v1973, 0.5
        %v2006 = vmul.f32 %v1974, 0.5
        %v2007 = vmul.f32 %v1975, 0.5
        %v2008 = vmul.f32 %v1976, 0.5
        %v2009 = vmul.f32 %v1977, 0.5
        %v2010 = vmul.f32 %v1978, 0.5
        %v2011 = vmul.f32 %v1979, 0.5
        %v2012 = vmul.f32 %v1980, 0.5
        %v2013 = vmul.f32 %v1981, 0.5
        %v2014 = vmul.f32 %v1982, 0.5
        %v2015 = vmul.f32 %v1983, 0.5
        %v2016 = vmul.f32 %v1984, 0.5
        %v2017 = vmul.f32 %v1985, 0.5
        %v2018 = vmul.f32 %v1986, 0.5
        %v2019 = vsub.f32 %v1860, %v1923
        %v2020 = vsub.f32 %v1862, %v1924
        %v2021 = vsub.f32 %v1864, %v1925
        %v2022 = vsub.f32 %v1866, %v1926
        %v2023 = vsub.f32 %v1868, %v1927
        %v2024 = vsub.f32 %v1870, %v1928
        %v2025 = vsub.f32 %v1872, %v1929
        %v2026 = vsub.f32 %v1874, %v1930
        %v2027 = vsub.f32 %v1876, %v1931
        %v2028 = vsub.f32 %v1878, %v1932
        %v2029 = vsub.f32 %v1880, %v1933
        %v2030 = vsub.f32 %v1882, %v1934
        %v2031 = vsub.f32 %v1884, %v1935
        %v2032 = vsub.f32 %v1886, %v1936
        %v2033 = vsub.f32 %v1888, %v1937
        %v2034 = vsub.f32 %v1890, %v1938
        %v2035 = vsub.f32 %v1892, %v1939
        %v2036 = vsub.f32 %v1894, %v1940
        %v2037 = vsub.f32 %v1896, %v1941
        %v2038 = vsub.f32 %v1898, %v1942
        %v2039 = vsub.f32 %v1900, %v1943
        %v2040 = vsub.f32 %v1902, %v1944
        %v2041 = vsub.f32 %v1904, %v1945
        %v2042 = vsub.f32 %v1906, %v1946
        %v2043 = vsub.f32 %v1908, %v1947
        %v2044 = vsub.f32 %v1910, %v1948
        %v2045 = vsub.f32 %v1912, %v1949
        %v2046 = vsub.f32 %v1914, %v1950
        %v2047 = vsub.f32 %v1916, %v1951
        %v2048 = vsub.f32 %v1918, %v1952
        %v2049 = vsub.f32 %v1920, %v1953
        %v2050 = vsub.f32 %v1922, %v1954
        %v2051 = vmul.f32 %v2019, 0.5
        %v2052 = vmul.f32 %v2020, 0.5
        %v2053 = vmul.f32 %v2021, 0.5
        %v2054 = vmul.f32 %v2022, 0.5
        %v2055 = vmul.f32 %v2023, 0.5
        %v2056 = vmul.f32 %v2024, 0.5
        %v2057 = vmul.f32 %v2025, 0.5
        %v2058 = vmul.f32 %v2026, 0.5
        %v2059 = vmul.f32 %v2027, 0.5
        %v2060 = vmul.f32 %v2028, 0.5
        %v2061 = vmul.f32 %v2029, 0.5
        %v2062 = vmul.f32 %v2030, 0.5
        %v2063 = vmul.f32 %v2031, 0.5
        %v2064 = vmul.f32 %v2032, 0.5
        %v2065 = vmul.f32 %v2033, 0.5
        %v2066 = vmul.f32 %v2034, 0.5
        %v2067 = vmul.f32 %v2035, 0.5
        %v2068 = vmul.f32 %v2036, 0.5
        %v2069 = vmul.f32 %v2037, 0.5
        %v2070 = vmul.f32 %v2038, 0.5
        %v2071 = vmul.f32 %v2039, 0.5
        %v2072 = vmul.f32 %v2040, 0.5
        %v2073 = vmul.f32 %v2041, 0.5
        %v2074 = vmul.f32 %v2042, 0.5
        %v2075 = vmul.f32 %v2043, 0.5
        %v2076 = vmul.f32 %v2044, 0.5
        %v2077 = vmul.f32 %v2045, 0.5
        %v2078 = vmul.f32 %v2046, 0.5
        %v2079 = vmul.f32 %v2047, 0.5
        %v2080 = vmul.f32 %v2048, 0.5
        %v2081 = vmul.f32 %v2049, 0.5
        %v2082 = vmul.f32 %v2050, 0.5
        %v2083 = vmul.f32 %v2051, %v1475
        %v2084 = vmul.f32 %v2052, %v1476
        %v2085 = vmul.f32 %v2053, %v1477
        %v2086 = vmul.f32 %v2054, %v1478
        %v2087 = vmul.f32 %v2055, %v1479
        %v2088 = vmul.f32 %v2056, %v1480
        %v2089 = vmul.f32 %v2057, %v1481
        %v2090 = vmul.f32 %v2058, %v1482
        %v2091 = vmul.f32 %v2059, %v1483
        %v2092 = vmul.f32 %v2060, %v1484
        %v2093 = vmul.f32 %v2061, %v1485
        %v2094 = vmul.f32 %v2062, %v1486
        %v2095 = vmul.f32 %v2063, %v1487
        %v2096 = vmul.f32 %v2064, %v1488
        %v2097 = vmul.f32 %v2065, %v1489
        %v2098 = vmul.f32 %v2066, %v1490
        %v2099 = vmul.f32 %v2067, %v1491
        %v2100 = vmul.f32 %v2068, %v1492
        %v2101 = vmul.f32 %v2069, %v1493
        %v2102 = vmul.f32 %v2070, %v1494
        %v2103 = vmul.f32 %v2071, %v1495
        %v2104 = vmul.f32 %v2072, %v1496
        %v2105 = vmul.f32 %v2073, %v1497
        %v2106 = vmul.f32 %v2074, %v1498
        %v2107 = vmul.f32 %v2075, %v1499
        %v2108 = vmul.f32 %v2076, %v1500
        %v2109 = vmul.f32 %v2077, %v1501
        %v2110 = vmul.f32 %v2078, %v1502
        %v2111 = vmul.f32 %v2079, %v1503
        %v2112 = vmul.f32 %v2080, %v1504
        %v2113 = vmul.f32 %v2081, %v1505
        %v2114 = vmul.f32 %v2082, %v1506
        %v2115 = vmax.f32 %v1641, 1e-07
        %v2116 = vmax.f32 %v1648, 1e-07
        %v2117 = vmax.f32 %v1655, 1e-07
        %v2118 = vmax.f32 %v1662, 1e-07
        %v2119 = vmax.f32 %v1669, 1e-07
        %v2120 = vmax.f32 %v1676, 1e-07
        %v2121 = vmax.f32 %v1683, 1e-07
        %v2122 = vmax.f32 %v1690, 1e-07
        %v2123 = vmax.f32 %v1697, 1e-07
        %v2124 = vmax.f32 %v1704, 1e-07
        %v2125 = vmax.f32 %v1711, 1e-07
        %v2126 = vmax.f32 %v1718, 1e-07
        %v2127 = vmax.f32 %v1725, 1e-07
        %v2128 = vmax.f32 %v1732, 1e-07
        %v2129 = vmax.f32 %v1739, 1e-07
        %v2130 = vmax.f32 %v1746, 1e-07
        %v2131 = vmax.f32 %v1753, 1e-07
        %v2132 = vmax.f32 %v1760, 1e-07
        %v2133 = vmax.f32 %v1767, 1e-07
        %v2134 = vmax.f32 %v1774, 1e-07
        %v2135 = vmax.f32 %v1781, 1e-07
        %v2136 = vmax.f32 %v1788, 1e-07
        %v2137 = vmax.f32 %v1795, 1e-07
        %v2138 = vmax.f32 %v1802, 1e-07
        %v2139 = vmax.f32 %v1809, 1e-07
        %v2140 = vmax.f32 %v1816, 1e-07
        %v2141 = vmax.f32 %v1823, 1e-07
        %v2142 = vmax.f32 %v1830, 1e-07
        %v2143 = vmax.f32 %v1837, 1e-07
        %v2144 = vmax.f32 %v1844, 1e-07
        %v2145 = vmax.f32 %v1851, 1e-07
        %v2146 = vmax.f32 %v1858, 1e-07
        %v2147 = vrcp.pop %v2115
        %v2148 = vmul.f32 %v2083, %v2147
        %v2149 = vrcp.pop %v2116
        %v2150 = vmul.f32 %v2084, %v2149
        %v2151 = vrcp.pop %v2117
        %v2152 = vmul.f32 %v2085, %v2151
        %v2153 = vrcp.pop %v2118
        %v2154 = vmul.f32 %v2086, %v2153
        %v2155 = vrcp.pop %v2119
        %v2156 = vmul.f32 %v2087, %v2155
        %v2157 = vrcp.pop %v2120
        %v2158 = vmul.f32 %v2088, %v2157
        %v2159 = vrcp.pop %v2121
        %v2160 = vmul.f32 %v2089, %v2159
        %v2161 = vrcp.pop %v2122
        %v2162 = vmul.f32 %v2090, %v2161
        %v2163 = vrcp.pop %v2123
        %v2164 = vmul.f32 %v2091, %v2163
        %v2165 = vrcp.pop %v2124
        %v2166 = vmul.f32 %v2092, %v2165
        %v2167 = vrcp.pop %v2125
        %v2168 = vmul.f32 %v2093, %v2167
        %v2169 = vrcp.pop %v2126
        %v2170 = vmul.f32 %v2094, %v2169
        %v2171 = vrcp.pop %v2127
        %v2172 = vmul.f32 %v2095, %v2171
        %v2173 = vrcp.pop %v2128
        %v2174 = vmul.f32 %v2096, %v2173
        %v2175 = vrcp.pop %v2129
        %v2176 = vmul.f32 %v2097, %v2175
        %v2177 = vrcp.pop %v2130
        %v2178 = vmul.f32 %v2098, %v2177
        %v2179 = vrcp.pop %v2131
        %v2180 = vmul.f32 %v2099, %v2179
        %v2181 = vrcp.pop %v2132
        %v2182 = vmul.f32 %v2100, %v2181
        %v2183 = vrcp.pop %v2133
        %v2184 = vmul.f32 %v2101, %v2183
        %v2185 = vrcp.pop %v2134
        %v2186 = vmul.f32 %v2102, %v2185
        %v2187 = vrcp.pop %v2135
        %v2188 = vmul.f32 %v2103, %v2187
        %v2189 = vrcp.pop %v2136
        %v2190 = vmul.f32 %v2104, %v2189
        %v2191 = vrcp.pop %v2137
        %v2192 = vmul.f32 %v2105, %v2191
        %v2193 = vrcp.pop %v2138
        %v2194 = vmul.f32 %v2106, %v2193
        %v2195 = vrcp.pop %v2139
        %v2196 = vmul.f32 %v2107, %v2195
        %v2197 = vrcp.pop %v2140
        %v2198 = vmul.f32 %v2108, %v2197
        %v2199 = vrcp.pop %v2141
        %v2200 = vmul.f32 %v2109, %v2199
        %v2201 = vrcp.pop %v2142
        %v2202 = vmul.f32 %v2110, %v2201
        %v2203 = vrcp.pop %v2143
        %v2204 = vmul.f32 %v2111, %v2203
        %v2205 = vrcp.pop %v2144
        %v2206 = vmul.f32 %v2112, %v2205
        %v2207 = vrcp.pop %v2145
        %v2208 = vmul.f32 %v2113, %v2207
        %v2209 = vrcp.pop %v2146
        %v2210 = vmul.f32 %v2114, %v2209
        %v2211 = vsel %vm257, %v1987, %v2148
        %v2212 = vsel %vm257, %v1988, %v2150
        %v2213 = vsel %vm257, %v1989, %v2152
        %v2214 = vsel %vm257, %v1990, %v2154
        %v2215 = vsel %vm257, %v1991, %v2156
        %v2216 = vsel %vm257, %v1992, %v2158
        %v2217 = vsel %vm257, %v1993, %v2160
        %v2218 = vsel %vm257, %v1994, %v2162
        %v2219 = vsel %vm257, %v1995, %v2164
        %v2220 = vsel %vm257, %v1996, %v2166
        %v2221 = vsel %vm257, %v1997, %v2168
        %v2222 = vsel %vm257, %v1998, %v2170
        %v2223 = vsel %vm257, %v1999, %v2172
        %v2224 = vsel %vm257, %v2000, %v2174
        %v2225 = vsel %vm257, %v2001, %v2176
        %v2226 = vsel %vm257, %v2002, %v2178
        %v2227 = vsel %vm257, %v2003, %v2180
        %v2228 = vsel %vm257, %v2004, %v2182
        %v2229 = vsel %vm257, %v2005, %v2184
        %v2230 = vsel %vm257, %v2006, %v2186
        %v2231 = vsel %vm257, %v2007, %v2188
        %v2232 = vsel %vm257, %v2008, %v2190
        %v2233 = vsel %vm257, %v2009, %v2192
        %v2234 = vsel %vm257, %v2010, %v2194
        %v2235 = vsel %vm257, %v2011, %v2196
        %v2236 = vsel %vm257, %v2012, %v2198
        %v2237 = vsel %vm257, %v2013, %v2200
        %v2238 = vsel %vm257, %v2014, %v2202
        %v2239 = vsel %vm257, %v2015, %v2204
        %v2240 = vsel %vm257, %v2016, %v2206
        %v2241 = vsel %vm257, %v2017, %v2208
        %v2242 = vsel %vm257, %v2018, %v2210
        %v2243 = vsel %vm257, 0.0, %v254
        %v2244 = vsel %vm257, %v1987, 0.0
        %v2245 = vsel %vm257, %v1988, 0.0
        %v2246 = vsel %vm257, %v1989, 0.0
        %v2247 = vsel %vm257, %v1990, 0.0
        %v2248 = vsel %vm257, %v1991, 0.0
        %v2249 = vsel %vm257, %v1992, 0.0
        %v2250 = vsel %vm257, %v1993, 0.0
        %v2251 = vsel %vm257, %v1994, 0.0
        %v2252 = vsel %vm257, %v1995, 0.0
        %v2253 = vsel %vm257, %v1996, 0.0
        %v2254 = vsel %vm257, %v1997, 0.0
        %v2255 = vsel %vm257, %v1998, 0.0
        %v2256 = vsel %vm257, %v1999, 0.0
        %v2257 = vsel %vm257, %v2000, 0.0
        %v2258 = vsel %vm257, %v2001, 0.0
        %v2259 = vsel %vm257, %v2002, 0.0
        %v2260 = vsel %vm257, %v2003, 0.0
        %v2261 = vsel %vm257, %v2004, 0.0
        %v2262 = vsel %vm257, %v2005, 0.0
        %v2263 = vsel %vm257, %v2006, 0.0
        %v2264 = vsel %vm257, %v2007, 0.0
        %v2265 = vsel %vm257, %v2008, 0.0
        %v2266 = vsel %vm257, %v2009, 0.0
        %v2267 = vsel %vm257, %v2010, 0.0
        %v2268 = vsel %vm257, %v2011, 0.0
        %v2269 = vsel %vm257, %v2012, 0.0
        %v2270 = vsel %vm257, %v2013, 0.0
        %v2271 = vsel %vm257, %v2014, 0.0
        %v2272 = vsel %vm257, %v2015, 0.0
        %v2273 = vsel %vm257, %v2016, 0.0
        %v2274 = vsel %vm257, %v2017, 0.0
        %v2275 = vsel %vm257, %v2018, 0.0
        %2276 = vadd.xlane.f32.xlu0 %v2244
        %v2277 = vpop.xlane.xlu0 %2276
        %2278 = vadd.xlane.f32.xlu0 %v2245
        %v2279 = vpop.xlane.xlu0 %2278
        %2280 = vadd.xlane.f32.xlu0 %v2246
        %v2281 = vpop.xlane.xlu0 %2280
        %2282 = vadd.xlane.f32.xlu0 %v2247
        %v2283 = vpop.xlane.xlu0 %2282
        %2284 = vadd.xlane.f32.xlu0 %v2248
        %v2285 = vpop.xlane.xlu0 %2284
        %2286 = vadd.xlane.f32.xlu0 %v2249
        %v2287 = vpop.xlane.xlu0 %2286
        %2288 = vadd.xlane.f32.xlu0 %v2250
        %v2289 = vpop.xlane.xlu0 %2288
        %2290 = vadd.xlane.f32.xlu0 %v2251
        %v2291 = vpop.xlane.xlu0 %2290
        %2292 = vadd.xlane.f32.xlu0 %v2252
        %v2293 = vpop.xlane.xlu0 %2292
        %2294 = vadd.xlane.f32.xlu0 %v2253
        %v2295 = vpop.xlane.xlu0 %2294
        %2296 = vadd.xlane.f32.xlu0 %v2254
        %v2297 = vpop.xlane.xlu0 %2296
        %2298 = vadd.xlane.f32.xlu0 %v2255
        %v2299 = vpop.xlane.xlu0 %2298
        %2300 = vadd.xlane.f32.xlu0 %v2256
        %v2301 = vpop.xlane.xlu0 %2300
        %2302 = vadd.xlane.f32.xlu0 %v2257
        %v2303 = vpop.xlane.xlu0 %2302
        %2304 = vadd.xlane.f32.xlu0 %v2258
        %v2305 = vpop.xlane.xlu0 %2304
        %2306 = vadd.xlane.f32.xlu0 %v2259
        %v2307 = vpop.xlane.xlu0 %2306
        %2308 = vadd.xlane.f32.xlu0 %v2260
        %v2309 = vpop.xlane.xlu0 %2308
        %2310 = vadd.xlane.f32.xlu0 %v2261
        %v2311 = vpop.xlane.xlu0 %2310
        %2312 = vadd.xlane.f32.xlu0 %v2262
        %v2313 = vpop.xlane.xlu0 %2312
        %2314 = vadd.xlane.f32.xlu0 %v2263
        %v2315 = vpop.xlane.xlu0 %2314
        %2316 = vadd.xlane.f32.xlu0 %v2264
        %v2317 = vpop.xlane.xlu0 %2316
        %2318 = vadd.xlane.f32.xlu0 %v2265
        %v2319 = vpop.xlane.xlu0 %2318
        %2320 = vadd.xlane.f32.xlu0 %v2266
        %v2321 = vpop.xlane.xlu0 %2320
        %2322 = vadd.xlane.f32.xlu0 %v2267
        %v2323 = vpop.xlane.xlu0 %2322
        %2324 = vadd.xlane.f32.xlu0 %v2268
        %v2325 = vpop.xlane.xlu0 %2324
        %2326 = vadd.xlane.f32.xlu0 %v2269
        %v2327 = vpop.xlane.xlu0 %2326
        %2328 = vadd.xlane.f32.xlu0 %v2270
        %v2329 = vpop.xlane.xlu0 %2328
        %2330 = vadd.xlane.f32.xlu0 %v2271
        %v2331 = vpop.xlane.xlu0 %2330
        %2332 = vadd.xlane.f32.xlu0 %v2272
        %v2333 = vpop.xlane.xlu0 %2332
        %2334 = vadd.xlane.f32.xlu0 %v2273
        %v2335 = vpop.xlane.xlu0 %2334
        %2336 = vadd.xlane.f32.xlu0 %v2274
        %v2337 = vpop.xlane.xlu0 %2336
        %2338 = vadd.xlane.f32.xlu0 %v2275
        %v2339 = vpop.xlane.xlu0 %2338
        %v2340 = vlaneseq
        %v2341 = vshrl.u32 %v2340, 7
        %v2342 = vsub.s32 0, %v2341
        %v2343 = vrot.slane %v2243, %v2342
        %v2344 = vmul.f32 %v2211, %v2343
        %v2345 = vmul.f32 %v2212, %v2343
        %v2346 = vmul.f32 %v2213, %v2343
        %v2347 = vmul.f32 %v2214, %v2343
        %v2348 = vmul.f32 %v2215, %v2343
        %v2349 = vmul.f32 %v2216, %v2343
        %v2350 = vmul.f32 %v2217, %v2343
        %v2351 = vmul.f32 %v2218, %v2343
        %v2352 = vmul.f32 %v2219, %v2343
        %v2353 = vmul.f32 %v2220, %v2343
        %v2354 = vmul.f32 %v2221, %v2343
        %v2355 = vmul.f32 %v2222, %v2343
        %v2356 = vmul.f32 %v2223, %v2343
        %v2357 = vmul.f32 %v2224, %v2343
        %v2358 = vmul.f32 %v2225, %v2343
        %v2359 = vmul.f32 %v2226, %v2343
        %v2360 = vmul.f32 %v2227, %v2343
        %v2361 = vmul.f32 %v2228, %v2343
        %v2362 = vmul.f32 %v2229, %v2343
        %v2363 = vmul.f32 %v2230, %v2343
        %v2364 = vmul.f32 %v2231, %v2343
        %v2365 = vmul.f32 %v2232, %v2343
        %v2366 = vmul.f32 %v2233, %v2343
        %v2367 = vmul.f32 %v2234, %v2343
        %v2368 = vmul.f32 %v2235, %v2343
        %v2369 = vmul.f32 %v2236, %v2343
        %v2370 = vmul.f32 %v2237, %v2343
        %v2371 = vmul.f32 %v2238, %v2343
        %v2372 = vmul.f32 %v2239, %v2343
        %v2373 = vmul.f32 %v2240, %v2343
        %v2374 = vmul.f32 %v2241, %v2343
        %v2375 = vmul.f32 %v2242, %v2343
        %v2376 = vsel %vm257, 0.0, %v2344
        %v2377 = vsel %vm257, 0.0, %v2345
        %v2378 = vsel %vm257, 0.0, %v2346
        %v2379 = vsel %vm257, 0.0, %v2347
        %v2380 = vsel %vm257, 0.0, %v2348
        %v2381 = vsel %vm257, 0.0, %v2349
        %v2382 = vsel %vm257, 0.0, %v2350
        %v2383 = vsel %vm257, 0.0, %v2351
        %v2384 = vsel %vm257, 0.0, %v2352
        %v2385 = vsel %vm257, 0.0, %v2353
        %v2386 = vsel %vm257, 0.0, %v2354
        %v2387 = vsel %vm257, 0.0, %v2355
        %v2388 = vsel %vm257, 0.0, %v2356
        %v2389 = vsel %vm257, 0.0, %v2357
        %v2390 = vsel %vm257, 0.0, %v2358
        %v2391 = vsel %vm257, 0.0, %v2359
        %v2392 = vsel %vm257, 0.0, %v2360
        %v2393 = vsel %vm257, 0.0, %v2361
        %v2394 = vsel %vm257, 0.0, %v2362
        %v2395 = vsel %vm257, 0.0, %v2363
        %v2396 = vsel %vm257, 0.0, %v2364
        %v2397 = vsel %vm257, 0.0, %v2365
        %v2398 = vsel %vm257, 0.0, %v2366
        %v2399 = vsel %vm257, 0.0, %v2367
        %v2400 = vsel %vm257, 0.0, %v2368
        %v2401 = vsel %vm257, 0.0, %v2369
        %v2402 = vsel %vm257, 0.0, %v2370
        %v2403 = vsel %vm257, 0.0, %v2371
        %v2404 = vsel %vm257, 0.0, %v2372
        %v2405 = vsel %vm257, 0.0, %v2373
        %v2406 = vsel %vm257, 0.0, %v2374
        %v2407 = vsel %vm257, 0.0, %v2375
        %2408 = vadd.xlane.f32.xlu0 %v2376
        %v2409 = vpop.xlane.xlu0 %2408
        %2410 = vadd.xlane.f32.xlu0 %v2377
        %v2411 = vpop.xlane.xlu0 %2410
        %2412 = vadd.xlane.f32.xlu0 %v2378
        %v2413 = vpop.xlane.xlu0 %2412
        %2414 = vadd.xlane.f32.xlu0 %v2379
        %v2415 = vpop.xlane.xlu0 %2414
        %2416 = vadd.xlane.f32.xlu0 %v2380
        %v2417 = vpop.xlane.xlu0 %2416
        %2418 = vadd.xlane.f32.xlu0 %v2381
        %v2419 = vpop.xlane.xlu0 %2418
        %2420 = vadd.xlane.f32.xlu0 %v2382
        %v2421 = vpop.xlane.xlu0 %2420
        %2422 = vadd.xlane.f32.xlu0 %v2383
        %v2423 = vpop.xlane.xlu0 %2422
        %2424 = vadd.xlane.f32.xlu0 %v2384
        %v2425 = vpop.xlane.xlu0 %2424
        %2426 = vadd.xlane.f32.xlu0 %v2385
        %v2427 = vpop.xlane.xlu0 %2426
        %2428 = vadd.xlane.f32.xlu0 %v2386
        %v2429 = vpop.xlane.xlu0 %2428
        %2430 = vadd.xlane.f32.xlu0 %v2387
        %v2431 = vpop.xlane.xlu0 %2430
        %2432 = vadd.xlane.f32.xlu0 %v2388
        %v2433 = vpop.xlane.xlu0 %2432
        %2434 = vadd.xlane.f32.xlu0 %v2389
        %v2435 = vpop.xlane.xlu0 %2434
        %2436 = vadd.xlane.f32.xlu0 %v2390
        %v2437 = vpop.xlane.xlu0 %2436
        %2438 = vadd.xlane.f32.xlu0 %v2391
        %v2439 = vpop.xlane.xlu0 %2438
        %2440 = vadd.xlane.f32.xlu0 %v2392
        %v2441 = vpop.xlane.xlu0 %2440
        %2442 = vadd.xlane.f32.xlu0 %v2393
        %v2443 = vpop.xlane.xlu0 %2442
        %2444 = vadd.xlane.f32.xlu0 %v2394
        %v2445 = vpop.xlane.xlu0 %2444
        %2446 = vadd.xlane.f32.xlu0 %v2395
        %v2447 = vpop.xlane.xlu0 %2446
        %2448 = vadd.xlane.f32.xlu0 %v2396
        %v2449 = vpop.xlane.xlu0 %2448
        %2450 = vadd.xlane.f32.xlu0 %v2397
        %v2451 = vpop.xlane.xlu0 %2450
        %2452 = vadd.xlane.f32.xlu0 %v2398
        %v2453 = vpop.xlane.xlu0 %2452
        %2454 = vadd.xlane.f32.xlu0 %v2399
        %v2455 = vpop.xlane.xlu0 %2454
        %2456 = vadd.xlane.f32.xlu0 %v2400
        %v2457 = vpop.xlane.xlu0 %2456
        %2458 = vadd.xlane.f32.xlu0 %v2401
        %v2459 = vpop.xlane.xlu0 %2458
        %2460 = vadd.xlane.f32.xlu0 %v2402
        %v2461 = vpop.xlane.xlu0 %2460
        %2462 = vadd.xlane.f32.xlu0 %v2403
        %v2463 = vpop.xlane.xlu0 %2462
        %2464 = vadd.xlane.f32.xlu0 %v2404
        %v2465 = vpop.xlane.xlu0 %2464
        %2466 = vadd.xlane.f32.xlu0 %v2405
        %v2467 = vpop.xlane.xlu0 %2466
        %2468 = vadd.xlane.f32.xlu0 %v2406
        %v2469 = vpop.xlane.xlu0 %2468
        %2470 = vadd.xlane.f32.xlu0 %v2407
        %v2471 = vpop.xlane.xlu0 %2470
        %v2472 = vadd.f32 %v2277, 1.0
        %v2473 = vadd.f32 %v2279, 1.0
        %v2474 = vadd.f32 %v2281, 1.0
        %v2475 = vadd.f32 %v2283, 1.0
        %v2476 = vadd.f32 %v2285, 1.0
        %v2477 = vadd.f32 %v2287, 1.0
        %v2478 = vadd.f32 %v2289, 1.0
        %v2479 = vadd.f32 %v2291, 1.0
        %v2480 = vadd.f32 %v2293, 1.0
        %v2481 = vadd.f32 %v2295, 1.0
        %v2482 = vadd.f32 %v2297, 1.0
        %v2483 = vadd.f32 %v2299, 1.0
        %v2484 = vadd.f32 %v2301, 1.0
        %v2485 = vadd.f32 %v2303, 1.0
        %v2486 = vadd.f32 %v2305, 1.0
        %v2487 = vadd.f32 %v2307, 1.0
        %v2488 = vadd.f32 %v2309, 1.0
        %v2489 = vadd.f32 %v2311, 1.0
        %v2490 = vadd.f32 %v2313, 1.0
        %v2491 = vadd.f32 %v2315, 1.0
        %v2492 = vadd.f32 %v2317, 1.0
        %v2493 = vadd.f32 %v2319, 1.0
        %v2494 = vadd.f32 %v2321, 1.0
        %v2495 = vadd.f32 %v2323, 1.0
        %v2496 = vadd.f32 %v2325, 1.0
        %v2497 = vadd.f32 %v2327, 1.0
        %v2498 = vadd.f32 %v2329, 1.0
        %v2499 = vadd.f32 %v2331, 1.0
        %v2500 = vadd.f32 %v2333, 1.0
        %v2501 = vadd.f32 %v2335, 1.0
        %v2502 = vadd.f32 %v2337, 1.0
        %v2503 = vadd.f32 %v2339, 1.0
        %v2504 = vsel %vm257, %v2472, %v2148
        %v2505 = vsel %vm257, %v2473, %v2150
        %v2506 = vsel %vm257, %v2474, %v2152
        %v2507 = vsel %vm257, %v2475, %v2154
        %v2508 = vsel %vm257, %v2476, %v2156
        %v2509 = vsel %vm257, %v2477, %v2158
        %v2510 = vsel %vm257, %v2478, %v2160
        %v2511 = vsel %vm257, %v2479, %v2162
        %v2512 = vsel %vm257, %v2480, %v2164
        %v2513 = vsel %vm257, %v2481, %v2166
        %v2514 = vsel %vm257, %v2482, %v2168
        %v2515 = vsel %vm257, %v2483, %v2170
        %v2516 = vsel %vm257, %v2484, %v2172
        %v2517 = vsel %vm257, %v2485, %v2174
        %v2518 = vsel %vm257, %v2486, %v2176
        %v2519 = vsel %vm257, %v2487, %v2178
        %v2520 = vsel %vm257, %v2488, %v2180
        %v2521 = vsel %vm257, %v2489, %v2182
        %v2522 = vsel %vm257, %v2490, %v2184
        %v2523 = vsel %vm257, %v2491, %v2186
        %v2524 = vsel %vm257, %v2492, %v2188
        %v2525 = vsel %vm257, %v2493, %v2190
        %v2526 = vsel %vm257, %v2494, %v2192
        %v2527 = vsel %vm257, %v2495, %v2194
        %v2528 = vsel %vm257, %v2496, %v2196
        %v2529 = vsel %vm257, %v2497, %v2198
        %v2530 = vsel %vm257, %v2498, %v2200
        %v2531 = vsel %vm257, %v2499, %v2202
        %v2532 = vsel %vm257, %v2500, %v2204
        %v2533 = vsel %vm257, %v2501, %v2206
        %v2534 = vsel %vm257, %v2502, %v2208
        %v2535 = vsel %vm257, %v2503, %v2210
        %v2536 = vrcp.pop %v2472
        %v2537 = vmul.f32 %v2409, %v2536
        %v2538 = vrcp.pop %v2473
        %v2539 = vmul.f32 %v2411, %v2538
        %v2540 = vrcp.pop %v2474
        %v2541 = vmul.f32 %v2413, %v2540
        %v2542 = vrcp.pop %v2475
        %v2543 = vmul.f32 %v2415, %v2542
        %v2544 = vrcp.pop %v2476
        %v2545 = vmul.f32 %v2417, %v2544
        %v2546 = vrcp.pop %v2477
        %v2547 = vmul.f32 %v2419, %v2546
        %v2548 = vrcp.pop %v2478
        %v2549 = vmul.f32 %v2421, %v2548
        %v2550 = vrcp.pop %v2479
        %v2551 = vmul.f32 %v2423, %v2550
        %v2552 = vrcp.pop %v2480
        %v2553 = vmul.f32 %v2425, %v2552
        %v2554 = vrcp.pop %v2481
        %v2555 = vmul.f32 %v2427, %v2554
        %v2556 = vrcp.pop %v2482
        %v2557 = vmul.f32 %v2429, %v2556
        %v2558 = vrcp.pop %v2483
        %v2559 = vmul.f32 %v2431, %v2558
        %v2560 = vrcp.pop %v2484
        %v2561 = vmul.f32 %v2433, %v2560
        %v2562 = vrcp.pop %v2485
        %v2563 = vmul.f32 %v2435, %v2562
        %v2564 = vrcp.pop %v2486
        %v2565 = vmul.f32 %v2437, %v2564
        %v2566 = vrcp.pop %v2487
        %v2567 = vmul.f32 %v2439, %v2566
        %v2568 = vrcp.pop %v2488
        %v2569 = vmul.f32 %v2441, %v2568
        %v2570 = vrcp.pop %v2489
        %v2571 = vmul.f32 %v2443, %v2570
        %v2572 = vrcp.pop %v2490
        %v2573 = vmul.f32 %v2445, %v2572
        %v2574 = vrcp.pop %v2491
        %v2575 = vmul.f32 %v2447, %v2574
        %v2576 = vrcp.pop %v2492
        %v2577 = vmul.f32 %v2449, %v2576
        %v2578 = vrcp.pop %v2493
        %v2579 = vmul.f32 %v2451, %v2578
        %v2580 = vrcp.pop %v2494
        %v2581 = vmul.f32 %v2453, %v2580
        %v2582 = vrcp.pop %v2495
        %v2583 = vmul.f32 %v2455, %v2582
        %v2584 = vrcp.pop %v2496
        %v2585 = vmul.f32 %v2457, %v2584
        %v2586 = vrcp.pop %v2497
        %v2587 = vmul.f32 %v2459, %v2586
        %v2588 = vrcp.pop %v2498
        %v2589 = vmul.f32 %v2461, %v2588
        %v2590 = vrcp.pop %v2499
        %v2591 = vmul.f32 %v2463, %v2590
        %v2592 = vrcp.pop %v2500
        %v2593 = vmul.f32 %v2465, %v2592
        %v2594 = vrcp.pop %v2501
        %v2595 = vmul.f32 %v2467, %v2594
        %v2596 = vrcp.pop %v2502
        %v2597 = vmul.f32 %v2469, %v2596
        %v2598 = vrcp.pop %v2503
        %v2599 = vmul.f32 %v2471, %v2598
        %v2600 = vmul.f32 %v2537, %v2504
        %v2601 = vmul.f32 %v2539, %v2505
        %v2602 = vmul.f32 %v2541, %v2506
        %v2603 = vmul.f32 %v2543, %v2507
        %v2604 = vmul.f32 %v2545, %v2508
        %v2605 = vmul.f32 %v2547, %v2509
        %v2606 = vmul.f32 %v2549, %v2510
        %v2607 = vmul.f32 %v2551, %v2511
        %v2608 = vmul.f32 %v2553, %v2512
        %v2609 = vmul.f32 %v2555, %v2513
        %v2610 = vmul.f32 %v2557, %v2514
        %v2611 = vmul.f32 %v2559, %v2515
        %v2612 = vmul.f32 %v2561, %v2516
        %v2613 = vmul.f32 %v2563, %v2517
        %v2614 = vmul.f32 %v2565, %v2518
        %v2615 = vmul.f32 %v2567, %v2519
        %v2616 = vmul.f32 %v2569, %v2520
        %v2617 = vmul.f32 %v2571, %v2521
        %v2618 = vmul.f32 %v2573, %v2522
        %v2619 = vmul.f32 %v2575, %v2523
        %v2620 = vmul.f32 %v2577, %v2524
        %v2621 = vmul.f32 %v2579, %v2525
        %v2622 = vmul.f32 %v2581, %v2526
        %v2623 = vmul.f32 %v2583, %v2527
        %v2624 = vmul.f32 %v2585, %v2528
        %v2625 = vmul.f32 %v2587, %v2529
        %v2626 = vmul.f32 %v2589, %v2530
        %v2627 = vmul.f32 %v2591, %v2531
        %v2628 = vmul.f32 %v2593, %v2532
        %v2629 = vmul.f32 %v2595, %v2533
        %v2630 = vmul.f32 %v2597, %v2534
        %v2631 = vmul.f32 %v2599, %v2535
        %v2632 = vadd.f32 %v2343, %v2600
        %v2633 = vadd.f32 %v2343, %v2601
        %v2634 = vadd.f32 %v2343, %v2602
        %v2635 = vadd.f32 %v2343, %v2603
        %v2636 = vadd.f32 %v2343, %v2604
        %v2637 = vadd.f32 %v2343, %v2605
        %v2638 = vadd.f32 %v2343, %v2606
        %v2639 = vadd.f32 %v2343, %v2607
        %v2640 = vadd.f32 %v2343, %v2608
        %v2641 = vadd.f32 %v2343, %v2609
        %v2642 = vadd.f32 %v2343, %v2610
        %v2643 = vadd.f32 %v2343, %v2611
        %v2644 = vadd.f32 %v2343, %v2612
        %v2645 = vadd.f32 %v2343, %v2613
        %v2646 = vadd.f32 %v2343, %v2614
        %v2647 = vadd.f32 %v2343, %v2615
        %v2648 = vadd.f32 %v2343, %v2616
        %v2649 = vadd.f32 %v2343, %v2617
        %v2650 = vadd.f32 %v2343, %v2618
        %v2651 = vadd.f32 %v2343, %v2619
        %v2652 = vadd.f32 %v2343, %v2620
        %v2653 = vadd.f32 %v2343, %v2621
        %v2654 = vadd.f32 %v2343, %v2622
        %v2655 = vadd.f32 %v2343, %v2623
        %v2656 = vadd.f32 %v2343, %v2624
        %v2657 = vadd.f32 %v2343, %v2625
        %v2658 = vadd.f32 %v2343, %v2626
        %v2659 = vadd.f32 %v2343, %v2627
        %v2660 = vadd.f32 %v2343, %v2628
        %v2661 = vadd.f32 %v2343, %v2629
        %v2662 = vadd.f32 %v2343, %v2630
        %v2663 = vadd.f32 %v2343, %v2631
        %v2664 = vsel %vm257, %v2632, 0.0
        %v2665 = vsel %vm257, %v2633, 0.0
        %v2666 = vsel %vm257, %v2634, 0.0
        %v2667 = vsel %vm257, %v2635, 0.0
        %v2668 = vsel %vm257, %v2636, 0.0
        %v2669 = vsel %vm257, %v2637, 0.0
        %v2670 = vsel %vm257, %v2638, 0.0
        %v2671 = vsel %vm257, %v2639, 0.0
        %v2672 = vsel %vm257, %v2640, 0.0
        %v2673 = vsel %vm257, %v2641, 0.0
        %v2674 = vsel %vm257, %v2642, 0.0
        %v2675 = vsel %vm257, %v2643, 0.0
        %v2676 = vsel %vm257, %v2644, 0.0
        %v2677 = vsel %vm257, %v2645, 0.0
        %v2678 = vsel %vm257, %v2646, 0.0
        %v2679 = vsel %vm257, %v2647, 0.0
        %v2680 = vsel %vm257, %v2648, 0.0
        %v2681 = vsel %vm257, %v2649, 0.0
        %v2682 = vsel %vm257, %v2650, 0.0
        %v2683 = vsel %vm257, %v2651, 0.0
        %v2684 = vsel %vm257, %v2652, 0.0
        %v2685 = vsel %vm257, %v2653, 0.0
        %v2686 = vsel %vm257, %v2654, 0.0
        %v2687 = vsel %vm257, %v2655, 0.0
        %v2688 = vsel %vm257, %v2656, 0.0
        %v2689 = vsel %vm257, %v2657, 0.0
        %v2690 = vsel %vm257, %v2658, 0.0
        %v2691 = vsel %vm257, %v2659, 0.0
        %v2692 = vsel %vm257, %v2660, 0.0
        %v2693 = vsel %vm257, %v2661, 0.0
        %v2694 = vsel %vm257, %v2662, 0.0
        %v2695 = vsel %vm257, %v2663, 0.0
        %2696 = vadd.xlane.f32.xlu0 %v2664
        %v2697 = vpop.xlane.xlu0 %2696
        %2698 = vadd.xlane.f32.xlu0 %v2665
        %v2699 = vpop.xlane.xlu0 %2698
        %2700 = vadd.xlane.f32.xlu0 %v2666
        %v2701 = vpop.xlane.xlu0 %2700
        %2702 = vadd.xlane.f32.xlu0 %v2667
        %v2703 = vpop.xlane.xlu0 %2702
        %2704 = vadd.xlane.f32.xlu0 %v2668
        %v2705 = vpop.xlane.xlu0 %2704
        %2706 = vadd.xlane.f32.xlu0 %v2669
        %v2707 = vpop.xlane.xlu0 %2706
        %2708 = vadd.xlane.f32.xlu0 %v2670
        %v2709 = vpop.xlane.xlu0 %2708
        %2710 = vadd.xlane.f32.xlu0 %v2671
        %v2711 = vpop.xlane.xlu0 %2710
        %2712 = vadd.xlane.f32.xlu0 %v2672
        %v2713 = vpop.xlane.xlu0 %2712
        %2714 = vadd.xlane.f32.xlu0 %v2673
        %v2715 = vpop.xlane.xlu0 %2714
        %2716 = vadd.xlane.f32.xlu0 %v2674
        %v2717 = vpop.xlane.xlu0 %2716
        %2718 = vadd.xlane.f32.xlu0 %v2675
        %v2719 = vpop.xlane.xlu0 %2718
        %2720 = vadd.xlane.f32.xlu0 %v2676
        %v2721 = vpop.xlane.xlu0 %2720
        %2722 = vadd.xlane.f32.xlu0 %v2677
        %v2723 = vpop.xlane.xlu0 %2722
        %2724 = vadd.xlane.f32.xlu0 %v2678
        %v2725 = vpop.xlane.xlu0 %2724
        %2726 = vadd.xlane.f32.xlu0 %v2679
        %v2727 = vpop.xlane.xlu0 %2726
        %2728 = vadd.xlane.f32.xlu0 %v2680
        %v2729 = vpop.xlane.xlu0 %2728
        %2730 = vadd.xlane.f32.xlu0 %v2681
        %v2731 = vpop.xlane.xlu0 %2730
        %2732 = vadd.xlane.f32.xlu0 %v2682
        %v2733 = vpop.xlane.xlu0 %2732
        %2734 = vadd.xlane.f32.xlu0 %v2683
        %v2735 = vpop.xlane.xlu0 %2734
        %2736 = vadd.xlane.f32.xlu0 %v2684
        %v2737 = vpop.xlane.xlu0 %2736
        %2738 = vadd.xlane.f32.xlu0 %v2685
        %v2739 = vpop.xlane.xlu0 %2738
        %2740 = vadd.xlane.f32.xlu0 %v2686
        %v2741 = vpop.xlane.xlu0 %2740
        %2742 = vadd.xlane.f32.xlu0 %v2687
        %v2743 = vpop.xlane.xlu0 %2742
        %2744 = vadd.xlane.f32.xlu0 %v2688
        %v2745 = vpop.xlane.xlu0 %2744
        %2746 = vadd.xlane.f32.xlu0 %v2689
        %v2747 = vpop.xlane.xlu0 %2746
        %2748 = vadd.xlane.f32.xlu0 %v2690
        %v2749 = vpop.xlane.xlu0 %2748
        %2750 = vadd.xlane.f32.xlu0 %v2691
        %v2751 = vpop.xlane.xlu0 %2750
        %2752 = vadd.xlane.f32.xlu0 %v2692
        %v2753 = vpop.xlane.xlu0 %2752
        %2754 = vadd.xlane.f32.xlu0 %v2693
        %v2755 = vpop.xlane.xlu0 %2754
        %2756 = vadd.xlane.f32.xlu0 %v2694
        %v2757 = vpop.xlane.xlu0 %2756
        %2758 = vadd.xlane.f32.xlu0 %v2695
        %v2759 = vpop.xlane.xlu0 %2758
        %v2760 = vmul.f32 %v2632, %v2632
        %v2761 = vmul.f32 %v2633, %v2633
        %v2762 = vmul.f32 %v2634, %v2634
        %v2763 = vmul.f32 %v2635, %v2635
        %v2764 = vmul.f32 %v2636, %v2636
        %v2765 = vmul.f32 %v2637, %v2637
        %v2766 = vmul.f32 %v2638, %v2638
        %v2767 = vmul.f32 %v2639, %v2639
        %v2768 = vmul.f32 %v2640, %v2640
        %v2769 = vmul.f32 %v2641, %v2641
        %v2770 = vmul.f32 %v2642, %v2642
        %v2771 = vmul.f32 %v2643, %v2643
        %v2772 = vmul.f32 %v2644, %v2644
        %v2773 = vmul.f32 %v2645, %v2645
        %v2774 = vmul.f32 %v2646, %v2646
        %v2775 = vmul.f32 %v2647, %v2647
        %v2776 = vmul.f32 %v2648, %v2648
        %v2777 = vmul.f32 %v2649, %v2649
        %v2778 = vmul.f32 %v2650, %v2650
        %v2779 = vmul.f32 %v2651, %v2651
        %v2780 = vmul.f32 %v2652, %v2652
        %v2781 = vmul.f32 %v2653, %v2653
        %v2782 = vmul.f32 %v2654, %v2654
        %v2783 = vmul.f32 %v2655, %v2655
        %v2784 = vmul.f32 %v2656, %v2656
        %v2785 = vmul.f32 %v2657, %v2657
        %v2786 = vmul.f32 %v2658, %v2658
        %v2787 = vmul.f32 %v2659, %v2659
        %v2788 = vmul.f32 %v2660, %v2660
        %v2789 = vmul.f32 %v2661, %v2661
        %v2790 = vmul.f32 %v2662, %v2662
        %v2791 = vmul.f32 %v2663, %v2663
        %2792 = vadd.xlane.f32.xlu0 %v2760
        %v2793 = vpop.xlane.xlu0 %2792
        %2794 = vadd.xlane.f32.xlu0 %v2761
        %v2795 = vpop.xlane.xlu0 %2794
        %2796 = vadd.xlane.f32.xlu0 %v2762
        %v2797 = vpop.xlane.xlu0 %2796
        %2798 = vadd.xlane.f32.xlu0 %v2763
        %v2799 = vpop.xlane.xlu0 %2798
        %2800 = vadd.xlane.f32.xlu0 %v2764
        %v2801 = vpop.xlane.xlu0 %2800
        %2802 = vadd.xlane.f32.xlu0 %v2765
        %v2803 = vpop.xlane.xlu0 %2802
        %2804 = vadd.xlane.f32.xlu0 %v2766
        %v2805 = vpop.xlane.xlu0 %2804
        %2806 = vadd.xlane.f32.xlu0 %v2767
        %v2807 = vpop.xlane.xlu0 %2806
        %2808 = vadd.xlane.f32.xlu0 %v2768
        %v2809 = vpop.xlane.xlu0 %2808
        %2810 = vadd.xlane.f32.xlu0 %v2769
        %v2811 = vpop.xlane.xlu0 %2810
        %2812 = vadd.xlane.f32.xlu0 %v2770
        %v2813 = vpop.xlane.xlu0 %2812
        %2814 = vadd.xlane.f32.xlu0 %v2771
        %v2815 = vpop.xlane.xlu0 %2814
        %2816 = vadd.xlane.f32.xlu0 %v2772
        %v2817 = vpop.xlane.xlu0 %2816
        %2818 = vadd.xlane.f32.xlu0 %v2773
        %v2819 = vpop.xlane.xlu0 %2818
        %2820 = vadd.xlane.f32.xlu0 %v2774
        %v2821 = vpop.xlane.xlu0 %2820
        %2822 = vadd.xlane.f32.xlu0 %v2775
        %v2823 = vpop.xlane.xlu0 %2822
        %2824 = vadd.xlane.f32.xlu0 %v2776
        %v2825 = vpop.xlane.xlu0 %2824
        %2826 = vadd.xlane.f32.xlu0 %v2777
        %v2827 = vpop.xlane.xlu0 %2826
        %2828 = vadd.xlane.f32.xlu0 %v2778
        %v2829 = vpop.xlane.xlu0 %2828
        %2830 = vadd.xlane.f32.xlu0 %v2779
        %v2831 = vpop.xlane.xlu0 %2830
        %2832 = vadd.xlane.f32.xlu0 %v2780
        %v2833 = vpop.xlane.xlu0 %2832
        %2834 = vadd.xlane.f32.xlu0 %v2781
        %v2835 = vpop.xlane.xlu0 %2834
        %2836 = vadd.xlane.f32.xlu0 %v2782
        %v2837 = vpop.xlane.xlu0 %2836
        %2838 = vadd.xlane.f32.xlu0 %v2783
        %v2839 = vpop.xlane.xlu0 %2838
        %2840 = vadd.xlane.f32.xlu0 %v2784
        %v2841 = vpop.xlane.xlu0 %2840
        %2842 = vadd.xlane.f32.xlu0 %v2785
        %v2843 = vpop.xlane.xlu0 %2842
        %2844 = vadd.xlane.f32.xlu0 %v2786
        %v2845 = vpop.xlane.xlu0 %2844
        %2846 = vadd.xlane.f32.xlu0 %v2787
        %v2847 = vpop.xlane.xlu0 %2846
        %2848 = vadd.xlane.f32.xlu0 %v2788
        %v2849 = vpop.xlane.xlu0 %2848
        %2850 = vadd.xlane.f32.xlu0 %v2789
        %v2851 = vpop.xlane.xlu0 %2850
        %2852 = vadd.xlane.f32.xlu0 %v2790
        %v2853 = vpop.xlane.xlu0 %2852
        %2854 = vadd.xlane.f32.xlu0 %v2791
        %v2855 = vpop.xlane.xlu0 %2854
        %v2856 = vmul.f32 %v2697, 2.0
        %v2857 = vmul.f32 %v2699, 2.0
        %v2858 = vmul.f32 %v2701, 2.0
        %v2859 = vmul.f32 %v2703, 2.0
        %v2860 = vmul.f32 %v2705, 2.0
        %v2861 = vmul.f32 %v2707, 2.0
        %v2862 = vmul.f32 %v2709, 2.0
        %v2863 = vmul.f32 %v2711, 2.0
        %v2864 = vmul.f32 %v2713, 2.0
        %v2865 = vmul.f32 %v2715, 2.0
        %v2866 = vmul.f32 %v2717, 2.0
        %v2867 = vmul.f32 %v2719, 2.0
        %v2868 = vmul.f32 %v2721, 2.0
        %v2869 = vmul.f32 %v2723, 2.0
        %v2870 = vmul.f32 %v2725, 2.0
        %v2871 = vmul.f32 %v2727, 2.0
        %v2872 = vmul.f32 %v2729, 2.0
        %v2873 = vmul.f32 %v2731, 2.0
        %v2874 = vmul.f32 %v2733, 2.0
        %v2875 = vmul.f32 %v2735, 2.0
        %v2876 = vmul.f32 %v2737, 2.0
        %v2877 = vmul.f32 %v2739, 2.0
        %v2878 = vmul.f32 %v2741, 2.0
        %v2879 = vmul.f32 %v2743, 2.0
        %v2880 = vmul.f32 %v2745, 2.0
        %v2881 = vmul.f32 %v2747, 2.0
        %v2882 = vmul.f32 %v2749, 2.0
        %v2883 = vmul.f32 %v2751, 2.0
        %v2884 = vmul.f32 %v2753, 2.0
        %v2885 = vmul.f32 %v2755, 2.0
        %v2886 = vmul.f32 %v2757, 2.0
        %v2887 = vmul.f32 %v2759, 2.0
        %v2888 = vmul.f32 %v2856, %v2697
        %v2889 = vmul.f32 %v2857, %v2699
        %v2890 = vmul.f32 %v2858, %v2701
        %v2891 = vmul.f32 %v2859, %v2703
        %v2892 = vmul.f32 %v2860, %v2705
        %v2893 = vmul.f32 %v2861, %v2707
        %v2894 = vmul.f32 %v2862, %v2709
        %v2895 = vmul.f32 %v2863, %v2711
        %v2896 = vmul.f32 %v2864, %v2713
        %v2897 = vmul.f32 %v2865, %v2715
        %v2898 = vmul.f32 %v2866, %v2717
        %v2899 = vmul.f32 %v2867, %v2719
        %v2900 = vmul.f32 %v2868, %v2721
        %v2901 = vmul.f32 %v2869, %v2723
        %v2902 = vmul.f32 %v2870, %v2725
        %v2903 = vmul.f32 %v2871, %v2727
        %v2904 = vmul.f32 %v2872, %v2729
        %v2905 = vmul.f32 %v2873, %v2731
        %v2906 = vmul.f32 %v2874, %v2733
        %v2907 = vmul.f32 %v2875, %v2735
        %v2908 = vmul.f32 %v2876, %v2737
        %v2909 = vmul.f32 %v2877, %v2739
        %v2910 = vmul.f32 %v2878, %v2741
        %v2911 = vmul.f32 %v2879, %v2743
        %v2912 = vmul.f32 %v2880, %v2745
        %v2913 = vmul.f32 %v2881, %v2747
        %v2914 = vmul.f32 %v2882, %v2749
        %v2915 = vmul.f32 %v2883, %v2751
        %v2916 = vmul.f32 %v2884, %v2753
        %v2917 = vmul.f32 %v2885, %v2755
        %v2918 = vmul.f32 %v2886, %v2757
        %v2919 = vmul.f32 %v2887, %v2759
        %v2920 = vsub.f32 %v2793, %v2888
        %v2921 = vsub.f32 %v2795, %v2889
        %v2922 = vsub.f32 %v2797, %v2890
        %v2923 = vsub.f32 %v2799, %v2891
        %v2924 = vsub.f32 %v2801, %v2892
        %v2925 = vsub.f32 %v2803, %v2893
        %v2926 = vsub.f32 %v2805, %v2894
        %v2927 = vsub.f32 %v2807, %v2895
        %v2928 = vsub.f32 %v2809, %v2896
        %v2929 = vsub.f32 %v2811, %v2897
        %v2930 = vsub.f32 %v2813, %v2898
        %v2931 = vsub.f32 %v2815, %v2899
        %v2932 = vsub.f32 %v2817, %v2900
        %v2933 = vsub.f32 %v2819, %v2901
        %v2934 = vsub.f32 %v2821, %v2902
        %v2935 = vsub.f32 %v2823, %v2903
        %v2936 = vsub.f32 %v2825, %v2904
        %v2937 = vsub.f32 %v2827, %v2905
        %v2938 = vsub.f32 %v2829, %v2906
        %v2939 = vsub.f32 %v2831, %v2907
        %v2940 = vsub.f32 %v2833, %v2908
        %v2941 = vsub.f32 %v2835, %v2909
        %v2942 = vsub.f32 %v2837, %v2910
        %v2943 = vsub.f32 %v2839, %v2911
        %v2944 = vsub.f32 %v2841, %v2912
        %v2945 = vsub.f32 %v2843, %v2913
        %v2946 = vsub.f32 %v2845, %v2914
        %v2947 = vsub.f32 %v2847, %v2915
        %v2948 = vsub.f32 %v2849, %v2916
        %v2949 = vsub.f32 %v2851, %v2917
        %v2950 = vsub.f32 %v2853, %v2918
        %v2951 = vsub.f32 %v2855, %v2919
        %v2952 = vmax.f32 %v2920, 0.0
        %v2953 = vmax.f32 %v2921, 0.0
        %v2954 = vmax.f32 %v2922, 0.0
        %v2955 = vmax.f32 %v2923, 0.0
        %v2956 = vmax.f32 %v2924, 0.0
        %v2957 = vmax.f32 %v2925, 0.0
        %v2958 = vmax.f32 %v2926, 0.0
        %v2959 = vmax.f32 %v2927, 0.0
        %v2960 = vmax.f32 %v2928, 0.0
        %v2961 = vmax.f32 %v2929, 0.0
        %v2962 = vmax.f32 %v2930, 0.0
        %v2963 = vmax.f32 %v2931, 0.0
        %v2964 = vmax.f32 %v2932, 0.0
        %v2965 = vmax.f32 %v2933, 0.0
        %v2966 = vmax.f32 %v2934, 0.0
        %v2967 = vmax.f32 %v2935, 0.0
        %v2968 = vmax.f32 %v2936, 0.0
        %v2969 = vmax.f32 %v2937, 0.0
        %v2970 = vmax.f32 %v2938, 0.0
        %v2971 = vmax.f32 %v2939, 0.0
        %v2972 = vmax.f32 %v2940, 0.0
        %v2973 = vmax.f32 %v2941, 0.0
        %v2974 = vmax.f32 %v2942, 0.0
        %v2975 = vmax.f32 %v2943, 0.0
        %v2976 = vmax.f32 %v2944, 0.0
        %v2977 = vmax.f32 %v2945, 0.0
        %v2978 = vmax.f32 %v2946, 0.0
        %v2979 = vmax.f32 %v2947, 0.0
        %v2980 = vmax.f32 %v2948, 0.0
        %v2981 = vmax.f32 %v2949, 0.0
        %v2982 = vmax.f32 %v2950, 0.0
        %v2983 = vmax.f32 %v2951, 0.0
        %v2984 = vrsqrt.pop %v2952
        %v2985 = vmul.f32 %v2952, %v2984
        %vm2986 = vcmp.eq.f32.partialorder %v2952, inf
        %v2987 = vsel %vm2986, %v2952, %v2985
        %vm2988 = vcmp.eq.f32.partialorder %v2952, 0.0
        %v2989 = vand.u32 %v2952, 2147483648
        %v2990 = vsel %vm2988, %v2989, %v2987
        %v2991 = vrsqrt.pop %v2953
        %v2992 = vmul.f32 %v2953, %v2991
        %vm2993 = vcmp.eq.f32.partialorder %v2953, inf
        %v2994 = vsel %vm2993, %v2953, %v2992
        %vm2995 = vcmp.eq.f32.partialorder %v2953, 0.0
        %v2996 = vand.u32 %v2953, 2147483648
        %v2997 = vsel %vm2995, %v2996, %v2994
        %v2998 = vrsqrt.pop %v2954
        %v2999 = vmul.f32 %v2954, %v2998
        %vm3000 = vcmp.eq.f32.partialorder %v2954, inf
        %v3001 = vsel %vm3000, %v2954, %v2999
        %vm3002 = vcmp.eq.f32.partialorder %v2954, 0.0
        %v3003 = vand.u32 %v2954, 2147483648
        %v3004 = vsel %vm3002, %v3003, %v3001
        %v3005 = vrsqrt.pop %v2955
        %v3006 = vmul.f32 %v2955, %v3005
        %vm3007 = vcmp.eq.f32.partialorder %v2955, inf
        %v3008 = vsel %vm3007, %v2955, %v3006
        %vm3009 = vcmp.eq.f32.partialorder %v2955, 0.0
        %v3010 = vand.u32 %v2955, 2147483648
        %v3011 = vsel %vm3009, %v3010, %v3008
        %v3012 = vrsqrt.pop %v2956
        %v3013 = vmul.f32 %v2956, %v3012
        %vm3014 = vcmp.eq.f32.partialorder %v2956, inf
        %v3015 = vsel %vm3014, %v2956, %v3013
        %vm3016 = vcmp.eq.f32.partialorder %v2956, 0.0
        %v3017 = vand.u32 %v2956, 2147483648
        %v3018 = vsel %vm3016, %v3017, %v3015
        %v3019 = vrsqrt.pop %v2957
        %v3020 = vmul.f32 %v2957, %v3019
        %vm3021 = vcmp.eq.f32.partialorder %v2957, inf
        %v3022 = vsel %vm3021, %v2957, %v3020
        %vm3023 = vcmp.eq.f32.partialorder %v2957, 0.0
        %v3024 = vand.u32 %v2957, 2147483648
        %v3025 = vsel %vm3023, %v3024, %v3022
        %v3026 = vrsqrt.pop %v2958
        %v3027 = vmul.f32 %v2958, %v3026
        %vm3028 = vcmp.eq.f32.partialorder %v2958, inf
        %v3029 = vsel %vm3028, %v2958, %v3027
        %vm3030 = vcmp.eq.f32.partialorder %v2958, 0.0
        %v3031 = vand.u32 %v2958, 2147483648
        %v3032 = vsel %vm3030, %v3031, %v3029
        %v3033 = vrsqrt.pop %v2959
        %v3034 = vmul.f32 %v2959, %v3033
        %vm3035 = vcmp.eq.f32.partialorder %v2959, inf
        %v3036 = vsel %vm3035, %v2959, %v3034
        %vm3037 = vcmp.eq.f32.partialorder %v2959, 0.0
        %v3038 = vand.u32 %v2959, 2147483648
        %v3039 = vsel %vm3037, %v3038, %v3036
        %v3040 = vrsqrt.pop %v2960
        %v3041 = vmul.f32 %v2960, %v3040
        %vm3042 = vcmp.eq.f32.partialorder %v2960, inf
        %v3043 = vsel %vm3042, %v2960, %v3041
        %vm3044 = vcmp.eq.f32.partialorder %v2960, 0.0
        %v3045 = vand.u32 %v2960, 2147483648
        %v3046 = vsel %vm3044, %v3045, %v3043
        %v3047 = vrsqrt.pop %v2961
        %v3048 = vmul.f32 %v2961, %v3047
        %vm3049 = vcmp.eq.f32.partialorder %v2961, inf
        %v3050 = vsel %vm3049, %v2961, %v3048
        %vm3051 = vcmp.eq.f32.partialorder %v2961, 0.0
        %v3052 = vand.u32 %v2961, 2147483648
        %v3053 = vsel %vm3051, %v3052, %v3050
        %v3054 = vrsqrt.pop %v2962
        %v3055 = vmul.f32 %v2962, %v3054
        %vm3056 = vcmp.eq.f32.partialorder %v2962, inf
        %v3057 = vsel %vm3056, %v2962, %v3055
        %vm3058 = vcmp.eq.f32.partialorder %v2962, 0.0
        %v3059 = vand.u32 %v2962, 2147483648
        %v3060 = vsel %vm3058, %v3059, %v3057
        %v3061 = vrsqrt.pop %v2963
        %v3062 = vmul.f32 %v2963, %v3061
        %vm3063 = vcmp.eq.f32.partialorder %v2963, inf
        %v3064 = vsel %vm3063, %v2963, %v3062
        %vm3065 = vcmp.eq.f32.partialorder %v2963, 0.0
        %v3066 = vand.u32 %v2963, 2147483648
        %v3067 = vsel %vm3065, %v3066, %v3064
        %v3068 = vrsqrt.pop %v2964
        %v3069 = vmul.f32 %v2964, %v3068
        %vm3070 = vcmp.eq.f32.partialorder %v2964, inf
        %v3071 = vsel %vm3070, %v2964, %v3069
        %vm3072 = vcmp.eq.f32.partialorder %v2964, 0.0
        %v3073 = vand.u32 %v2964, 2147483648
        %v3074 = vsel %vm3072, %v3073, %v3071
        %v3075 = vrsqrt.pop %v2965
        %v3076 = vmul.f32 %v2965, %v3075
        %vm3077 = vcmp.eq.f32.partialorder %v2965, inf
        %v3078 = vsel %vm3077, %v2965, %v3076
        %vm3079 = vcmp.eq.f32.partialorder %v2965, 0.0
        %v3080 = vand.u32 %v2965, 2147483648
        %v3081 = vsel %vm3079, %v3080, %v3078
        %v3082 = vrsqrt.pop %v2966
        %v3083 = vmul.f32 %v2966, %v3082
        %vm3084 = vcmp.eq.f32.partialorder %v2966, inf
        %v3085 = vsel %vm3084, %v2966, %v3083
        %vm3086 = vcmp.eq.f32.partialorder %v2966, 0.0
        %v3087 = vand.u32 %v2966, 2147483648
        %v3088 = vsel %vm3086, %v3087, %v3085
        %v3089 = vrsqrt.pop %v2967
        %v3090 = vmul.f32 %v2967, %v3089
        %vm3091 = vcmp.eq.f32.partialorder %v2967, inf
        %v3092 = vsel %vm3091, %v2967, %v3090
        %vm3093 = vcmp.eq.f32.partialorder %v2967, 0.0
        %v3094 = vand.u32 %v2967, 2147483648
        %v3095 = vsel %vm3093, %v3094, %v3092
        %v3096 = vrsqrt.pop %v2968
        %v3097 = vmul.f32 %v2968, %v3096
        %vm3098 = vcmp.eq.f32.partialorder %v2968, inf
        %v3099 = vsel %vm3098, %v2968, %v3097
        %vm3100 = vcmp.eq.f32.partialorder %v2968, 0.0
        %v3101 = vand.u32 %v2968, 2147483648
        %v3102 = vsel %vm3100, %v3101, %v3099
        %v3103 = vrsqrt.pop %v2969
        %v3104 = vmul.f32 %v2969, %v3103
        %vm3105 = vcmp.eq.f32.partialorder %v2969, inf
        %v3106 = vsel %vm3105, %v2969, %v3104
        %vm3107 = vcmp.eq.f32.partialorder %v2969, 0.0
        %v3108 = vand.u32 %v2969, 2147483648
        %v3109 = vsel %vm3107, %v3108, %v3106
        %v3110 = vrsqrt.pop %v2970
        %v3111 = vmul.f32 %v2970, %v3110
        %vm3112 = vcmp.eq.f32.partialorder %v2970, inf
        %v3113 = vsel %vm3112, %v2970, %v3111
        %vm3114 = vcmp.eq.f32.partialorder %v2970, 0.0
        %v3115 = vand.u32 %v2970, 2147483648
        %v3116 = vsel %vm3114, %v3115, %v3113
        %v3117 = vrsqrt.pop %v2971
        %v3118 = vmul.f32 %v2971, %v3117
        %vm3119 = vcmp.eq.f32.partialorder %v2971, inf
        %v3120 = vsel %vm3119, %v2971, %v3118
        %vm3121 = vcmp.eq.f32.partialorder %v2971, 0.0
        %v3122 = vand.u32 %v2971, 2147483648
        %v3123 = vsel %vm3121, %v3122, %v3120
        %v3124 = vrsqrt.pop %v2972
        %v3125 = vmul.f32 %v2972, %v3124
        %vm3126 = vcmp.eq.f32.partialorder %v2972, inf
        %v3127 = vsel %vm3126, %v2972, %v3125
        %vm3128 = vcmp.eq.f32.partialorder %v2972, 0.0
        %v3129 = vand.u32 %v2972, 2147483648
        %v3130 = vsel %vm3128, %v3129, %v3127
        %v3131 = vrsqrt.pop %v2973
        %v3132 = vmul.f32 %v2973, %v3131
        %vm3133 = vcmp.eq.f32.partialorder %v2973, inf
        %v3134 = vsel %vm3133, %v2973, %v3132
        %vm3135 = vcmp.eq.f32.partialorder %v2973, 0.0
        %v3136 = vand.u32 %v2973, 2147483648
        %v3137 = vsel %vm3135, %v3136, %v3134
        %v3138 = vrsqrt.pop %v2974
        %v3139 = vmul.f32 %v2974, %v3138
        %vm3140 = vcmp.eq.f32.partialorder %v2974, inf
        %v3141 = vsel %vm3140, %v2974, %v3139
        %vm3142 = vcmp.eq.f32.partialorder %v2974, 0.0
        %v3143 = vand.u32 %v2974, 2147483648
        %v3144 = vsel %vm3142, %v3143, %v3141
        %v3145 = vrsqrt.pop %v2975
        %v3146 = vmul.f32 %v2975, %v3145
        %vm3147 = vcmp.eq.f32.partialorder %v2975, inf
        %v3148 = vsel %vm3147, %v2975, %v3146
        %vm3149 = vcmp.eq.f32.partialorder %v2975, 0.0
        %v3150 = vand.u32 %v2975, 2147483648
        %v3151 = vsel %vm3149, %v3150, %v3148
        %v3152 = vrsqrt.pop %v2976
        %v3153 = vmul.f32 %v2976, %v3152
        %vm3154 = vcmp.eq.f32.partialorder %v2976, inf
        %v3155 = vsel %vm3154, %v2976, %v3153
        %vm3156 = vcmp.eq.f32.partialorder %v2976, 0.0
        %v3157 = vand.u32 %v2976, 2147483648
        %v3158 = vsel %vm3156, %v3157, %v3155
        %v3159 = vrsqrt.pop %v2977
        %v3160 = vmul.f32 %v2977, %v3159
        %vm3161 = vcmp.eq.f32.partialorder %v2977, inf
        %v3162 = vsel %vm3161, %v2977, %v3160
        %vm3163 = vcmp.eq.f32.partialorder %v2977, 0.0
        %v3164 = vand.u32 %v2977, 2147483648
        %v3165 = vsel %vm3163, %v3164, %v3162
        %v3166 = vrsqrt.pop %v2978
        %v3167 = vmul.f32 %v2978, %v3166
        %vm3168 = vcmp.eq.f32.partialorder %v2978, inf
        %v3169 = vsel %vm3168, %v2978, %v3167
        %vm3170 = vcmp.eq.f32.partialorder %v2978, 0.0
        %v3171 = vand.u32 %v2978, 2147483648
        %v3172 = vsel %vm3170, %v3171, %v3169
        %v3173 = vrsqrt.pop %v2979
        %v3174 = vmul.f32 %v2979, %v3173
        %vm3175 = vcmp.eq.f32.partialorder %v2979, inf
        %v3176 = vsel %vm3175, %v2979, %v3174
        %vm3177 = vcmp.eq.f32.partialorder %v2979, 0.0
        %v3178 = vand.u32 %v2979, 2147483648
        %v3179 = vsel %vm3177, %v3178, %v3176
        %v3180 = vrsqrt.pop %v2980
        %v3181 = vmul.f32 %v2980, %v3180
        %vm3182 = vcmp.eq.f32.partialorder %v2980, inf
        %v3183 = vsel %vm3182, %v2980, %v3181
        %vm3184 = vcmp.eq.f32.partialorder %v2980, 0.0
        %v3185 = vand.u32 %v2980, 2147483648
        %v3186 = vsel %vm3184, %v3185, %v3183
        %v3187 = vrsqrt.pop %v2981
        %v3188 = vmul.f32 %v2981, %v3187
        %vm3189 = vcmp.eq.f32.partialorder %v2981, inf
        %v3190 = vsel %vm3189, %v2981, %v3188
        %vm3191 = vcmp.eq.f32.partialorder %v2981, 0.0
        %v3192 = vand.u32 %v2981, 2147483648
        %v3193 = vsel %vm3191, %v3192, %v3190
        %v3194 = vrsqrt.pop %v2982
        %v3195 = vmul.f32 %v2982, %v3194
        %vm3196 = vcmp.eq.f32.partialorder %v2982, inf
        %v3197 = vsel %vm3196, %v2982, %v3195
        %vm3198 = vcmp.eq.f32.partialorder %v2982, 0.0
        %v3199 = vand.u32 %v2982, 2147483648
        %v3200 = vsel %vm3198, %v3199, %v3197
        %v3201 = vrsqrt.pop %v2983
        %v3202 = vmul.f32 %v2983, %v3201
        %vm3203 = vcmp.eq.f32.partialorder %v2983, inf
        %v3204 = vsel %vm3203, %v2983, %v3202
        %vm3205 = vcmp.eq.f32.partialorder %v2983, 0.0
        %v3206 = vand.u32 %v2983, 2147483648
        %v3207 = vsel %vm3205, %v3206, %v3204
        %v3208 = vmul.f32 %v2990, 1.442695
        %v3209 = vpow.pop %v3208
        %v3210 = vmul.f32 %v2997, 1.442695
        %v3211 = vpow.pop %v3210
        %v3212 = vmul.f32 %v3004, 1.442695
        %v3213 = vpow.pop %v3212
        %v3214 = vmul.f32 %v3011, 1.442695
        %v3215 = vpow.pop %v3214
        %v3216 = vmul.f32 %v3018, 1.442695
        %v3217 = vpow.pop %v3216
        %v3218 = vmul.f32 %v3025, 1.442695
        %v3219 = vpow.pop %v3218
        %v3220 = vmul.f32 %v3032, 1.442695
        %v3221 = vpow.pop %v3220
        %v3222 = vmul.f32 %v3039, 1.442695
        %v3223 = vpow.pop %v3222
        %v3224 = vmul.f32 %v3046, 1.442695
        %v3225 = vpow.pop %v3224
        %v3226 = vmul.f32 %v3053, 1.442695
        %v3227 = vpow.pop %v3226
        %v3228 = vmul.f32 %v3060, 1.442695
        %v3229 = vpow.pop %v3228
        %v3230 = vmul.f32 %v3067, 1.442695
        %v3231 = vpow.pop %v3230
        %v3232 = vmul.f32 %v3074, 1.442695
        %v3233 = vpow.pop %v3232
        %v3234 = vmul.f32 %v3081, 1.442695
        %v3235 = vpow.pop %v3234
        %v3236 = vmul.f32 %v3088, 1.442695
        %v3237 = vpow.pop %v3236
        %v3238 = vmul.f32 %v3095, 1.442695
        %v3239 = vpow.pop %v3238
        %v3240 = vmul.f32 %v3102, 1.442695
        %v3241 = vpow.pop %v3240
        %v3242 = vmul.f32 %v3109, 1.442695
        %v3243 = vpow.pop %v3242
        %v3244 = vmul.f32 %v3116, 1.442695
        %v3245 = vpow.pop %v3244
        %v3246 = vmul.f32 %v3123, 1.442695
        %v3247 = vpow.pop %v3246
        %v3248 = vmul.f32 %v3130, 1.442695
        %v3249 = vpow.pop %v3248
        %v3250 = vmul.f32 %v3137, 1.442695
        %v3251 = vpow.pop %v3250
        %v3252 = vmul.f32 %v3144, 1.442695
        %v3253 = vpow.pop %v3252
        %v3254 = vmul.f32 %v3151, 1.442695
        %v3255 = vpow.pop %v3254
        %v3256 = vmul.f32 %v3158, 1.442695
        %v3257 = vpow.pop %v3256
        %v3258 = vmul.f32 %v3165, 1.442695
        %v3259 = vpow.pop %v3258
        %v3260 = vmul.f32 %v3172, 1.442695
        %v3261 = vpow.pop %v3260
        %v3262 = vmul.f32 %v3179, 1.442695
        %v3263 = vpow.pop %v3262
        %v3264 = vmul.f32 %v3186, 1.442695
        %v3265 = vpow.pop %v3264
        %v3266 = vmul.f32 %v3193, 1.442695
        %v3267 = vpow.pop %v3266
        %v3268 = vmul.f32 %v3200, 1.442695
        %v3269 = vpow.pop %v3268
        %v3270 = vmul.f32 %v3207, 1.442695
        %v3271 = vpow.pop %v3270
        %v3272 = vrcp.pop %v3209
        %v3273 = vrcp.pop %v3211
        %v3274 = vrcp.pop %v3213
        %v3275 = vrcp.pop %v3215
        %v3276 = vrcp.pop %v3217
        %v3277 = vrcp.pop %v3219
        %v3278 = vrcp.pop %v3221
        %v3279 = vrcp.pop %v3223
        %v3280 = vrcp.pop %v3225
        %v3281 = vrcp.pop %v3227
        %v3282 = vrcp.pop %v3229
        %v3283 = vrcp.pop %v3231
        %v3284 = vrcp.pop %v3233
        %v3285 = vrcp.pop %v3235
        %v3286 = vrcp.pop %v3237
        %v3287 = vrcp.pop %v3239
        %v3288 = vrcp.pop %v3241
        %v3289 = vrcp.pop %v3243
        %v3290 = vrcp.pop %v3245
        %v3291 = vrcp.pop %v3247
        %v3292 = vrcp.pop %v3249
        %v3293 = vrcp.pop %v3251
        %v3294 = vrcp.pop %v3253
        %v3295 = vrcp.pop %v3255
        %v3296 = vrcp.pop %v3257
        %v3297 = vrcp.pop %v3259
        %v3298 = vrcp.pop %v3261
        %v3299 = vrcp.pop %v3263
        %v3300 = vrcp.pop %v3265
        %v3301 = vrcp.pop %v3267
        %v3302 = vrcp.pop %v3269
        %v3303 = vrcp.pop %v3271
        %v3304 = vadd.f32 %v3209, %v3272
        %v3305 = vadd.f32 %v3211, %v3273
        %v3306 = vadd.f32 %v3213, %v3274
        %v3307 = vadd.f32 %v3215, %v3275
        %v3308 = vadd.f32 %v3217, %v3276
        %v3309 = vadd.f32 %v3219, %v3277
        %v3310 = vadd.f32 %v3221, %v3278
        %v3311 = vadd.f32 %v3223, %v3279
        %v3312 = vadd.f32 %v3225, %v3280
        %v3313 = vadd.f32 %v3227, %v3281
        %v3314 = vadd.f32 %v3229, %v3282
        %v3315 = vadd.f32 %v3231, %v3283
        %v3316 = vadd.f32 %v3233, %v3284
        %v3317 = vadd.f32 %v3235, %v3285
        %v3318 = vadd.f32 %v3237, %v3286
        %v3319 = vadd.f32 %v3239, %v3287
        %v3320 = vadd.f32 %v3241, %v3288
        %v3321 = vadd.f32 %v3243, %v3289
        %v3322 = vadd.f32 %v3245, %v3290
        %v3323 = vadd.f32 %v3247, %v3291
        %v3324 = vadd.f32 %v3249, %v3292
        %v3325 = vadd.f32 %v3251, %v3293
        %v3326 = vadd.f32 %v3253, %v3294
        %v3327 = vadd.f32 %v3255, %v3295
        %v3328 = vadd.f32 %v3257, %v3296
        %v3329 = vadd.f32 %v3259, %v3297
        %v3330 = vadd.f32 %v3261, %v3298
        %v3331 = vadd.f32 %v3263, %v3299
        %v3332 = vadd.f32 %v3265, %v3300
        %v3333 = vadd.f32 %v3267, %v3301
        %v3334 = vadd.f32 %v3269, %v3302
        %v3335 = vadd.f32 %v3271, %v3303
        %v3336 = vmul.f32 %v3304, 0.5
        %v3337 = vmul.f32 %v3305, 0.5
        %v3338 = vmul.f32 %v3306, 0.5
        %v3339 = vmul.f32 %v3307, 0.5
        %v3340 = vmul.f32 %v3308, 0.5
        %v3341 = vmul.f32 %v3309, 0.5
        %v3342 = vmul.f32 %v3310, 0.5
        %v3343 = vmul.f32 %v3311, 0.5
        %v3344 = vmul.f32 %v3312, 0.5
        %v3345 = vmul.f32 %v3313, 0.5
        %v3346 = vmul.f32 %v3314, 0.5
        %v3347 = vmul.f32 %v3315, 0.5
        %v3348 = vmul.f32 %v3316, 0.5
        %v3349 = vmul.f32 %v3317, 0.5
        %v3350 = vmul.f32 %v3318, 0.5
        %v3351 = vmul.f32 %v3319, 0.5
        %v3352 = vmul.f32 %v3320, 0.5
        %v3353 = vmul.f32 %v3321, 0.5
        %v3354 = vmul.f32 %v3322, 0.5
        %v3355 = vmul.f32 %v3323, 0.5
        %v3356 = vmul.f32 %v3324, 0.5
        %v3357 = vmul.f32 %v3325, 0.5
        %v3358 = vmul.f32 %v3326, 0.5
        %v3359 = vmul.f32 %v3327, 0.5
        %v3360 = vmul.f32 %v3328, 0.5
        %v3361 = vmul.f32 %v3329, 0.5
        %v3362 = vmul.f32 %v3330, 0.5
        %v3363 = vmul.f32 %v3331, 0.5
        %v3364 = vmul.f32 %v3332, 0.5
        %v3365 = vmul.f32 %v3333, 0.5
        %v3366 = vmul.f32 %v3334, 0.5
        %v3367 = vmul.f32 %v3335, 0.5
        %v3368 = vsub.f32 %v3209, %v3272
        %v3369 = vsub.f32 %v3211, %v3273
        %v3370 = vsub.f32 %v3213, %v3274
        %v3371 = vsub.f32 %v3215, %v3275
        %v3372 = vsub.f32 %v3217, %v3276
        %v3373 = vsub.f32 %v3219, %v3277
        %v3374 = vsub.f32 %v3221, %v3278
        %v3375 = vsub.f32 %v3223, %v3279
        %v3376 = vsub.f32 %v3225, %v3280
        %v3377 = vsub.f32 %v3227, %v3281
        %v3378 = vsub.f32 %v3229, %v3282
        %v3379 = vsub.f32 %v3231, %v3283
        %v3380 = vsub.f32 %v3233, %v3284
        %v3381 = vsub.f32 %v3235, %v3285
        %v3382 = vsub.f32 %v3237, %v3286
        %v3383 = vsub.f32 %v3239, %v3287
        %v3384 = vsub.f32 %v3241, %v3288
        %v3385 = vsub.f32 %v3243, %v3289
        %v3386 = vsub.f32 %v3245, %v3290
        %v3387 = vsub.f32 %v3247, %v3291
        %v3388 = vsub.f32 %v3249, %v3292
        %v3389 = vsub.f32 %v3251, %v3293
        %v3390 = vsub.f32 %v3253, %v3294
        %v3391 = vsub.f32 %v3255, %v3295
        %v3392 = vsub.f32 %v3257, %v3296
        %v3393 = vsub.f32 %v3259, %v3297
        %v3394 = vsub.f32 %v3261, %v3298
        %v3395 = vsub.f32 %v3263, %v3299
        %v3396 = vsub.f32 %v3265, %v3300
        %v3397 = vsub.f32 %v3267, %v3301
        %v3398 = vsub.f32 %v3269, %v3302
        %v3399 = vsub.f32 %v3271, %v3303
        %v3400 = vmul.f32 %v3368, 0.5
        %v3401 = vmul.f32 %v3369, 0.5
        %v3402 = vmul.f32 %v3370, 0.5
        %v3403 = vmul.f32 %v3371, 0.5
        %v3404 = vmul.f32 %v3372, 0.5
        %v3405 = vmul.f32 %v3373, 0.5
        %v3406 = vmul.f32 %v3374, 0.5
        %v3407 = vmul.f32 %v3375, 0.5
        %v3408 = vmul.f32 %v3376, 0.5
        %v3409 = vmul.f32 %v3377, 0.5
        %v3410 = vmul.f32 %v3378, 0.5
        %v3411 = vmul.f32 %v3379, 0.5
        %v3412 = vmul.f32 %v3380, 0.5
        %v3413 = vmul.f32 %v3381, 0.5
        %v3414 = vmul.f32 %v3382, 0.5
        %v3415 = vmul.f32 %v3383, 0.5
        %v3416 = vmul.f32 %v3384, 0.5
        %v3417 = vmul.f32 %v3385, 0.5
        %v3418 = vmul.f32 %v3386, 0.5
        %v3419 = vmul.f32 %v3387, 0.5
        %v3420 = vmul.f32 %v3388, 0.5
        %v3421 = vmul.f32 %v3389, 0.5
        %v3422 = vmul.f32 %v3390, 0.5
        %v3423 = vmul.f32 %v3391, 0.5
        %v3424 = vmul.f32 %v3392, 0.5
        %v3425 = vmul.f32 %v3393, 0.5
        %v3426 = vmul.f32 %v3394, 0.5
        %v3427 = vmul.f32 %v3395, 0.5
        %v3428 = vmul.f32 %v3396, 0.5
        %v3429 = vmul.f32 %v3397, 0.5
        %v3430 = vmul.f32 %v3398, 0.5
        %v3431 = vmul.f32 %v3399, 0.5
        %v3432 = vmul.f32 %v3336, %v2211
        %v3433 = vmul.f32 %v3337, %v2212
        %v3434 = vmul.f32 %v3338, %v2213
        %v3435 = vmul.f32 %v3339, %v2214
        %v3436 = vmul.f32 %v3340, %v2215
        %v3437 = vmul.f32 %v3341, %v2216
        %v3438 = vmul.f32 %v3342, %v2217
        %v3439 = vmul.f32 %v3343, %v2218
        %v3440 = vmul.f32 %v3344, %v2219
        %v3441 = vmul.f32 %v3345, %v2220
        %v3442 = vmul.f32 %v3346, %v2221
        %v3443 = vmul.f32 %v3347, %v2222
        %v3444 = vmul.f32 %v3348, %v2223
        %v3445 = vmul.f32 %v3349, %v2224
        %v3446 = vmul.f32 %v3350, %v2225
        %v3447 = vmul.f32 %v3351, %v2226
        %v3448 = vmul.f32 %v3352, %v2227
        %v3449 = vmul.f32 %v3353, %v2228
        %v3450 = vmul.f32 %v3354, %v2229
        %v3451 = vmul.f32 %v3355, %v2230
        %v3452 = vmul.f32 %v3356, %v2231
        %v3453 = vmul.f32 %v3357, %v2232
        %v3454 = vmul.f32 %v3358, %v2233
        %v3455 = vmul.f32 %v3359, %v2234
        %v3456 = vmul.f32 %v3360, %v2235
        %v3457 = vmul.f32 %v3361, %v2236
        %v3458 = vmul.f32 %v3362, %v2237
        %v3459 = vmul.f32 %v3363, %v2238
        %v3460 = vmul.f32 %v3364, %v2239
        %v3461 = vmul.f32 %v3365, %v2240
        %v3462 = vmul.f32 %v3366, %v2241
        %v3463 = vmul.f32 %v3367, %v2242
        %v3464 = vmul.f32 %v3400, %v2632
        %v3465 = vmul.f32 %v3401, %v2633
        %v3466 = vmul.f32 %v3402, %v2634
        %v3467 = vmul.f32 %v3403, %v2635
        %v3468 = vmul.f32 %v3404, %v2636
        %v3469 = vmul.f32 %v3405, %v2637
        %v3470 = vmul.f32 %v3406, %v2638
        %v3471 = vmul.f32 %v3407, %v2639
        %v3472 = vmul.f32 %v3408, %v2640
        %v3473 = vmul.f32 %v3409, %v2641
        %v3474 = vmul.f32 %v3410, %v2642
        %v3475 = vmul.f32 %v3411, %v2643
        %v3476 = vmul.f32 %v3412, %v2644
        %v3477 = vmul.f32 %v3413, %v2645
        %v3478 = vmul.f32 %v3414, %v2646
        %v3479 = vmul.f32 %v3415, %v2647
        %v3480 = vmul.f32 %v3416, %v2648
        %v3481 = vmul.f32 %v3417, %v2649
        %v3482 = vmul.f32 %v3418, %v2650
        %v3483 = vmul.f32 %v3419, %v2651
        %v3484 = vmul.f32 %v3420, %v2652
        %v3485 = vmul.f32 %v3421, %v2653
        %v3486 = vmul.f32 %v3422, %v2654
        %v3487 = vmul.f32 %v3423, %v2655
        %v3488 = vmul.f32 %v3424, %v2656
        %v3489 = vmul.f32 %v3425, %v2657
        %v3490 = vmul.f32 %v3426, %v2658
        %v3491 = vmul.f32 %v3427, %v2659
        %v3492 = vmul.f32 %v3428, %v2660
        %v3493 = vmul.f32 %v3429, %v2661
        %v3494 = vmul.f32 %v3430, %v2662
        %v3495 = vmul.f32 %v3431, %v2663
        %v3496 = vmax.f32 %v2990, 1e-07
        %v3497 = vmax.f32 %v2997, 1e-07
        %v3498 = vmax.f32 %v3004, 1e-07
        %v3499 = vmax.f32 %v3011, 1e-07
        %v3500 = vmax.f32 %v3018, 1e-07
        %v3501 = vmax.f32 %v3025, 1e-07
        %v3502 = vmax.f32 %v3032, 1e-07
        %v3503 = vmax.f32 %v3039, 1e-07
        %v3504 = vmax.f32 %v3046, 1e-07
        %v3505 = vmax.f32 %v3053, 1e-07
        %v3506 = vmax.f32 %v3060, 1e-07
        %v3507 = vmax.f32 %v3067, 1e-07
        %v3508 = vmax.f32 %v3074, 1e-07
        %v3509 = vmax.f32 %v3081, 1e-07
        %v3510 = vmax.f32 %v3088, 1e-07
        %v3511 = vmax.f32 %v3095, 1e-07
        %v3512 = vmax.f32 %v3102, 1e-07
        %v3513 = vmax.f32 %v3109, 1e-07
        %v3514 = vmax.f32 %v3116, 1e-07
        %v3515 = vmax.f32 %v3123, 1e-07
        %v3516 = vmax.f32 %v3130, 1e-07
        %v3517 = vmax.f32 %v3137, 1e-07
        %v3518 = vmax.f32 %v3144, 1e-07
        %v3519 = vmax.f32 %v3151, 1e-07
        %v3520 = vmax.f32 %v3158, 1e-07
        %v3521 = vmax.f32 %v3165, 1e-07
        %v3522 = vmax.f32 %v3172, 1e-07
        %v3523 = vmax.f32 %v3179, 1e-07
        %v3524 = vmax.f32 %v3186, 1e-07
        %v3525 = vmax.f32 %v3193, 1e-07
        %v3526 = vmax.f32 %v3200, 1e-07
        %v3527 = vmax.f32 %v3207, 1e-07
        %v3528 = vrcp.pop %v3496
        %v3529 = vmul.f32 %v3464, %v3528
        %v3530 = vrcp.pop %v3497
        %v3531 = vmul.f32 %v3465, %v3530
        %v3532 = vrcp.pop %v3498
        %v3533 = vmul.f32 %v3466, %v3532
        %v3534 = vrcp.pop %v3499
        %v3535 = vmul.f32 %v3467, %v3534
        %v3536 = vrcp.pop %v3500
        %v3537 = vmul.f32 %v3468, %v3536
        %v3538 = vrcp.pop %v3501
        %v3539 = vmul.f32 %v3469, %v3538
        %v3540 = vrcp.pop %v3502
        %v3541 = vmul.f32 %v3470, %v3540
        %v3542 = vrcp.pop %v3503
        %v3543 = vmul.f32 %v3471, %v3542
        %v3544 = vrcp.pop %v3504
        %v3545 = vmul.f32 %v3472, %v3544
        %v3546 = vrcp.pop %v3505
        %v3547 = vmul.f32 %v3473, %v3546
        %v3548 = vrcp.pop %v3506
        %v3549 = vmul.f32 %v3474, %v3548
        %v3550 = vrcp.pop %v3507
        %v3551 = vmul.f32 %v3475, %v3550
        %v3552 = vrcp.pop %v3508
        %v3553 = vmul.f32 %v3476, %v3552
        %v3554 = vrcp.pop %v3509
        %v3555 = vmul.f32 %v3477, %v3554
        %v3556 = vrcp.pop %v3510
        %v3557 = vmul.f32 %v3478, %v3556
        %v3558 = vrcp.pop %v3511
        %v3559 = vmul.f32 %v3479, %v3558
        %v3560 = vrcp.pop %v3512
        %v3561 = vmul.f32 %v3480, %v3560
        %v3562 = vrcp.pop %v3513
        %v3563 = vmul.f32 %v3481, %v3562
        %v3564 = vrcp.pop %v3514
        %v3565 = vmul.f32 %v3482, %v3564
        %v3566 = vrcp.pop %v3515
        %v3567 = vmul.f32 %v3483, %v3566
        %v3568 = vrcp.pop %v3516
        %v3569 = vmul.f32 %v3484, %v3568
        %v3570 = vrcp.pop %v3517
        %v3571 = vmul.f32 %v3485, %v3570
        %v3572 = vrcp.pop %v3518
        %v3573 = vmul.f32 %v3486, %v3572
        %v3574 = vrcp.pop %v3519
        %v3575 = vmul.f32 %v3487, %v3574
        %v3576 = vrcp.pop %v3520
        %v3577 = vmul.f32 %v3488, %v3576
        %v3578 = vrcp.pop %v3521
        %v3579 = vmul.f32 %v3489, %v3578
        %v3580 = vrcp.pop %v3522
        %v3581 = vmul.f32 %v3490, %v3580
        %v3582 = vrcp.pop %v3523
        %v3583 = vmul.f32 %v3491, %v3582
        %v3584 = vrcp.pop %v3524
        %v3585 = vmul.f32 %v3492, %v3584
        %v3586 = vrcp.pop %v3525
        %v3587 = vmul.f32 %v3493, %v3586
        %v3588 = vrcp.pop %v3526
        %v3589 = vmul.f32 %v3494, %v3588
        %v3590 = vrcp.pop %v3527
        %v3591 = vmul.f32 %v3495, %v3590
        %v3592 = vadd.f32 %v3432, %v3529
        %v3593 = vadd.f32 %v3433, %v3531
        %v3594 = vadd.f32 %v3434, %v3533
        %v3595 = vadd.f32 %v3435, %v3535
        %v3596 = vadd.f32 %v3436, %v3537
        %v3597 = vadd.f32 %v3437, %v3539
        %v3598 = vadd.f32 %v3438, %v3541
        %v3599 = vadd.f32 %v3439, %v3543
        %v3600 = vadd.f32 %v3440, %v3545
        %v3601 = vadd.f32 %v3441, %v3547
        %v3602 = vadd.f32 %v3442, %v3549
        %v3603 = vadd.f32 %v3443, %v3551
        %v3604 = vadd.f32 %v3444, %v3553
        %v3605 = vadd.f32 %v3445, %v3555
        %v3606 = vadd.f32 %v3446, %v3557
        %v3607 = vadd.f32 %v3447, %v3559
        %v3608 = vadd.f32 %v3448, %v3561
        %v3609 = vadd.f32 %v3449, %v3563
        %v3610 = vadd.f32 %v3450, %v3565
        %v3611 = vadd.f32 %v3451, %v3567
        %v3612 = vadd.f32 %v3452, %v3569
        %v3613 = vadd.f32 %v3453, %v3571
        %v3614 = vadd.f32 %v3454, %v3573
        %v3615 = vadd.f32 %v3455, %v3575
        %v3616 = vadd.f32 %v3456, %v3577
        %v3617 = vadd.f32 %v3457, %v3579
        %v3618 = vadd.f32 %v3458, %v3581
        %v3619 = vadd.f32 %v3459, %v3583
        %v3620 = vadd.f32 %v3460, %v3585
        %v3621 = vadd.f32 %v3461, %v3587
        %v3622 = vadd.f32 %v3462, %v3589
        %v3623 = vadd.f32 %v3463, %v3591
        %3624 = vst [vmem:[%s203] sm:$0xff] %v3592
        %3625 = vst [vmem:[%s203 + $0x8] sm:$0xff] %v3593
        %3626 = vst [vmem:[%s203 + $0x10] sm:$0xff] %v3594
        %3627 = vst [vmem:[%s203 + $0x18] sm:$0xff] %v3595
        %3628 = vst [vmem:[%s203 + $0x20] sm:$0xff] %v3596
        %3629 = vst [vmem:[%s203 + $0x28] sm:$0xff] %v3597
        %3630 = vst [vmem:[%s203 + $0x30] sm:$0xff] %v3598
        %3631 = vst [vmem:[%s203 + $0x38] sm:$0xff] %v3599
        %3632 = vst [vmem:[%s203 + $0x40] sm:$0xff] %v3600
        %3633 = vst [vmem:[%s203 + $0x48] sm:$0xff] %v3601
        %3634 = vst [vmem:[%s203 + $0x50] sm:$0xff] %v3602
        %3635 = vst [vmem:[%s203 + $0x58] sm:$0xff] %v3603
        %3636 = vst [vmem:[%s203 + $0x60] sm:$0xff] %v3604
        %3637 = vst [vmem:[%s203 + $0x68] sm:$0xff] %v3605
        %3638 = vst [vmem:[%s203 + $0x70] sm:$0xff] %v3606
        %3639 = vst [vmem:[%s203 + $0x78] sm:$0xff] %v3607
        %3640 = vst [vmem:[%s203 + $0x80] sm:$0xff] %v3608
        %3641 = vst [vmem:[%s203 + $0x88] sm:$0xff] %v3609
        %3642 = vst [vmem:[%s203 + $0x90] sm:$0xff] %v3610
        %3643 = vst [vmem:[%s203 + $0x98] sm:$0xff] %v3611
        %3644 = vst [vmem:[%s203 + $0xa0] sm:$0xff] %v3612
        %3645 = vst [vmem:[%s203 + $0xa8] sm:$0xff] %v3613
        %3646 = vst [vmem:[%s203 + $0xb0] sm:$0xff] %v3614
        %3647 = vst [vmem:[%s203 + $0xb8] sm:$0xff] %v3615
        %3648 = vst [vmem:[%s203 + $0xc0] sm:$0xff] %v3616
        %3649 = vst [vmem:[%s203 + $0xc8] sm:$0xff] %v3617
        %3650 = vst [vmem:[%s203 + $0xd0] sm:$0xff] %v3618
        %3651 = vst [vmem:[%s203 + $0xd8] sm:$0xff] %v3619
        %3652 = vst [vmem:[%s203 + $0xe0] sm:$0xff] %v3620
        %3653 = vst [vmem:[%s203 + $0xe8] sm:$0xff] %v3621
        %3654 = vst [vmem:[%s203 + $0xf0] sm:$0xff] %v3622
        %3655 = vst [vmem:[%s203 + $0xf8] sm:$0xff] %v3623
        %s3656 = sand.u32 %s97, 1
        %s3657 = scalar_lea.sflag [#allocation4], %s3656
        %s3658 = sand.u32 %s97, 1
        %s3659 = smul.addr %s3658, 256
        %s3660 = scalar_lea.vmem [#allocation7], %s3659
        // Predicated region
        $region41: #{tpu_custom_call.1} parent=31 // pred_check
          %p3661 = pneg %p107
        $region42: #{tpu_custom_call.1} parent=31 // pred_check_branch
          %3663 = sbr.rel (%p3661) target = $region44
        $region43: #{tpu_custom_call.1} parent=31 // pred_region
          %s3664 = smul.u32 32, %s21
          %s3666 = ssub.s32 4096, 4096
          %3667 = vsyncadd %s3657, %s3666
          %s3668 = smul.addr %s3664, 128
          %s3669 = scalar_lea.hbm %s3, %s3668
          %s3670 = sshll.u32 %s3660, 4
          %s3671 = int_to_ptr.vmem [resolvable:$true] %s3670
          %3676 = dma.vmem_to_hbm [thread:$0]  %s3671, 4096, %s3669, %s3657, 128, 128, 8
        $region44: #{tpu_custom_call.1} parent=31 // pred_fallthru
          _
      $region32: #{tpu_custom_call.1} parent=5 // pred_fallthru
        _
      %p3677 = scmp.le.s32.totalorder 2, %s16
      // Predicated region
      $region45: #{tpu_custom_call.1} parent=5 // pred_check
        %p3678 = pneg %p3677
      $region46: #{tpu_custom_call.1} parent=5 // pred_check_branch
        %3680 = sbr.rel (%p3678) target = $region48
      $region47: #{tpu_custom_call.1} parent=5 // pred_region
        %s3681 = ssub.s32 %s16, 2
        // Predicated region
        $region49: #{tpu_custom_call.1} parent=47 // pred_check
          %p3682 = pneg %p113
        $region50: #{tpu_custom_call.1} parent=47 // pred_check_branch
          %3684 = sbr.rel (%p3682) target = $region52
        $region51: #{tpu_custom_call.1} parent=47 // pred_region
          %s3685 = sand.u32 %s98, 1
          %s3686 = scalar_lea.sflag [#allocation4], %s3685
          %s3687 = sand.u32 %s98, 1
          %s3688 = smul.addr %s3687, 256
          %s3689 = scalar_lea.vmem [#allocation7], %s3688
          %3690 = dma.done %s3686, 4096
        $region52: #{tpu_custom_call.1} parent=47 // pred_fallthru
          _
      $region48: #{tpu_custom_call.1} parent=5 // pred_fallthru
        _
    $region6: #{tpu_custom_call.1} parent=1 // loop_footer
      %s20 = sadd.s32 1, %s16
    $region7: #{tpu_custom_call.1} parent=1 // loop_footer_branch
      %15 = sbr.rel target = $region3
    $region8: #{tpu_custom_call.1} parent=1 // loop_exit
      _
    %3691 = vsyncpa [#allocation3], 1
    %s3692 = scalar_lea.sflag [#allocation3], 1
    %3693 = vsyncpa %s3692, 1
    %3694 = vsyncpa [#allocation6], 1
    %3695 = vsyncpa [#allocation4], 1
    %s3696 = scalar_lea.sflag [#allocation4], 1
    %3697 = vsyncpa %s3696, 1

</llo_original>
